<compile_context>
chip_gen: v7x
topology: tpu7x:2x2x1
jax: 0.10.0
libtpu: 0.0.40
codegen_flags: <defaults>
</compile_context>

<pallas_src>
import math

import jax
import jax.numpy as jnp
from jax.experimental import pallas as pl
from jax.experimental.pallas import tpu as pltpu

EPS = 1e-5
WPAD = 128          # padded lane width: 60 (left) + 60 (right) + 8 zero lanes


# ----------------------------------------------------------------------------
# Wrapper-side constant builders (run once under jit)
# ----------------------------------------------------------------------------
def _make_conv2d_taps(w2_l, w2_r, scale, dw):
    """(9, DW, 128) per-tap multipliers = conv weight * BN scale * validity."""
    rows = jnp.arange(dw)
    cols = jnp.arange(WPAD)
    left = cols < 60
    right = (cols >= 60) & (cols < 120)
    local = jnp.where(left, cols, cols - 60)
    taps = []
    for ki in range(3):
        di = ki - 1
        src = rows + di
        row_ok = (src >= 0) & (src < dw)
        s_row = jnp.where(row_ok, scale[jnp.clip(src, 0, dw - 1)], 0.0)       # (dw,)
        for kj in range(3):
            dj = kj - 1
            col_ok = (left | right) & (local + dj >= 0) & (local + dj < 60)
            wlane = jnp.where(left, w2_l[ki, kj], w2_r[ki, kj])
            taps.append(s_row[:, None] * jnp.where(col_ok, wlane, 0.0)[None, :])
    return jnp.stack(taps, 0).astype(jnp.float32)                             # (9, dw, 128)


def _make_conv2d_bias(shift, w2_l, b2_l, w2_r, b2_r, dw):
    """conv2d response of the per-row BN shift plus the conv bias: (DW, 128)."""
    hp = jax.lax.Precision.HIGHEST
    sb = jnp.broadcast_to(shift[:, None], (dw, 60))

    def conv(w2):
        y = jax.lax.conv_general_dilated(
            sb[None, None], w2[None, None], (1, 1), ((1, 1), (1, 1)),
            dimension_numbers=("NCHW", "OIHW", "NCHW"), precision=hp)
        return y[0, 0]

    bl = conv(w2_l) + b2_l[0]
    br = conv(w2_r) + b2_r[0]
    return jnp.concatenate(
        [bl, br, jnp.zeros((dw, WPAD - 120), jnp.float32)], axis=1)


# ----------------------------------------------------------------------------
# Full forward (one fused pallas_call, grid = batch blocks)
# ----------------------------------------------------------------------------
def xanet_pallas(E, P, block_b=8):
    B, DW = E.shape[0], E.shape[1]
    assert DW % 4 == 0
    BB = block_b
    NB = -(-B // BB)                # number of grid steps (batch blocks)
    Bp = NB * BB                    # padded batch
    H2, L = DW // 2, DW // 4
    N = BB * DW                     # flattened rows per grid step
    M = BB * H2
    BBL = BB * L
    assert N % 8 == 0 and M % 8 == 0 and BBL % 8 == 0

    # ---- input slab: (Bp*DW, 128), lanes 0:60 left / 60:120 right / pad ----
    El = E[:, :, :, :6].reshape(B, DW, 60)
    Er = E[:, :, :, 5:].reshape(B, DW, 60)
    X = jnp.concatenate(
        [El, Er, jnp.zeros((B, DW, WPAD - 120), E.dtype)], axis=-1)
    if Bp > B:
        X = jnp.concatenate([X, jnp.zeros((Bp - B, DW, WPAD), X.dtype)], 0)
    X2 = X.reshape(Bp * DW, WPAD).astype(jnp.float32)

    # ---- fold BN (eval) + conv2d weights / masks into per-tap constants ----
    inv_std = 1.0 / jnp.sqrt(P["bn_var"] + EPS)
    scale = P["bn_gamma"] * inv_std                  # (DW,)
    shift = P["bn_beta"] - P["bn_mean"] * scale      # (DW,)
    taps = jnp.tile(_make_conv2d_taps(P["w2_l"], P["w2_r"], scale, DW),
                    (1, BB, 1))                                  # (9, N, 128)
    bias2d = jnp.tile(_make_conv2d_bias(shift, P["w2_l"], P["b2_l"],
                                        P["w2_r"], P["b2_r"], DW),
                      (BB, 1))                                   # (N, 128)

    # ---- fused left|right conv1d: 128 input lanes -> 10 output features ----
    w1 = jnp.zeros((3, WPAD, 10), jnp.float32)
    for k in range(3):
        w1 = w1.at[k, 0:60, 0:5].set(jnp.transpose(P["w1_l"][:, :, k]))
        w1 = w1.at[k, 60:120, 5:10].set(jnp.transpose(P["w1_r"][:, :, k]))
    b1 = jnp.concatenate([P["b1_l"], P["b1_r"]]).reshape(1, 10)

    # ---- 0/1 decimation matrices for the two maxpool stride-2 steps --------
    dec1 = (jnp.arange(N)[None, :] ==
            2 * jnp.arange(M)[:, None]).astype(jnp.float32)       # (M, N)
    dec2 = (jnp.arange(M)[None, :] ==
            2 * jnp.arange(BBL)[:, None]).astype(jnp.float32)     # (BBL, M)

    # ---- attention block mask / batch selection / fc1 weights --------------
    idx = jnp.arange(2 * BBL)
    half = idx // BBL                       # 0 = left features, 1 = right
    bat = (idx % BBL) // L                  # batch element within the block
    amask = jnp.where((half[:, None] != half[None, :]) &
                      (bat[:, None] == bat[None, :]),
                      0.0, -1e30).astype(jnp.float32)             # (2BBL, 2BBL)
    bsel = (bat[None, :] == jnp.arange(BB)[:, None]).astype(jnp.float32)  # (BB, 2BBL)
    fcw = P["fc_w"].reshape(2, L, 10)
    # rows 0:BBL of the attention output are E_right_out (query = left feats),
    # rows BBL: are E_left_out -> pair them with the matching fc1 sub-weights.
    fw = jnp.concatenate([jnp.tile(fcw[:, :, 5:10], (1, BB, 1)),
                          jnp.tile(fcw[:, :, 0:5], (1, BB, 1))], axis=1)  # (2, 2BBL, 5)
    fb = P["fc_b"].reshape(1, 2)

    inv_sqrt_d = 1.0 / math.sqrt(50.0)

    # ------------------------------------------------------------------------
    def kernel(x_ref, taps_ref, bias2d_ref, w1_ref, b1_ref, dec1_ref, dec2_ref,
               wq_ref, wk_ref, wv_ref, amask_ref, bsel_ref, fw_ref, fb_ref,
               out_ref):
        x = x_ref[...]                                  # (N, 128): BB stacked batches

        # BatchNorm (eval) + conv2d 3x3 + bias + ReLU, both halves at once.
        # All edge / batch-boundary / half-boundary masks live in taps_ref.
        acc = bias2d_ref[...]
        for ki in range(3):
            di = ki - 1
            rs = x if di == 0 else pltpu.roll(x, shift=(-di) % N, axis=0)
            for kj in range(3):
                dj = kj - 1
                cs = rs if dj == 0 else pltpu.roll(rs, shift=(-dj) % WPAD, axis=1)
                acc = acc + taps_ref[ki * 3 + kj] * cs
        y = jnp.maximum(acc, 0.0)

        # MaxPool(k=3, s=2, p=1) over time within each DW segment; stride-2
        # decimation is a one-hot selection matmul (no scratch round-trip).
        tpos = jax.lax.broadcasted_iota(jnp.int32, (N, WPAD), 0) % DW
        up = jnp.where(tpos == 0, -jnp.inf, pltpu.roll(y, shift=1, axis=0))
        dn = jnp.where(tpos == DW - 1, -jnp.inf, pltpu.roll(y, shift=N - 1, axis=0))
        u1 = jnp.maximum(jnp.maximum(y, up), dn)
        p1 = jnp.dot(dec1_ref[...], u1, preferred_element_type=jnp.float32)   # (M, 128)

        # Fused left/right conv1d 60->5 (packed 128->10), kernel 3, pad 1.
        row2 = jax.lax.broadcasted_iota(jnp.int32, (M, WPAD), 0) % H2
        o = jnp.zeros((M, 10), jnp.float32) + b1_ref[...]
        for k in range(3):
            d = k - 1
            if d == 0:
                td = p1
            else:
                td = pltpu.roll(p1, shift=(-d) % M, axis=0)
                edge = 0 if d == -1 else H2 - 1
                td = jnp.where(row2 == edge, 0.0, td)        # zero-pad time edges
            o = o + jnp.dot(td, w1_ref[k], preferred_element_type=jnp.float32)

        # Second MaxPool + decimation -> (BBL, 10); lanes 0:5 left, 5:10 right.
        tpos2 = jax.lax.broadcasted_iota(jnp.int32, (M, 10), 0) % H2
        up2 = jnp.where(tpos2 == 0, -jnp.inf, pltpu.roll(o, shift=1, axis=0))
        dn2 = jnp.where(tpos2 == H2 - 1, -jnp.inf, pltpu.roll(o, shift=M - 1, axis=0))
        u2 = jnp.maximum(jnp.maximum(o, up2), dn2)
        p2 = jnp.dot(dec2_ref[...], u2, preferred_element_type=jnp.float32)   # (BBL, 10)

        # Shared-weight q/k/v on stacked features (left rows then right rows),
        # both cross-attention directions via one block-masked softmax.
        feats = jnp.concatenate([p2[:, 0:5], p2[:, 5:10]], axis=0)            # (2BBL, 5)
        q = jnp.dot(feats, wq_ref[...], preferred_element_type=jnp.float32)   # (2BBL, 50)
        kk = jnp.dot(feats, wk_ref[...], preferred_element_type=jnp.float32)
        v = jnp.dot(feats, wv_ref[...], preferred_element_type=jnp.float32)   # (2BBL, 5)
        s = jax.lax.dot_general(q, kk, (((1,), (1,)), ((), ())),
                                preferred_element_type=jnp.float32)
        s = s * inv_sqrt_d + amask_ref[...]
        s = s - jnp.max(s, axis=-1, keepdims=True)
        e = jnp.exp(s)
        p = e * pl.reciprocal(jnp.sum(e, axis=-1, keepdims=True), approx=True)
        # TODO(synk): dropout(0.3) on attention weights is identity in eval mode.
        attn = jnp.dot(p, v, preferred_element_type=jnp.float32)              # (2BBL, 5)

        # fc1: per-row weighted feature sums, then one per-batch reduction matmul.
        s0 = jnp.sum(attn * fw_ref[0], axis=1, keepdims=True)                 # (2BBL, 1)
        s1 = jnp.sum(attn * fw_ref[1], axis=1, keepdims=True)
        gcol = jax.lax.broadcasted_iota(jnp.int32, (2 * BBL, 2), 1)
        g = jnp.where(gcol == 0, s0, s1)                                      # (2BBL, 2)
        final = jnp.dot(bsel_ref[...], g,
                        preferred_element_type=jnp.float32) + fb_ref[...]     # (BB, 2)

        # Lane-dense output store: (BB, 128) slab, logits in lanes 0:2.
        col = jax.lax.broadcasted_iota(jnp.int32, (BB, WPAD), 1)
        slab = jnp.where(col == 0, final[:, 0:1],
                         jnp.where(col == 1, final[:, 1:2], 0.0))
        out_ref[...] = slab.astype(out_ref.dtype)

    # ------------------------------------------------------------------------
    out = pl.pallas_call(
        kernel,
        out_shape=jax.ShapeDtypeStruct((Bp, WPAD), jnp.float32),
        grid=(NB,),
        in_specs=[
            pl.BlockSpec((N, WPAD), lambda b: (b, 0)),            # input slab
            pl.BlockSpec((9, N, WPAD), lambda b: (0, 0, 0)),      # conv2d taps
            pl.BlockSpec((N, WPAD), lambda b: (0, 0)),            # conv2d bias
            pl.BlockSpec((3, WPAD, 10), lambda b: (0, 0, 0)),     # fused conv1d W
            pl.BlockSpec((1, 10), lambda b: (0, 0)),              # fused conv1d b
            pl.BlockSpec((M, N), lambda b: (0, 0)),               # pool1 decimation
            pl.BlockSpec((BBL, M), lambda b: (0, 0)),             # pool2 decimation
            pl.BlockSpec((5, 50), lambda b: (0, 0)),              # W_q^T
            pl.BlockSpec((5, 50), lambda b: (0, 0)),              # W_k^T
            pl.BlockSpec((5, 5), lambda b: (0, 0)),               # W_v^T
            pl.BlockSpec((2 * BBL, 2 * BBL), lambda b: (0, 0)),   # attention mask
            pl.BlockSpec((BB, 2 * BBL), lambda b: (0, 0)),        # batch selection
            pl.BlockSpec((2, 2 * BBL, 5), lambda b: (0, 0, 0)),   # fc1 weights
            pl.BlockSpec((1, 2), lambda b: (0, 0)),               # fc1 bias
        ],
        out_specs=pl.BlockSpec((BB, WPAD), lambda b: (b, 0)),
        compiler_params=pltpu.CompilerParams(
            dimension_semantics=("parallel",)),
    )(X2, taps, bias2d, w1, b1, dec1, dec2,
      P["wq"].T, P["wk"].T, P["wv"].T, amask, bsel, fw, fb)
    return out[:B, :2]


# ----------------------------------------------------------------------------
# Pure-JAX reference (for numerical verification)
# ----------------------------------------------------------------------------
def reference_forward(E, P):
    B, DW = E.shape[0], E.shape[1]
    hp = jax.lax.Precision.HIGHEST
    scale = P["bn_gamma"] / jnp.sqrt(P["bn_var"] + EPS)
    shift = P["bn_beta"] - P["bn_mean"] * scale

    def maxpool_rows_ref(z):                          # (B, H, W), pool over H
        Bb, H, Wd = z.shape
        neg = jnp.full((Bb, 1, Wd), -jnp.inf, z.dtype)
        zp = jnp.concatenate([neg, z, neg], axis=1)
        return jnp.maximum(jnp.maximum(zp[:, 0:H:2], zp[:, 1:H + 1:2]),
                           zp[:, 2:H + 2:2])

    def branch(x, w2, b2, w1, b1):
        y = x * scale[None, :, None] + shift[None, :, None]
        y4 = jax.lax.conv_general_dilated(
            y[:, None, :, :], w2[None, None, :, :], (1, 1), ((1, 1), (1, 1)),
            dimension_numbers=("NCHW", "OIHW", "NCHW"), precision=hp) + b2[0]
        y = jnp.maximum(y4[:, 0], 0.0)
        p1 = maxpool_rows_ref(y)                      # (B, DW//2, 60)
        xcf = jnp.transpose(p1, (0, 2, 1))            # (B, 60, DW//2)
        o = jax.lax.conv_general_dilated(
            xcf, w1, (1,), ((1, 1),),
            dimension_numbers=("NCH", "OIH", "NCH"),
            precision=hp) + b1[None, :, None]
        o = jnp.transpose(o, (0, 2, 1))               # (B, DW//2, 5)
        return maxpool_rows_ref(o)                    # (B, DW//4, 5)

    El = E[:, :, :, :6].reshape(B, DW, -1)
    Er = E[:, :, :, 5:].reshape(B, DW, -1)
    lf = branch(El, P["w2_l"], P["b2_l"], P["w1_l"], P["b1_l"])
    rf = branch(Er, P["w2_r"], P["b2_r"], P["w1_r"], P["b1_r"])

    def attend(qin, kin, vin):
        q = jnp.einsum("blf,hf->blh", qin, P["wq"], precision=hp)
        k = jnp.einsum("blf,hf->blh", kin, P["wk"], precision=hp)
        v = jnp.einsum("blf,hf->blh", vin, P["wv"], precision=hp)
        s = jnp.einsum("bqh,bkh->bqk", q, k, precision=hp) * (
            1.0 / math.sqrt(q.shape[-1]))
        p = jax.nn.softmax(s, axis=-1)
        return jnp.einsum("bqk,bkh->bqh", p, v, precision=hp)

    lo = attend(rf, lf, lf)
    ro = attend(lf, rf, rf)
    eo = jnp.concatenate([lo, ro], axis=2).reshape(B, -1)
    return jnp.dot(eo, P["fc_w"].T, precision=hp) + P["fc_b"][None, :]


# ----------------------------------------------------------------------------
# Deterministic parameter init + driver
# ----------------------------------------------------------------------------
def init_params(key, dw):
    ks = jax.random.split(key, 20)
    n = lambda k, shape, s: s * jax.random.normal(k, shape, jnp.float32)
    L = dw // 4
    return dict(
        bn_gamma=1.0 + n(ks[0], (dw,), 0.1),
        bn_beta=n(ks[1], (dw,), 0.1),
        bn_mean=n(ks[2], (dw,), 0.05),
        bn_var=1.0 + 0.2 * jax.random.uniform(ks[3], (dw,), jnp.float32),
        w2_l=n(ks[4], (3, 3), 0.2), b2_l=n(ks[5], (1,), 0.1),
        w2_r=n(ks[6], (3, 3), 0.2), b2_r=n(ks[7], (1,), 0.1),
        w1_l=n(ks[8], (5, 60, 3), 0.1), b1_l=n(ks[9], (5,), 0.1),
        w1_r=n(ks[10], (5, 60, 3), 0.1), b1_r=n(ks[11], (5,), 0.1),
        wq=n(ks[12], (50, 5), 0.2),
        wk=n(ks[13], (50, 5), 0.2),
        wv=n(ks[14], (5, 5), 0.2),
        fc_w=n(ks[15], (2, L * 10), 0.1),
        fc_b=n(ks[16], (2,), 0.1),
    )


if __name__ == "__main__":
    key = jax.random.PRNGKey(0)
    k_e, k_p = jax.random.split(key)
    DW = 16                                          # decision_window (multiple of 4)
    B = 16                                           # -> 2 batch blocks of 8, grid=(2,)
    E = jax.random.normal(k_e, (B, DW, 10, 11), jnp.float32)
    P = init_params(k_p, DW)

    out = jax.jit(xanet_pallas)(E, P)
    out = jax.block_until_ready(out)

    ref = reference_forward(E, P)
    assert out.shape == (B, 2), out.shape
    assert bool(jnp.all(jnp.isfinite(out)))
    assert bool(jnp.allclose(out, ref, rtol=2e-2, atol=2e-2)), (out, ref)
    print("KERNEL_OK")
</pallas_src>

<mosaic_0001>
module attributes {stable_mosaic.version = 11 : i64} {
  func.func @kernel(%arg0: i32, %arg1: memref<128x128xf32, #tpu.memory_space<vmem>>, %arg2: memref<9x128x128xf32, #tpu.memory_space<vmem>>, %arg3: memref<128x128xf32, #tpu.memory_space<vmem>>, %arg4: memref<3x128x10xf32, #tpu.memory_space<vmem>>, %arg5: memref<1x10xf32, #tpu.memory_space<vmem>>, %arg6: memref<64x128xf32, #tpu.memory_space<vmem>>, %arg7: memref<32x64xf32, #tpu.memory_space<vmem>>, %arg8: memref<5x50xf32, #tpu.memory_space<vmem>>, %arg9: memref<5x50xf32, #tpu.memory_space<vmem>>, %arg10: memref<5x5xf32, #tpu.memory_space<vmem>>, %arg11: memref<64x64xf32, #tpu.memory_space<vmem>>, %arg12: memref<8x64xf32, #tpu.memory_space<vmem>>, %arg13: memref<2x64x5xf32, #tpu.memory_space<vmem>>, %arg14: memref<1x2xf32, #tpu.memory_space<vmem>>, %arg15: memref<8x128xf32, #tpu.memory_space<vmem>>) attributes {dimension_semantics = [#tpu.dimension_semantics<parallel>], iteration_bounds = array<i64: 2>, scalar_prefetch = 0 : i64, scratch_operands = 0 : i64, tpu.core_type = #tpu.core_type<tc>, window_params = [{transform_indices = @transform_0, window_bounds = array<i64: 128, 128>}, {pipeline_mode = #tpu.pipeline_mode<synchronous>, transform_indices = @transform_1, window_bounds = array<i64: 9, 128, 128>}, {pipeline_mode = #tpu.pipeline_mode<synchronous>, transform_indices = @transform_2, window_bounds = array<i64: 128, 128>}, {pipeline_mode = #tpu.pipeline_mode<synchronous>, transform_indices = @transform_3, window_bounds = array<i64: 3, 128, 10>}, {pipeline_mode = #tpu.pipeline_mode<synchronous>, transform_indices = @transform_4, window_bounds = array<i64: 1, 10>}, {pipeline_mode = #tpu.pipeline_mode<synchronous>, transform_indices = @transform_5, window_bounds = array<i64: 64, 128>}, {pipeline_mode = #tpu.pipeline_mode<synchronous>, transform_indices = @transform_6, window_bounds = array<i64: 32, 64>}, {pipeline_mode = #tpu.pipeline_mode<synchronous>, transform_indices = @transform_7, window_bounds = array<i64: 5, 50>}, {pipeline_mode = #tpu.pipeline_mode<synchronous>, transform_indices = @transform_8, window_bounds = array<i64: 5, 50>}, {pipeline_mode = #tpu.pipeline_mode<synchronous>, transform_indices = @transform_9, window_bounds = array<i64: 5, 5>}, {pipeline_mode = #tpu.pipeline_mode<synchronous>, transform_indices = @transform_10, window_bounds = array<i64: 64, 64>}, {pipeline_mode = #tpu.pipeline_mode<synchronous>, transform_indices = @transform_11, window_bounds = array<i64: 8, 64>}, {pipeline_mode = #tpu.pipeline_mode<synchronous>, transform_indices = @transform_12, window_bounds = array<i64: 2, 64, 5>}, {pipeline_mode = #tpu.pipeline_mode<synchronous>, transform_indices = @transform_13, window_bounds = array<i64: 1, 2>}, {transform_indices = @transform_14, window_bounds = array<i64: 8, 128>}]} {
    %c0 = arith.constant 0 : index
    %c0_0 = arith.constant 0 : index
    %0 = vector.load %arg1[%c0, %c0_0] : memref<128x128xf32, #tpu.memory_space<vmem>>, vector<128x128xf32>
    %c0_1 = arith.constant 0 : index
    %c0_2 = arith.constant 0 : index
    %1 = vector.load %arg3[%c0_1, %c0_2] : memref<128x128xf32, #tpu.memory_space<vmem>>, vector<128x128xf32>
    %c1_i32 = arith.constant 1 : i32
    %2 = tpu.dynamic_rotate %0 by %c1_i32 dim 0 : vector<128x128xf32>, i32 -> vector<128x128xf32>
    %c1_i32_3 = arith.constant 1 : i32
    %3 = tpu.dynamic_rotate %2 by %c1_i32_3 dim 1 : vector<128x128xf32>, i32 -> vector<128x128xf32>
    %c0_4 = arith.constant 0 : index
    %c0_5 = arith.constant 0 : index
    %c0_6 = arith.constant 0 : index
    %4 = vector.load %arg2[%c0_4, %c0_5, %c0_6] : memref<9x128x128xf32, #tpu.memory_space<vmem>>, vector<1x128x128xf32>
    %5 = vector.shape_cast %4 : vector<1x128x128xf32> to vector<128x128xf32>
    %6 = arith.mulf %5, %3 : vector<128x128xf32>
    %7 = arith.addf %1, %6 : vector<128x128xf32>
    %c1 = arith.constant 1 : index
    %c0_7 = arith.constant 0 : index
    %c0_8 = arith.constant 0 : index
    %8 = vector.load %arg2[%c1, %c0_7, %c0_8] : memref<9x128x128xf32, #tpu.memory_space<vmem>>, vector<1x128x128xf32>
    %9 = vector.shape_cast %8 : vector<1x128x128xf32> to vector<128x128xf32>
    %10 = arith.mulf %9, %2 : vector<128x128xf32>
    %11 = arith.addf %7, %10 : vector<128x128xf32>
    %c127_i32 = arith.constant 127 : i32
    %12 = tpu.dynamic_rotate %2 by %c127_i32 dim 1 : vector<128x128xf32>, i32 -> vector<128x128xf32>
    %c2 = arith.constant 2 : index
    %c0_9 = arith.constant 0 : index
    %c0_10 = arith.constant 0 : index
    %13 = vector.load %arg2[%c2, %c0_9, %c0_10] : memref<9x128x128xf32, #tpu.memory_space<vmem>>, vector<1x128x128xf32>
    %14 = vector.shape_cast %13 : vector<1x128x128xf32> to vector<128x128xf32>
    %15 = arith.mulf %14, %12 : vector<128x128xf32>
    %16 = arith.addf %11, %15 : vector<128x128xf32>
    %c1_i32_11 = arith.constant 1 : i32
    %17 = tpu.dynamic_rotate %0 by %c1_i32_11 dim 1 : vector<128x128xf32>, i32 -> vector<128x128xf32>
    %c3 = arith.constant 3 : index
    %c0_12 = arith.constant 0 : index
    %c0_13 = arith.constant 0 : index
    %18 = vector.load %arg2[%c3, %c0_12, %c0_13] : memref<9x128x128xf32, #tpu.memory_space<vmem>>, vector<1x128x128xf32>
    %19 = vector.shape_cast %18 : vector<1x128x128xf32> to vector<128x128xf32>
    %20 = arith.mulf %19, %17 : vector<128x128xf32>
    %21 = arith.addf %16, %20 : vector<128x128xf32>
    %c4 = arith.constant 4 : index
    %c0_14 = arith.constant 0 : index
    %c0_15 = arith.constant 0 : index
    %22 = vector.load %arg2[%c4, %c0_14, %c0_15] : memref<9x128x128xf32, #tpu.memory_space<vmem>>, vector<1x128x128xf32>
    %23 = vector.shape_cast %22 : vector<1x128x128xf32> to vector<128x128xf32>
    %24 = arith.mulf %23, %0 : vector<128x128xf32>
    %25 = arith.addf %21, %24 : vector<128x128xf32>
    %c127_i32_16 = arith.constant 127 : i32
    %26 = tpu.dynamic_rotate %0 by %c127_i32_16 dim 1 : vector<128x128xf32>, i32 -> vector<128x128xf32>
    %c5 = arith.constant 5 : index
    %c0_17 = arith.constant 0 : index
    %c0_18 = arith.constant 0 : index
    %27 = vector.load %arg2[%c5, %c0_17, %c0_18] : memref<9x128x128xf32, #tpu.memory_space<vmem>>, vector<1x128x128xf32>
    %28 = vector.shape_cast %27 : vector<1x128x128xf32> to vector<128x128xf32>
    %29 = arith.mulf %28, %26 : vector<128x128xf32>
    %30 = arith.addf %25, %29 : vector<128x128xf32>
    %c127_i32_19 = arith.constant 127 : i32
    %31 = tpu.dynamic_rotate %0 by %c127_i32_19 dim 0 : vector<128x128xf32>, i32 -> vector<128x128xf32>
    %c1_i32_20 = arith.constant 1 : i32
    %32 = tpu.dynamic_rotate %31 by %c1_i32_20 dim 1 : vector<128x128xf32>, i32 -> vector<128x128xf32>
    %c6 = arith.constant 6 : index
    %c0_21 = arith.constant 0 : index
    %c0_22 = arith.constant 0 : index
    %33 = vector.load %arg2[%c6, %c0_21, %c0_22] : memref<9x128x128xf32, #tpu.memory_space<vmem>>, vector<1x128x128xf32>
    %34 = vector.shape_cast %33 : vector<1x128x128xf32> to vector<128x128xf32>
    %35 = arith.mulf %34, %32 : vector<128x128xf32>
    %36 = arith.addf %30, %35 : vector<128x128xf32>
    %c7 = arith.constant 7 : index
    %c0_23 = arith.constant 0 : index
    %c0_24 = arith.constant 0 : index
    %37 = vector.load %arg2[%c7, %c0_23, %c0_24] : memref<9x128x128xf32, #tpu.memory_space<vmem>>, vector<1x128x128xf32>
    %38 = vector.shape_cast %37 : vector<1x128x128xf32> to vector<128x128xf32>
    %39 = arith.mulf %38, %31 : vector<128x128xf32>
    %40 = arith.addf %36, %39 : vector<128x128xf32>
    %c127_i32_25 = arith.constant 127 : i32
    %41 = tpu.dynamic_rotate %31 by %c127_i32_25 dim 1 : vector<128x128xf32>, i32 -> vector<128x128xf32>
    %c8 = arith.constant 8 : index
    %c0_26 = arith.constant 0 : index
    %c0_27 = arith.constant 0 : index
    %42 = vector.load %arg2[%c8, %c0_26, %c0_27] : memref<9x128x128xf32, #tpu.memory_space<vmem>>, vector<1x128x128xf32>
    %43 = vector.shape_cast %42 : vector<1x128x128xf32> to vector<128x128xf32>
    %44 = arith.mulf %43, %41 : vector<128x128xf32>
    %45 = arith.addf %40, %44 : vector<128x128xf32>
    %cst = arith.constant 0.000000e+00 : f32
    %46 = vector.broadcast %cst : f32 to vector<128x128xf32>
    %47 = arith.maximumf %45, %46 : vector<128x128xf32>
    %48 = tpu.iota {dimensions = array<i32: 0>} : vector<128x128xi32>
    %c16_i32 = arith.constant 16 : i32
    %c0_i32 = arith.constant 0 : i32
    %49 = arith.cmpi eq, %c16_i32, %c0_i32 : i32
    %c1_i32_28 = arith.constant 1 : i32
    %50 = arith.select %49, %c1_i32_28, %c16_i32 : i32
    %51 = vector.broadcast %50 : i32 to vector<128x128xi32>
    %52 = arith.remsi %48, %51 : vector<128x128xi32>
    %c0_i32_29 = arith.constant 0 : i32
    %53 = vector.broadcast %c0_i32_29 : i32 to vector<128x128xi32>
    %54 = arith.cmpi ne, %52, %53 : vector<128x128xi32>
    %c0_i32_30 = arith.constant 0 : i32
    %55 = vector.broadcast %c0_i32_30 : i32 to vector<128x128xi32>
    %56 = arith.cmpi slt, %52, %55 : vector<128x128xi32>
    %c0_i32_31 = arith.constant 0 : i32
    %57 = arith.cmpi slt, %50, %c0_i32_31 : i32
    %58 = vector.broadcast %57 : i1 to vector<128x128xi1>
    %59 = vector.broadcast %58 : vector<128x128xi1> to vector<128x128xi1>
    %60 = arith.xori %56, %59 : vector<128x128xi1>
    %61 = arith.andi %60, %54 : vector<128x128xi1>
    %62 = vector.broadcast %50 : i32 to vector<128x128xi32>
    %63 = arith.addi %52, %62 : vector<128x128xi32>
    %64 = arith.select %61, %63, %52 : vector<128x128xi1>, vector<128x128xi32>
    %c0_i32_32 = arith.constant 0 : i32
    %65 = vector.broadcast %c0_i32_32 : i32 to vector<128x128xi32>
    %66 = arith.cmpi eq, %64, %65 : vector<128x128xi32>
    %c1_i32_33 = arith.constant 1 : i32
    %67 = tpu.dynamic_rotate %47 by %c1_i32_33 dim 0 : vector<128x128xf32>, i32 -> vector<128x128xf32>
    %cst_34 = arith.constant 0xFF800000 : f32
    %68 = vector.broadcast %cst_34 : f32 to vector<128x128xf32>
    %69 = arith.select %66, %68, %67 : vector<128x128xi1>, vector<128x128xf32>
    %c15_i32 = arith.constant 15 : i32
    %70 = vector.broadcast %c15_i32 : i32 to vector<128x128xi32>
    %71 = arith.cmpi eq, %64, %70 : vector<128x128xi32>
    %c127_i32_35 = arith.constant 127 : i32
    %72 = tpu.dynamic_rotate %47 by %c127_i32_35 dim 0 : vector<128x128xf32>, i32 -> vector<128x128xf32>
    %cst_36 = arith.constant 0xFF800000 : f32
    %73 = vector.broadcast %cst_36 : f32 to vector<128x128xf32>
    %74 = arith.select %71, %73, %72 : vector<128x128xi1>, vector<128x128xf32>
    %75 = arith.maximumf %47, %69 : vector<128x128xf32>
    %76 = arith.maximumf %75, %74 : vector<128x128xf32>
    %c0_37 = arith.constant 0 : index
    %c0_38 = arith.constant 0 : index
    %77 = vector.load %arg6[%c0_37, %c0_38] : memref<64x128xf32, #tpu.memory_space<vmem>>, vector<64x128xf32>
    %cst_39 = arith.constant dense<0.000000e+00> : vector<64x128xf32>
    %78 = tpu.matmul %77, %76, %cst_39 {dimension_numbers = #tpu.dot_dimension_numbers<[1], [0], [0], [1], [0, 0, 1, 1], [], []>} : vector<64x128xf32>, vector<128x128xf32>, vector<64x128xf32> -> vector<64x128xf32>
    %79 = tpu.iota {dimensions = array<i32: 0>} : vector<64x128xi32>
    %c8_i32 = arith.constant 8 : i32
    %c0_i32_40 = arith.constant 0 : i32
    %80 = arith.cmpi eq, %c8_i32, %c0_i32_40 : i32
    %c1_i32_41 = arith.constant 1 : i32
    %81 = arith.select %80, %c1_i32_41, %c8_i32 : i32
    %82 = vector.broadcast %81 : i32 to vector<64x128xi32>
    %83 = arith.remsi %79, %82 : vector<64x128xi32>
    %c0_i32_42 = arith.constant 0 : i32
    %84 = vector.broadcast %c0_i32_42 : i32 to vector<64x128xi32>
    %85 = arith.cmpi ne, %83, %84 : vector<64x128xi32>
    %c0_i32_43 = arith.constant 0 : i32
    %86 = vector.broadcast %c0_i32_43 : i32 to vector<64x128xi32>
    %87 = arith.cmpi slt, %83, %86 : vector<64x128xi32>
    %c0_i32_44 = arith.constant 0 : i32
    %88 = arith.cmpi slt, %81, %c0_i32_44 : i32
    %89 = vector.broadcast %88 : i1 to vector<64x128xi1>
    %90 = vector.broadcast %89 : vector<64x128xi1> to vector<64x128xi1>
    %91 = arith.xori %87, %90 : vector<64x128xi1>
    %92 = arith.andi %91, %85 : vector<64x128xi1>
    %93 = vector.broadcast %81 : i32 to vector<64x128xi32>
    %94 = arith.addi %83, %93 : vector<64x128xi32>
    %95 = arith.select %92, %94, %83 : vector<64x128xi1>, vector<64x128xi32>
    %cst_45 = arith.constant 0.000000e+00 : f32
    %96 = vector.broadcast %cst_45 : f32 to vector<64x10xf32>
    %c0_46 = arith.constant 0 : index
    %c0_47 = arith.constant 0 : index
    %97 = vector.load %arg5[%c0_46, %c0_47] : memref<1x10xf32, #tpu.memory_space<vmem>>, vector<1x10xf32>
    %98 = vector.broadcast %97 : vector<1x10xf32> to vector<64x10xf32>
    %99 = arith.addf %96, %98 : vector<64x10xf32>
    %c1_i32_48 = arith.constant 1 : i32
    %100 = tpu.dynamic_rotate %78 by %c1_i32_48 dim 0 : vector<64x128xf32>, i32 -> vector<64x128xf32>
    %c0_i32_49 = arith.constant 0 : i32
    %101 = vector.broadcast %c0_i32_49 : i32 to vector<64x128xi32>
    %102 = arith.cmpi eq, %95, %101 : vector<64x128xi32>
    %cst_50 = arith.constant 0.000000e+00 : f32
    %103 = vector.broadcast %cst_50 : f32 to vector<64x128xf32>
    %104 = arith.select %102, %103, %100 : vector<64x128xi1>, vector<64x128xf32>
    %c0_51 = arith.constant 0 : index
    %c0_52 = arith.constant 0 : index
    %c0_53 = arith.constant 0 : index
    %105 = vector.load %arg4[%c0_51, %c0_52, %c0_53] : memref<3x128x10xf32, #tpu.memory_space<vmem>>, vector<1x128x10xf32>
    %106 = vector.shape_cast %105 : vector<1x128x10xf32> to vector<128x10xf32>
    %cst_54 = arith.constant dense<0.000000e+00> : vector<64x10xf32>
    %107 = tpu.matmul %104, %106, %cst_54 {dimension_numbers = #tpu.dot_dimension_numbers<[1], [0], [0], [1], [0, 0, 1, 1], [], []>} : vector<64x128xf32>, vector<128x10xf32>, vector<64x10xf32> -> vector<64x10xf32>
    %108 = arith.addf %99, %107 : vector<64x10xf32>
    %c1_55 = arith.constant 1 : index
    %c0_56 = arith.constant 0 : index
    %c0_57 = arith.constant 0 : index
    %109 = vector.load %arg4[%c1_55, %c0_56, %c0_57] : memref<3x128x10xf32, #tpu.memory_space<vmem>>, vector<1x128x10xf32>
    %110 = vector.shape_cast %109 : vector<1x128x10xf32> to vector<128x10xf32>
    %cst_58 = arith.constant dense<0.000000e+00> : vector<64x10xf32>
    %111 = tpu.matmul %78, %110, %cst_58 {dimension_numbers = #tpu.dot_dimension_numbers<[1], [0], [0], [1], [0, 0, 1, 1], [], []>} : vector<64x128xf32>, vector<128x10xf32>, vector<64x10xf32> -> vector<64x10xf32>
    %112 = arith.addf %108, %111 : vector<64x10xf32>
    %c63_i32 = arith.constant 63 : i32
    %113 = tpu.dynamic_rotate %78 by %c63_i32 dim 0 : vector<64x128xf32>, i32 -> vector<64x128xf32>
    %c7_i32 = arith.constant 7 : i32
    %114 = vector.broadcast %c7_i32 : i32 to vector<64x128xi32>
    %115 = arith.cmpi eq, %95, %114 : vector<64x128xi32>
    %cst_59 = arith.constant 0.000000e+00 : f32
    %116 = vector.broadcast %cst_59 : f32 to vector<64x128xf32>
    %117 = arith.select %115, %116, %113 : vector<64x128xi1>, vector<64x128xf32>
    %c2_60 = arith.constant 2 : index
    %c0_61 = arith.constant 0 : index
    %c0_62 = arith.constant 0 : index
    %118 = vector.load %arg4[%c2_60, %c0_61, %c0_62] : memref<3x128x10xf32, #tpu.memory_space<vmem>>, vector<1x128x10xf32>
    %119 = vector.shape_cast %118 : vector<1x128x10xf32> to vector<128x10xf32>
    %cst_63 = arith.constant dense<0.000000e+00> : vector<64x10xf32>
    %120 = tpu.matmul %117, %119, %cst_63 {dimension_numbers = #tpu.dot_dimension_numbers<[1], [0], [0], [1], [0, 0, 1, 1], [], []>} : vector<64x128xf32>, vector<128x10xf32>, vector<64x10xf32> -> vector<64x10xf32>
    %121 = arith.addf %112, %120 : vector<64x10xf32>
    %122 = tpu.iota {dimensions = array<i32: 0>} : vector<64x10xi32>
    %c8_i32_64 = arith.constant 8 : i32
    %c0_i32_65 = arith.constant 0 : i32
    %123 = arith.cmpi eq, %c8_i32_64, %c0_i32_65 : i32
    %c1_i32_66 = arith.constant 1 : i32
    %124 = arith.select %123, %c1_i32_66, %c8_i32_64 : i32
    %125 = vector.broadcast %124 : i32 to vector<64x10xi32>
    %126 = arith.remsi %122, %125 : vector<64x10xi32>
    %c0_i32_67 = arith.constant 0 : i32
    %127 = vector.broadcast %c0_i32_67 : i32 to vector<64x10xi32>
    %128 = arith.cmpi ne, %126, %127 : vector<64x10xi32>
    %c0_i32_68 = arith.constant 0 : i32
    %129 = vector.broadcast %c0_i32_68 : i32 to vector<64x10xi32>
    %130 = arith.cmpi slt, %126, %129 : vector<64x10xi32>
    %c0_i32_69 = arith.constant 0 : i32
    %131 = arith.cmpi slt, %124, %c0_i32_69 : i32
    %132 = vector.broadcast %131 : i1 to vector<64x10xi1>
    %133 = vector.broadcast %132 : vector<64x10xi1> to vector<64x10xi1>
    %134 = arith.xori %130, %133 : vector<64x10xi1>
    %135 = arith.andi %134, %128 : vector<64x10xi1>
    %136 = vector.broadcast %124 : i32 to vector<64x10xi32>
    %137 = arith.addi %126, %136 : vector<64x10xi32>
    %138 = arith.select %135, %137, %126 : vector<64x10xi1>, vector<64x10xi32>
    %c0_i32_70 = arith.constant 0 : i32
    %139 = vector.broadcast %c0_i32_70 : i32 to vector<64x10xi32>
    %140 = arith.cmpi eq, %138, %139 : vector<64x10xi32>
    %c1_i32_71 = arith.constant 1 : i32
    %141 = tpu.dynamic_rotate %121 by %c1_i32_71 dim 0 : vector<64x10xf32>, i32 -> vector<64x10xf32>
    %cst_72 = arith.constant 0xFF800000 : f32
    %142 = vector.broadcast %cst_72 : f32 to vector<64x10xf32>
    %143 = arith.select %140, %142, %141 : vector<64x10xi1>, vector<64x10xf32>
    %c7_i32_73 = arith.constant 7 : i32
    %144 = vector.broadcast %c7_i32_73 : i32 to vector<64x10xi32>
    %145 = arith.cmpi eq, %138, %144 : vector<64x10xi32>
    %c63_i32_74 = arith.constant 63 : i32
    %146 = tpu.dynamic_rotate %121 by %c63_i32_74 dim 0 : vector<64x10xf32>, i32 -> vector<64x10xf32>
    %cst_75 = arith.constant 0xFF800000 : f32
    %147 = vector.broadcast %cst_75 : f32 to vector<64x10xf32>
    %148 = arith.select %145, %147, %146 : vector<64x10xi1>, vector<64x10xf32>
    %149 = arith.maximumf %121, %143 : vector<64x10xf32>
    %150 = arith.maximumf %149, %148 : vector<64x10xf32>
    %c0_76 = arith.constant 0 : index
    %c0_77 = arith.constant 0 : index
    %151 = vector.load %arg7[%c0_76, %c0_77] : memref<32x64xf32, #tpu.memory_space<vmem>>, vector<32x64xf32>
    %cst_78 = arith.constant dense<0.000000e+00> : vector<32x10xf32>
    %152 = tpu.matmul %151, %150, %cst_78 {dimension_numbers = #tpu.dot_dimension_numbers<[1], [0], [0], [1], [0, 0, 1, 1], [], []>} : vector<32x64xf32>, vector<64x10xf32>, vector<32x10xf32> -> vector<32x10xf32>
    %153 = vector.extract_strided_slice %152 {offsets = [0, 0], sizes = [32, 5], strides = [1, 1]} : vector<32x10xf32> to vector<32x5xf32>
    %154 = vector.extract_strided_slice %152 {offsets = [0, 5], sizes = [32, 5], strides = [1, 1]} : vector<32x10xf32> to vector<32x5xf32>
    %155 = tpu.concatenate %153, %154 in 0 : vector<32x5xf32>, vector<32x5xf32> -> vector<64x5xf32>
    %c0_79 = arith.constant 0 : index
    %c0_80 = arith.constant 0 : index
    %156 = vector.load %arg8[%c0_79, %c0_80] : memref<5x50xf32, #tpu.memory_space<vmem>>, vector<5x50xf32>
    %cst_81 = arith.constant dense<0.000000e+00> : vector<64x50xf32>
    %157 = tpu.matmul %155, %156, %cst_81 {dimension_numbers = #tpu.dot_dimension_numbers<[1], [0], [0], [1], [0, 0, 1, 1], [], []>} : vector<64x5xf32>, vector<5x50xf32>, vector<64x50xf32> -> vector<64x50xf32>
    %c0_82 = arith.constant 0 : index
    %c0_83 = arith.constant 0 : index
    %158 = vector.load %arg9[%c0_82, %c0_83] : memref<5x50xf32, #tpu.memory_space<vmem>>, vector<5x50xf32>
    %cst_84 = arith.constant dense<0.000000e+00> : vector<64x50xf32>
    %159 = tpu.matmul %155, %158, %cst_84 {dimension_numbers = #tpu.dot_dimension_numbers<[1], [0], [0], [1], [0, 0, 1, 1], [], []>} : vector<64x5xf32>, vector<5x50xf32>, vector<64x50xf32> -> vector<64x50xf32>
    %c0_85 = arith.constant 0 : index
    %c0_86 = arith.constant 0 : index
    %160 = vector.load %arg10[%c0_85, %c0_86] : memref<5x5xf32, #tpu.memory_space<vmem>>, vector<5x5xf32>
    %cst_87 = arith.constant dense<0.000000e+00> : vector<64x5xf32>
    %161 = tpu.matmul %155, %160, %cst_87 {dimension_numbers = #tpu.dot_dimension_numbers<[1], [0], [0], [1], [0, 0, 1, 1], [], []>} : vector<64x5xf32>, vector<5x5xf32>, vector<64x5xf32> -> vector<64x5xf32>
    %cst_88 = arith.constant dense<0.000000e+00> : vector<64x64xf32>
    %162 = tpu.matmul %157, %159, %cst_88 {dimension_numbers = #tpu.dot_dimension_numbers<[1], [1], [0], [0], [0, 0, 1, 0], [], []>} : vector<64x50xf32>, vector<64x50xf32>, vector<64x64xf32> -> vector<64x64xf32>
    %cst_89 = arith.constant 0.141421363 : f32
    %163 = vector.broadcast %cst_89 : f32 to vector<64x64xf32>
    %164 = arith.mulf %162, %163 : vector<64x64xf32>
    %c0_90 = arith.constant 0 : index
    %c0_91 = arith.constant 0 : index
    %165 = vector.load %arg11[%c0_90, %c0_91] : memref<64x64xf32, #tpu.memory_space<vmem>>, vector<64x64xf32>
    %166 = arith.addf %164, %165 : vector<64x64xf32>
    %cst_92 = arith.constant dense<0xFF800000> : vector<64xf32>
    %167 = vector.multi_reduction <maximumf>, %166, %cst_92 [1] : vector<64x64xf32> to vector<64xf32>
    %168 = vector.shape_cast %167 : vector<64xf32> to vector<64x1xf32>
    %169 = vector.broadcast %168 : vector<64x1xf32> to vector<64x64xf32>
    %170 = arith.subf %166, %169 : vector<64x64xf32>
    %171 = math.exp %170 : vector<64x64xf32>
    %cst_93 = arith.constant dense<0.000000e+00> : vector<64xf32>
    %172 = vector.multi_reduction <add>, %171, %cst_93 [1] : vector<64x64xf32> to vector<64xf32>
    %173 = vector.shape_cast %172 : vector<64xf32> to vector<64x1xf32>
    %174 = tpu.reciprocal %173 {approx = true} : vector<64x1xf32> -> vector<64x1xf32>
    %175 = vector.broadcast %174 : vector<64x1xf32> to vector<64x64xf32>
    %176 = arith.mulf %171, %175 : vector<64x64xf32>
    %cst_94 = arith.constant dense<0.000000e+00> : vector<64x5xf32>
    %177 = tpu.matmul %176, %161, %cst_94 {dimension_numbers = #tpu.dot_dimension_numbers<[1], [0], [0], [1], [0, 0, 1, 1], [], []>} : vector<64x64xf32>, vector<64x5xf32>, vector<64x5xf32> -> vector<64x5xf32>
    %c0_95 = arith.constant 0 : index
    %c0_96 = arith.constant 0 : index
    %c0_97 = arith.constant 0 : index
    %178 = vector.load %arg13[%c0_95, %c0_96, %c0_97] : memref<2x64x5xf32, #tpu.memory_space<vmem>>, vector<1x64x5xf32>
    %179 = vector.shape_cast %178 : vector<1x64x5xf32> to vector<64x5xf32>
    %180 = arith.mulf %177, %179 : vector<64x5xf32>
    %cst_98 = arith.constant dense<0.000000e+00> : vector<64xf32>
    %181 = vector.multi_reduction <add>, %180, %cst_98 [1] : vector<64x5xf32> to vector<64xf32>
    %182 = vector.shape_cast %181 : vector<64xf32> to vector<64x1xf32>
    %c1_99 = arith.constant 1 : index
    %c0_100 = arith.constant 0 : index
    %c0_101 = arith.constant 0 : index
    %183 = vector.load %arg13[%c1_99, %c0_100, %c0_101] : memref<2x64x5xf32, #tpu.memory_space<vmem>>, vector<1x64x5xf32>
    %184 = vector.shape_cast %183 : vector<1x64x5xf32> to vector<64x5xf32>
    %185 = arith.mulf %177, %184 : vector<64x5xf32>
    %cst_102 = arith.constant dense<0.000000e+00> : vector<64xf32>
    %186 = vector.multi_reduction <add>, %185, %cst_102 [1] : vector<64x5xf32> to vector<64xf32>
    %187 = vector.shape_cast %186 : vector<64xf32> to vector<64x1xf32>
    %188 = tpu.iota {dimensions = array<i32: 1>} : vector<64x2xi32>
    %c0_i32_103 = arith.constant 0 : i32
    %189 = vector.broadcast %c0_i32_103 : i32 to vector<64x2xi32>
    %190 = arith.cmpi eq, %188, %189 : vector<64x2xi32>
    %191 = vector.shape_cast %182 : vector<64x1xf32> to vector<64x1xf32>
    %192 = vector.broadcast %191 : vector<64x1xf32> to vector<64x2xf32>
    %193 = vector.shape_cast %187 : vector<64x1xf32> to vector<64x1xf32>
    %194 = vector.broadcast %193 : vector<64x1xf32> to vector<64x2xf32>
    %195 = arith.select %190, %192, %194 : vector<64x2xi1>, vector<64x2xf32>
    %c0_104 = arith.constant 0 : index
    %c0_105 = arith.constant 0 : index
    %196 = vector.load %arg12[%c0_104, %c0_105] : memref<8x64xf32, #tpu.memory_space<vmem>>, vector<8x64xf32>
    %cst_106 = arith.constant dense<0.000000e+00> : vector<8x2xf32>
    %197 = tpu.matmul %196, %195, %cst_106 {dimension_numbers = #tpu.dot_dimension_numbers<[1], [0], [0], [1], [0, 0, 1, 1], [], []>} : vector<8x64xf32>, vector<64x2xf32>, vector<8x2xf32> -> vector<8x2xf32>
    %c0_107 = arith.constant 0 : index
    %c0_108 = arith.constant 0 : index
    %198 = vector.load %arg14[%c0_107, %c0_108] : memref<1x2xf32, #tpu.memory_space<vmem>>, vector<1x2xf32>
    %199 = vector.broadcast %198 : vector<1x2xf32> to vector<8x2xf32>
    %200 = arith.addf %197, %199 : vector<8x2xf32>
    %201 = tpu.iota {dimensions = array<i32: 1>} : vector<8x128xi32>
    %c0_i32_109 = arith.constant 0 : i32
    %202 = vector.broadcast %c0_i32_109 : i32 to vector<8x128xi32>
    %203 = arith.cmpi eq, %201, %202 : vector<8x128xi32>
    %204 = vector.extract_strided_slice %200 {offsets = [0, 0], sizes = [8, 1], strides = [1, 1]} : vector<8x2xf32> to vector<8x1xf32>
    %c1_i32_110 = arith.constant 1 : i32
    %205 = vector.broadcast %c1_i32_110 : i32 to vector<8x128xi32>
    %206 = arith.cmpi eq, %201, %205 : vector<8x128xi32>
    %207 = vector.extract_strided_slice %200 {offsets = [0, 1], sizes = [8, 1], strides = [1, 1]} : vector<8x2xf32> to vector<8x1xf32>
    %cst_111 = arith.constant 0.000000e+00 : f32
    %208 = vector.shape_cast %207 : vector<8x1xf32> to vector<8x1xf32>
    %209 = vector.broadcast %208 : vector<8x1xf32> to vector<8x128xf32>
    %210 = vector.broadcast %cst_111 : f32 to vector<8x128xf32>
    %211 = arith.select %206, %209, %210 : vector<8x128xi1>, vector<8x128xf32>
    %212 = vector.shape_cast %204 : vector<8x1xf32> to vector<8x1xf32>
    %213 = vector.broadcast %212 : vector<8x1xf32> to vector<8x128xf32>
    %214 = arith.select %203, %213, %211 : vector<8x128xi1>, vector<8x128xf32>
    %c0_112 = arith.constant 0 : index
    %c0_113 = arith.constant 0 : index
    %215 = vector.load %arg15[%c0_112, %c0_113] : memref<8x128xf32, #tpu.memory_space<vmem>>, vector<8x128xf32>
    tpu.vector_store %arg15[%c0_112, %c0_113], %214 {strides = array<i32>} : memref<8x128xf32, #tpu.memory_space<vmem>>, vector<8x128xf32>,
    return
  }
  func.func @transform_0(%arg0: i32) -> (i32, i32) {
    %c0_i32 = arith.constant 0 : i32
    %c0_i32_0 = arith.constant 0 : i32
    return %arg0, %c0_i32 : i32, i32
  }
  func.func @transform_1(%arg0: i32) -> (i32, i32, i32) {
    %c0_i32 = arith.constant 0 : i32
    %c0_i32_0 = arith.constant 0 : i32
    %c0_i32_1 = arith.constant 0 : i32
    %c0_i32_2 = arith.constant 0 : i32
    return %c0_i32, %c0_i32_0, %c0_i32_1 : i32, i32, i32
  }
  func.func @transform_2(%arg0: i32) -> (i32, i32) {
    %c0_i32 = arith.constant 0 : i32
    %c0_i32_0 = arith.constant 0 : i32
    %c0_i32_1 = arith.constant 0 : i32
    return %c0_i32, %c0_i32_0 : i32, i32
  }
  func.func @transform_3(%arg0: i32) -> (i32, i32, i32) {
    %c0_i32 = arith.constant 0 : i32
    %c0_i32_0 = arith.constant 0 : i32
    %c0_i32_1 = arith.constant 0 : i32
    %c0_i32_2 = arith.constant 0 : i32
    return %c0_i32, %c0_i32_0, %c0_i32_1 : i32, i32, i32
  }
  func.func @transform_4(%arg0: i32) -> (i32, i32) {
    %c0_i32 = arith.constant 0 : i32
    %c0_i32_0 = arith.constant 0 : i32
    %c0_i32_1 = arith.constant 0 : i32
    return %c0_i32, %c0_i32_0 : i32, i32
  }
  func.func @transform_5(%arg0: i32) -> (i32, i32) {
    %c0_i32 = arith.constant 0 : i32
    %c0_i32_0 = arith.constant 0 : i32
    %c0_i32_1 = arith.constant 0 : i32
    return %c0_i32, %c0_i32_0 : i32, i32
  }
  func.func @transform_6(%arg0: i32) -> (i32, i32) {
    %c0_i32 = arith.constant 0 : i32
    %c0_i32_0 = arith.constant 0 : i32
    %c0_i32_1 = arith.constant 0 : i32
    return %c0_i32, %c0_i32_0 : i32, i32
  }
  func.func @transform_7(%arg0: i32) -> (i32, i32) {
    %c0_i32 = arith.constant 0 : i32
    %c0_i32_0 = arith.constant 0 : i32
    %c0_i32_1 = arith.constant 0 : i32
    return %c0_i32, %c0_i32_0 : i32, i32
  }
  func.func @transform_8(%arg0: i32) -> (i32, i32) {
    %c0_i32 = arith.constant 0 : i32
    %c0_i32_0 = arith.constant 0 : i32
    %c0_i32_1 = arith.constant 0 : i32
    return %c0_i32, %c0_i32_0 : i32, i32
  }
  func.func @transform_9(%arg0: i32) -> (i32, i32) {
    %c0_i32 = arith.constant 0 : i32
    %c0_i32_0 = arith.constant 0 : i32
    %c0_i32_1 = arith.constant 0 : i32
    return %c0_i32, %c0_i32_0 : i32, i32
  }
  func.func @transform_10(%arg0: i32) -> (i32, i32) {
    %c0_i32 = arith.constant 0 : i32
    %c0_i32_0 = arith.constant 0 : i32
    %c0_i32_1 = arith.constant 0 : i32
    return %c0_i32, %c0_i32_0 : i32, i32
  }
  func.func @transform_11(%arg0: i32) -> (i32, i32) {
    %c0_i32 = arith.constant 0 : i32
    %c0_i32_0 = arith.constant 0 : i32
    %c0_i32_1 = arith.constant 0 : i32
    return %c0_i32, %c0_i32_0 : i32, i32
  }
  func.func @transform_12(%arg0: i32) -> (i32, i32, i32) {
    %c0_i32 = arith.constant 0 : i32
    %c0_i32_0 = arith.constant 0 : i32
    %c0_i32_1 = arith.constant 0 : i32
    %c0_i32_2 = arith.constant 0 : i32
    return %c0_i32, %c0_i32_0, %c0_i32_1 : i32, i32, i32
  }
  func.func @transform_13(%arg0: i32) -> (i32, i32) {
    %c0_i32 = arith.constant 0 : i32
    %c0_i32_0 = arith.constant 0 : i32
    %c0_i32_1 = arith.constant 0 : i32
    return %c0_i32, %c0_i32_0 : i32, i32
  }
  func.func @transform_14(%arg0: i32) -> (i32, i32) {
    %c0_i32 = arith.constant 0 : i32
    %c0_i32_0 = arith.constant 0 : i32
    return %arg0, %c0_i32 : i32, i32
  }
}

</mosaic_0001>

<llo_original>
// kernel: tile.39
$region0: #{tile.39}
  %s0 = inlined_call_operand.vmem [shape: f32[2,8,4,5], index: 0, kind: input, shape index: {}]
  %s1 = inlined_call_operand.vmem [shape: f32[2,32,5], index: 1, kind: output, shape index: {}]
  $region1: #{tile.39} parent=0
    #allocation0 [shape = 'u8[20480]{0}', space=vmem, size = 0x5000, scoped, tag = 'scoped mem for output reshape']
    %v2 = vld [vmem:[%s0] ss:$8 sm:$0xf]
    %v3 = vld [vmem:[%s0] ss:$8 sm:$0xf0]
    %vm4 = vcmask 1047556
    %v5 = vsel %vm4, %v3, %v2
    %vm6 = vcmask 31744
    %7 = vst.msk [vmem:[#allocation0] sm:$0x3] %vm6, %v5
    %s8 = scalar_lea.vmem [#allocation0], 6
    %9 = vst.msk [vmem:[%s8] sm:$0xc] %vm6, %v5
    %s10 = scalar_lea.vmem [#allocation0], 12
    %11 = vst.msk [vmem:[%s10] sm:$0x30] %vm6, %v5
    %s12 = scalar_lea.vmem [#allocation0], 18
    %13 = vst.msk [vmem:[%s12] sm:$0xc0] %vm6, %v5
    %s14 = scalar_lea.vmem %s0, 64
    %s15 = smov 3
    %v16 = vld [vmem:[%s14] ss:$8 sm:%s15]
    %vm17 = vcmask 31744
    %s18 = scalar_lea.vmem [#allocation0], 32
    %19 = vst.msk [vmem:[%s18] sm:$0x3] %vm17, %v16
    %s20 = scalar_lea.vmem %s0, 7
    %v21 = vld [vmem:[%s20] ss:$8 sm:$0xf]
    %s22 = scalar_lea.vmem %s0, 7
    %v23 = vld [vmem:[%s22] ss:$8 sm:$0xf0]
    %vm24 = vcmask 1047556
    %v25 = vsel %vm24, %v23, %v21
    %26 = vrot.lane.b32.xlu0 %v25, 28
    %v27 = vpop.permute.xlu0 %26
    %vm28 = vcmask 261344
    %29 = vst.msk [vmem:[#allocation0] sm:$0x3] %vm28, %v27
    %s30 = scalar_lea.vmem [#allocation0], 6
    %31 = vst.msk [vmem:[%s30] sm:$0xc] %vm28, %v27
    %s32 = scalar_lea.vmem [#allocation0], 12
    %33 = vst.msk [vmem:[%s32] sm:$0x30] %vm28, %v27
    %s34 = scalar_lea.vmem [#allocation0], 18
    %35 = vst.msk [vmem:[%s34] sm:$0xc0] %vm28, %v27
    %s36 = scalar_lea.vmem %s0, 71
    %s37 = smov 3
    %v38 = vld [vmem:[%s36] ss:$8 sm:%s37]
    %39 = vrot.lane.b32.xlu0 %v38, 28
    %v40 = vpop.permute.xlu0 %39
    %vm41 = vcmask 261344
    %s42 = scalar_lea.vmem [#allocation0], 32
    %43 = vst.msk [vmem:[%s42] sm:$0x3] %vm41, %v40
    %s44 = scalar_lea.vmem %s0, 6
    %v45 = vld [vmem:[%s44] ss:$8 sm:$0xf]
    %s46 = scalar_lea.vmem %s0, 6
    %v47 = vld [vmem:[%s46] ss:$8 sm:$0xf0]
    %vm48 = vcmask 1047556
    %v49 = vsel %vm48, %v47, %v45
    %50 = vrot.lane.b32.xlu0 %v49, 24
    %v51 = vpop.permute.xlu0 %50
    %vm52 = vcmask 228544
    %53 = vst.msk [vmem:[#allocation0] sm:$0x3] %vm52, %v51
    %s54 = scalar_lea.vmem [#allocation0], 6
    %55 = vst.msk [vmem:[%s54] sm:$0xc] %vm52, %v51
    %s56 = scalar_lea.vmem [#allocation0], 12
    %57 = vst.msk [vmem:[%s56] sm:$0x30] %vm52, %v51
    %s58 = scalar_lea.vmem [#allocation0], 18
    %59 = vst.msk [vmem:[%s58] sm:$0xc0] %vm52, %v51
    %s60 = scalar_lea.vmem %s0, 70
    %s61 = smov 3
    %v62 = vld [vmem:[%s60] ss:$8 sm:%s61]
    %63 = vrot.lane.b32.xlu0 %v62, 24
    %v64 = vpop.permute.xlu0 %63
    %vm65 = vcmask 228544
    %s66 = scalar_lea.vmem [#allocation0], 32
    %67 = vst.msk [vmem:[%s66] sm:$0x3] %vm65, %v64
    %s68 = scalar_lea.vmem %s0, 5
    %v69 = vld [vmem:[%s68] ss:$8 sm:$0xf]
    %s70 = scalar_lea.vmem %s0, 5
    %v71 = vld [vmem:[%s70] ss:$8 sm:$0xf0]
    %vm72 = vcmask 1047556
    %v73 = vsel %vm72, %v71, %v69
    %74 = vrot.lane.b32.xlu0 %v73, 20
    %v75 = vpop.permute.xlu0 %74
    %vm76 = vcmask 195744
    %77 = vst.msk [vmem:[#allocation0] sm:$0x3] %vm76, %v75
    %s78 = scalar_lea.vmem [#allocation0], 6
    %79 = vst.msk [vmem:[%s78] sm:$0xc] %vm76, %v75
    %s80 = scalar_lea.vmem [#allocation0], 12
    %81 = vst.msk [vmem:[%s80] sm:$0x30] %vm76, %v75
    %s82 = scalar_lea.vmem [#allocation0], 18
    %83 = vst.msk [vmem:[%s82] sm:$0xc0] %vm76, %v75
    %s84 = scalar_lea.vmem %s0, 69
    %s85 = smov 3
    %v86 = vld [vmem:[%s84] ss:$8 sm:%s85]
    %87 = vrot.lane.b32.xlu0 %v86, 20
    %v88 = vpop.permute.xlu0 %87
    %vm89 = vcmask 195744
    %s90 = scalar_lea.vmem [#allocation0], 32
    %91 = vst.msk [vmem:[%s90] sm:$0x3] %vm89, %v88
    %s92 = scalar_lea.vmem %s0, 4
    %v93 = vld [vmem:[%s92] ss:$8 sm:$0xf]
    %s94 = scalar_lea.vmem %s0, 4
    %v95 = vld [vmem:[%s94] ss:$8 sm:$0xf0]
    %vm96 = vcmask 1047556
    %v97 = vsel %vm96, %v95, %v93
    %98 = vrot.lane.b32.xlu0 %v97, 16
    %v99 = vpop.permute.xlu0 %98
    %vm100 = vcmask 162944
    %101 = vst.msk [vmem:[#allocation0] sm:$0x3] %vm100, %v99
    %s102 = scalar_lea.vmem [#allocation0], 6
    %103 = vst.msk [vmem:[%s102] sm:$0xc] %vm100, %v99
    %s104 = scalar_lea.vmem [#allocation0], 12
    %105 = vst.msk [vmem:[%s104] sm:$0x30] %vm100, %v99
    %s106 = scalar_lea.vmem [#allocation0], 18
    %107 = vst.msk [vmem:[%s106] sm:$0xc0] %vm100, %v99
    %s108 = scalar_lea.vmem %s0, 68
    %s109 = smov 3
    %v110 = vld [vmem:[%s108] ss:$8 sm:%s109]
    %111 = vrot.lane.b32.xlu0 %v110, 16
    %v112 = vpop.permute.xlu0 %111
    %vm113 = vcmask 162944
    %s114 = scalar_lea.vmem [#allocation0], 32
    %115 = vst.msk [vmem:[%s114] sm:$0x3] %vm113, %v112
    %s116 = scalar_lea.vmem %s0, 3
    %v117 = vld [vmem:[%s116] ss:$8 sm:$0xf]
    %s118 = scalar_lea.vmem %s0, 3
    %v119 = vld [vmem:[%s118] ss:$8 sm:$0xf0]
    %vm120 = vcmask 1047556
    %v121 = vsel %vm120, %v119, %v117
    %122 = vrot.lane.b32.xlu0 %v121, 12
    %v123 = vpop.permute.xlu0 %122
    %vm124 = vcmask 130144
    %125 = vst.msk [vmem:[#allocation0] sm:$0x3] %vm124, %v123
    %s126 = scalar_lea.vmem [#allocation0], 6
    %127 = vst.msk [vmem:[%s126] sm:$0xc] %vm124, %v123
    %s128 = scalar_lea.vmem [#allocation0], 12
    %129 = vst.msk [vmem:[%s128] sm:$0x30] %vm124, %v123
    %s130 = scalar_lea.vmem [#allocation0], 18
    %131 = vst.msk [vmem:[%s130] sm:$0xc0] %vm124, %v123
    %s132 = scalar_lea.vmem %s0, 67
    %s133 = smov 3
    %v134 = vld [vmem:[%s132] ss:$8 sm:%s133]
    %135 = vrot.lane.b32.xlu0 %v134, 12
    %v136 = vpop.permute.xlu0 %135
    %vm137 = vcmask 130144
    %s138 = scalar_lea.vmem [#allocation0], 32
    %139 = vst.msk [vmem:[%s138] sm:$0x3] %vm137, %v136
    %s140 = scalar_lea.vmem %s0, 2
    %v141 = vld [vmem:[%s140] ss:$8 sm:$0xf]
    %s142 = scalar_lea.vmem %s0, 2
    %v143 = vld [vmem:[%s142] ss:$8 sm:$0xf0]
    %vm144 = vcmask 1047556
    %v145 = vsel %vm144, %v143, %v141
    %146 = vrot.lane.b32.xlu0 %v145, 8
    %v147 = vpop.permute.xlu0 %146
    %vm148 = vcmask 97344
    %149 = vst.msk [vmem:[#allocation0] sm:$0x3] %vm148, %v147
    %s150 = scalar_lea.vmem [#allocation0], 6
    %151 = vst.msk [vmem:[%s150] sm:$0xc] %vm148, %v147
    %s152 = scalar_lea.vmem [#allocation0], 12
    %153 = vst.msk [vmem:[%s152] sm:$0x30] %vm148, %v147
    %s154 = scalar_lea.vmem [#allocation0], 18
    %155 = vst.msk [vmem:[%s154] sm:$0xc0] %vm148, %v147
    %s156 = scalar_lea.vmem %s0, 66
    %s157 = smov 3
    %v158 = vld [vmem:[%s156] ss:$8 sm:%s157]
    %159 = vrot.lane.b32.xlu0 %v158, 8
    %v160 = vpop.permute.xlu0 %159
    %vm161 = vcmask 97344
    %s162 = scalar_lea.vmem [#allocation0], 32
    %163 = vst.msk [vmem:[%s162] sm:$0x3] %vm161, %v160
    %s164 = scalar_lea.vmem %s0, 1
    %v165 = vld [vmem:[%s164] ss:$8 sm:$0xf]
    %s166 = scalar_lea.vmem %s0, 1
    %v167 = vld [vmem:[%s166] ss:$8 sm:$0xf0]
    %vm168 = vcmask 1047556
    %v169 = vsel %vm168, %v167, %v165
    %170 = vrot.lane.b32.xlu0 %v169, 4
    %v171 = vpop.permute.xlu0 %170
    %vm172 = vcmask 64544
    %173 = vst.msk [vmem:[#allocation0] sm:$0x3] %vm172, %v171
    %s174 = scalar_lea.vmem [#allocation0], 6
    %175 = vst.msk [vmem:[%s174] sm:$0xc] %vm172, %v171
    %s176 = scalar_lea.vmem [#allocation0], 12
    %177 = vst.msk [vmem:[%s176] sm:$0x30] %vm172, %v171
    %s178 = scalar_lea.vmem [#allocation0], 18
    %179 = vst.msk [vmem:[%s178] sm:$0xc0] %vm172, %v171
    %s180 = scalar_lea.vmem %s0, 65
    %s181 = smov 3
    %v182 = vld [vmem:[%s180] ss:$8 sm:%s181]
    %183 = vrot.lane.b32.xlu0 %v182, 4
    %v184 = vpop.permute.xlu0 %183
    %vm185 = vcmask 64544
    %s186 = scalar_lea.vmem [#allocation0], 32
    %187 = vst.msk [vmem:[%s186] sm:$0x3] %vm185, %v184
    %s189 = sshllo.u32 0, 2
    %v191 = vld [vmem:[#allocation0] sm:%s189]
    %s192 = sshllo.u32 0, 2
    %193 = vst [vmem:[%s1] sm:%s192] %v191
    %s194 = scalar_lea.vmem [#allocation0], 8
    %v195 = vld [vmem:[%s194] sm:%s189]
    %s196 = sshllo.u32 0, 2
    %s197 = scalar_lea.vmem %s1, 2
    %198 = vst [vmem:[%s197] sm:%s196] %v195
    %s199 = scalar_lea.vmem [#allocation0], 16
    %v200 = vld [vmem:[%s199] sm:%s189]
    %s201 = sshllo.u32 0, 2
    %s202 = smul.addr 2, 2
    %s203 = scalar_lea.vmem %s1, %s202
    %204 = vst [vmem:[%s203] sm:%s201] %v200
    %s205 = scalar_lea.vmem [#allocation0], 24
    %v206 = vld [vmem:[%s205] sm:%s189]
    %s207 = sshllo.u32 0, 2
    %s208 = smul.addr 2, 3
    %s209 = scalar_lea.vmem %s1, %s208
    %210 = vst [vmem:[%s209] sm:%s207] %v206
    %s211 = scalar_lea.vmem [#allocation0], 32
    %v212 = vld [vmem:[%s211] sm:%s189]
    %s213 = sshllo.u32 0, 2
    %s214 = smul.addr 2, 4
    %s215 = scalar_lea.vmem %s1, %s214
    %216 = vst [vmem:[%s215] sm:%s213] %v212

// kernel: xanet_pallas.1
$region0: #{xanet_pallas.1}
  #allocation0 [shape = 'u32[]', space=smem, size = 0x4, offset = 0x4, fixed_abs, tag = 'smem constant byte address 0x4 - core index']
  #allocation1 [shape = 'u32[144,128]{1,0:T(1,128)}', space=vmem, size = 0x12000, scoped, tag = 'internal scratch']
  %s0 = inlined_call_operand.vmem [shape: f32[256,128], index: 0, kind: input, shape index: {}]
  %s1 = inlined_call_operand.vmem [shape: f32[9,128,128], index: 1, kind: input, shape index: {}]
  %s2 = inlined_call_operand.vmem [shape: f32[128,128], index: 2, kind: input, shape index: {}]
  %s3 = inlined_call_operand.vmem [shape: f32[3,128,10], index: 3, kind: input, shape index: {}]
  %s4 = inlined_call_operand.vmem [shape: f32[1,10], index: 4, kind: input, shape index: {}]
  %s5 = inlined_call_operand.vmem [shape: f32[64,128], index: 5, kind: input, shape index: {}]
  %s6 = inlined_call_operand.vmem [shape: f32[32,64], index: 6, kind: input, shape index: {}]
  %s7 = inlined_call_operand.vmem [shape: f32[5,50], index: 7, kind: input, shape index: {}]
  %s8 = inlined_call_operand.vmem [shape: f32[5,50], index: 8, kind: input, shape index: {}]
  %s9 = inlined_call_operand.vmem [shape: f32[5,5], index: 9, kind: input, shape index: {}]
  %s10 = inlined_call_operand.vmem [shape: f32[64,64], index: 10, kind: input, shape index: {}]
  %s11 = inlined_call_operand.vmem [shape: f32[8,64], index: 11, kind: input, shape index: {}]
  %s12 = inlined_call_operand.vmem [shape: f32[2,64,5], index: 12, kind: input, shape index: {}]
  %s13 = inlined_call_operand.vmem [shape: f32[1,2], index: 13, kind: input, shape index: {}]
  %s14 = inlined_call_operand.vmem [shape: f32[16,128], index: 14, kind: output, shape index: {}]
  %s15 = sld [smem:[#allocation0]]
  $region89: #{xanet_pallas.1} parent=0
    _
  %s17 = ssub.s32 1, %s15
  %s18 = scalar_select 0, %s17, %s15
  loop: start=0, step=1, limit=4
  $region2: #{xanet_pallas.1} parent=0 // loop_pre_header
    _
  $region3: #{xanet_pallas.1} parent=0 // loop_header
    %s20 = sphi 0, %s24
    %p21 = scmp.ge.s32.totalorder %s20, 4
    %s30 = sphi 0, %s32
    %s33 = sphi 0, %s30
    %s34 = sphi 0, %s33
    %s50 = sphi 0, %s34
    %s54 = sphi 0, %s54
    %s56 = sphi 0, %s54
    %s57 = sphi 0, %s56
    %s71 = sphi 0, %s57
    %s75 = sphi 0, %s75
    %s77 = sphi 0, %s75
    %s78 = sphi 0, %s77
    %s92 = sphi 0, %s78
    %s96 = sphi 0, %s96
    %s98 = sphi 0, %s96
    %s99 = sphi 0, %s98
    %s113 = sphi 0, %s99
    %s117 = sphi 0, %s117
    %s119 = sphi 0, %s117
    %s120 = sphi 0, %s119
    %s134 = sphi 0, %s120
    %s138 = sphi 0, %s138
    %s140 = sphi 0, %s138
    %s141 = sphi 0, %s140
    %s155 = sphi 0, %s141
    %s159 = sphi 0, %s159
    %s161 = sphi 0, %s159
    %s162 = sphi 0, %s161
    %s176 = sphi 0, %s162
    %s180 = sphi 0, %s180
    %s182 = sphi 0, %s180
    %s183 = sphi 0, %s182
    %s197 = sphi 0, %s183
    %s201 = sphi 0, %s201
    %s203 = sphi 0, %s201
    %s204 = sphi 0, %s203
    %s218 = sphi 0, %s204
    %s222 = sphi 0, %s222
    %s224 = sphi 0, %s222
    %s225 = sphi 0, %s224
    %s239 = sphi 0, %s225
    %s243 = sphi 0, %s243
    %s245 = sphi 0, %s243
    %s246 = sphi 0, %s245
    %s260 = sphi 0, %s246
    %s264 = sphi 0, %s264
    %s266 = sphi 0, %s264
    %s267 = sphi 0, %s266
    %s281 = sphi 0, %s267
    %s285 = sphi 0, %s285
    %s287 = sphi 0, %s285
    %s288 = sphi 0, %s287
    %s302 = sphi 0, %s288
    %s306 = sphi 0, %s306
    %s308 = sphi 0, %s306
    %s309 = sphi 0, %s308
    %s323 = sphi 0, %s309
    %s329 = sphi 0, %s331
    %s332 = sphi 0, %s329
    %s333 = sphi 0, %s332
    %s349 = sphi 0, %s333
  $region4: #{xanet_pallas.1} parent=0 // loop_header_branch
    %23 = sbr.rel (%p21) target = $region8
  $region5: #{xanet_pallas.1} parent=0 // loop_body
    %s25 = ssub.s32 %s20, 1
    %s26 = ssub.s32 %s20, 2
    %s27 = sadd.s32 %s20, 1
    %s28 = ssub.s32 %s20, %s27
    %p29 = scmp.eq.s32.totalorder %s28, 0
    %s31 = sadd.s32 %s30, 1
    %s32 = scalar_select %p29, %s30, %s31
    %p35 = pneg %p29
    %p36 = scmp.eq.s32.totalorder %s20, 1
    %p37 = por %p35, %p36
    %p38 = scmp.ne.s32.totalorder %s30, %s33
    %p39 = scmp.eq.s32.totalorder %s20, 0
    %p40 = por %p38, %p39
    %p41 = scmp.ne.s32.totalorder %s30, %s33
    %p42 = scmp.eq.s32.totalorder %s25, 1
    %p43 = por %p41, %p42
    %p44 = scmp.ne.s32.totalorder %s33, %s34
    %p45 = scmp.eq.s32.totalorder %s25, 0
    %p46 = por %p44, %p45
    %p47 = scmp.ne.s32.totalorder %s33, %s34
    %p48 = scmp.eq.s32.totalorder %s26, 1
    %p49 = por %p47, %p48
    %p51 = scmp.ne.s32.totalorder %s34, %s50
    %p52 = scmp.eq.s32.totalorder %s26, 0
    %p53 = por %p51, %p52
    %s55 = sadd.s32 %s54, 1
    %p58 = scmp.eq.s32.totalorder %s20, 1
    %p59 = scmp.ne.s32.totalorder %s54, %s56
    %p60 = scmp.eq.s32.totalorder %s20, 0
    %p61 = por %p59, %p60
    %p62 = scmp.ne.s32.totalorder %s54, %s56
    %p63 = scmp.eq.s32.totalorder %s25, 1
    %p64 = por %p62, %p63
    %p65 = scmp.ne.s32.totalorder %s56, %s57
    %p66 = scmp.eq.s32.totalorder %s25, 0
    %p67 = por %p65, %p66
    %p68 = scmp.ne.s32.totalorder %s56, %s57
    %p69 = scmp.eq.s32.totalorder %s26, 1
    %p70 = por %p68, %p69
    %p72 = scmp.ne.s32.totalorder %s57, %s71
    %p73 = scmp.eq.s32.totalorder %s26, 0
    %p74 = por %p72, %p73
    %s76 = sadd.s32 %s75, 1
    %p79 = scmp.eq.s32.totalorder %s20, 1
    %p80 = scmp.ne.s32.totalorder %s75, %s77
    %p81 = scmp.eq.s32.totalorder %s20, 0
    %p82 = por %p80, %p81
    %p83 = scmp.ne.s32.totalorder %s75, %s77
    %p84 = scmp.eq.s32.totalorder %s25, 1
    %p85 = por %p83, %p84
    %p86 = scmp.ne.s32.totalorder %s77, %s78
    %p87 = scmp.eq.s32.totalorder %s25, 0
    %p88 = por %p86, %p87
    %p89 = scmp.ne.s32.totalorder %s77, %s78
    %p90 = scmp.eq.s32.totalorder %s26, 1
    %p91 = por %p89, %p90
    %p93 = scmp.ne.s32.totalorder %s78, %s92
    %p94 = scmp.eq.s32.totalorder %s26, 0
    %p95 = por %p93, %p94
    %s97 = sadd.s32 %s96, 1
    %p100 = scmp.eq.s32.totalorder %s20, 1
    %p101 = scmp.ne.s32.totalorder %s96, %s98
    %p102 = scmp.eq.s32.totalorder %s20, 0
    %p103 = por %p101, %p102
    %p104 = scmp.ne.s32.totalorder %s96, %s98
    %p105 = scmp.eq.s32.totalorder %s25, 1
    %p106 = por %p104, %p105
    %p107 = scmp.ne.s32.totalorder %s98, %s99
    %p108 = scmp.eq.s32.totalorder %s25, 0
    %p109 = por %p107, %p108
    %p110 = scmp.ne.s32.totalorder %s98, %s99
    %p111 = scmp.eq.s32.totalorder %s26, 1
    %p112 = por %p110, %p111
    %p114 = scmp.ne.s32.totalorder %s99, %s113
    %p115 = scmp.eq.s32.totalorder %s26, 0
    %p116 = por %p114, %p115
    %s118 = sadd.s32 %s117, 1
    %p121 = scmp.eq.s32.totalorder %s20, 1
    %p122 = scmp.ne.s32.totalorder %s117, %s119
    %p123 = scmp.eq.s32.totalorder %s20, 0
    %p124 = por %p122, %p123
    %p125 = scmp.ne.s32.totalorder %s117, %s119
    %p126 = scmp.eq.s32.totalorder %s25, 1
    %p127 = por %p125, %p126
    %p128 = scmp.ne.s32.totalorder %s119, %s120
    %p129 = scmp.eq.s32.totalorder %s25, 0
    %p130 = por %p128, %p129
    %p131 = scmp.ne.s32.totalorder %s119, %s120
    %p132 = scmp.eq.s32.totalorder %s26, 1
    %p133 = por %p131, %p132
    %p135 = scmp.ne.s32.totalorder %s120, %s134
    %p136 = scmp.eq.s32.totalorder %s26, 0
    %p137 = por %p135, %p136
    %s139 = sadd.s32 %s138, 1
    %p142 = scmp.eq.s32.totalorder %s20, 1
    %p143 = scmp.ne.s32.totalorder %s138, %s140
    %p144 = scmp.eq.s32.totalorder %s20, 0
    %p145 = por %p143, %p144
    %p146 = scmp.ne.s32.totalorder %s138, %s140
    %p147 = scmp.eq.s32.totalorder %s25, 1
    %p148 = por %p146, %p147
    %p149 = scmp.ne.s32.totalorder %s140, %s141
    %p150 = scmp.eq.s32.totalorder %s25, 0
    %p151 = por %p149, %p150
    %p152 = scmp.ne.s32.totalorder %s140, %s141
    %p153 = scmp.eq.s32.totalorder %s26, 1
    %p154 = por %p152, %p153
    %p156 = scmp.ne.s32.totalorder %s141, %s155
    %p157 = scmp.eq.s32.totalorder %s26, 0
    %p158 = por %p156, %p157
    %s160 = sadd.s32 %s159, 1
    %p163 = scmp.eq.s32.totalorder %s20, 1
    %p164 = scmp.ne.s32.totalorder %s159, %s161
    %p165 = scmp.eq.s32.totalorder %s20, 0
    %p166 = por %p164, %p165
    %p167 = scmp.ne.s32.totalorder %s159, %s161
    %p168 = scmp.eq.s32.totalorder %s25, 1
    %p169 = por %p167, %p168
    %p170 = scmp.ne.s32.totalorder %s161, %s162
    %p171 = scmp.eq.s32.totalorder %s25, 0
    %p172 = por %p170, %p171
    %p173 = scmp.ne.s32.totalorder %s161, %s162
    %p174 = scmp.eq.s32.totalorder %s26, 1
    %p175 = por %p173, %p174
    %p177 = scmp.ne.s32.totalorder %s162, %s176
    %p178 = scmp.eq.s32.totalorder %s26, 0
    %p179 = por %p177, %p178
    %s181 = sadd.s32 %s180, 1
    %p184 = scmp.eq.s32.totalorder %s20, 1
    %p185 = scmp.ne.s32.totalorder %s180, %s182
    %p186 = scmp.eq.s32.totalorder %s20, 0
    %p187 = por %p185, %p186
    %p188 = scmp.ne.s32.totalorder %s180, %s182
    %p189 = scmp.eq.s32.totalorder %s25, 1
    %p190 = por %p188, %p189
    %p191 = scmp.ne.s32.totalorder %s182, %s183
    %p192 = scmp.eq.s32.totalorder %s25, 0
    %p193 = por %p191, %p192
    %p194 = scmp.ne.s32.totalorder %s182, %s183
    %p195 = scmp.eq.s32.totalorder %s26, 1
    %p196 = por %p194, %p195
    %p198 = scmp.ne.s32.totalorder %s183, %s197
    %p199 = scmp.eq.s32.totalorder %s26, 0
    %p200 = por %p198, %p199
    %s202 = sadd.s32 %s201, 1
    %p205 = scmp.eq.s32.totalorder %s20, 1
    %p206 = scmp.ne.s32.totalorder %s201, %s203
    %p207 = scmp.eq.s32.totalorder %s20, 0
    %p208 = por %p206, %p207
    %p209 = scmp.ne.s32.totalorder %s201, %s203
    %p210 = scmp.eq.s32.totalorder %s25, 1
    %p211 = por %p209, %p210
    %p212 = scmp.ne.s32.totalorder %s203, %s204
    %p213 = scmp.eq.s32.totalorder %s25, 0
    %p214 = por %p212, %p213
    %p215 = scmp.ne.s32.totalorder %s203, %s204
    %p216 = scmp.eq.s32.totalorder %s26, 1
    %p217 = por %p215, %p216
    %p219 = scmp.ne.s32.totalorder %s204, %s218
    %p220 = scmp.eq.s32.totalorder %s26, 0
    %p221 = por %p219, %p220
    %s223 = sadd.s32 %s222, 1
    %p226 = scmp.eq.s32.totalorder %s20, 1
    %p227 = scmp.ne.s32.totalorder %s222, %s224
    %p228 = scmp.eq.s32.totalorder %s20, 0
    %p229 = por %p227, %p228
    %p230 = scmp.ne.s32.totalorder %s222, %s224
    %p231 = scmp.eq.s32.totalorder %s25, 1
    %p232 = por %p230, %p231
    %p233 = scmp.ne.s32.totalorder %s224, %s225
    %p234 = scmp.eq.s32.totalorder %s25, 0
    %p235 = por %p233, %p234
    %p236 = scmp.ne.s32.totalorder %s224, %s225
    %p237 = scmp.eq.s32.totalorder %s26, 1
    %p238 = por %p236, %p237
    %p240 = scmp.ne.s32.totalorder %s225, %s239
    %p241 = scmp.eq.s32.totalorder %s26, 0
    %p242 = por %p240, %p241
    %s244 = sadd.s32 %s243, 1
    %p247 = scmp.eq.s32.totalorder %s20, 1
    %p248 = scmp.ne.s32.totalorder %s243, %s245
    %p249 = scmp.eq.s32.totalorder %s20, 0
    %p250 = por %p248, %p249
    %p251 = scmp.ne.s32.totalorder %s243, %s245
    %p252 = scmp.eq.s32.totalorder %s25, 1
    %p253 = por %p251, %p252
    %p254 = scmp.ne.s32.totalorder %s245, %s246
    %p255 = scmp.eq.s32.totalorder %s25, 0
    %p256 = por %p254, %p255
    %p257 = scmp.ne.s32.totalorder %s245, %s246
    %p258 = scmp.eq.s32.totalorder %s26, 1
    %p259 = por %p257, %p258
    %p261 = scmp.ne.s32.totalorder %s246, %s260
    %p262 = scmp.eq.s32.totalorder %s26, 0
    %p263 = por %p261, %p262
    %s265 = sadd.s32 %s264, 1
    %p268 = scmp.eq.s32.totalorder %s20, 1
    %p269 = scmp.ne.s32.totalorder %s264, %s266
    %p270 = scmp.eq.s32.totalorder %s20, 0
    %p271 = por %p269, %p270
    %p272 = scmp.ne.s32.totalorder %s264, %s266
    %p273 = scmp.eq.s32.totalorder %s25, 1
    %p274 = por %p272, %p273
    %p275 = scmp.ne.s32.totalorder %s266, %s267
    %p276 = scmp.eq.s32.totalorder %s25, 0
    %p277 = por %p275, %p276
    %p278 = scmp.ne.s32.totalorder %s266, %s267
    %p279 = scmp.eq.s32.totalorder %s26, 1
    %p280 = por %p278, %p279
    %p282 = scmp.ne.s32.totalorder %s267, %s281
    %p283 = scmp.eq.s32.totalorder %s26, 0
    %p284 = por %p282, %p283
    %s286 = sadd.s32 %s285, 1
    %p289 = scmp.eq.s32.totalorder %s20, 1
    %p290 = scmp.ne.s32.totalorder %s285, %s287
    %p291 = scmp.eq.s32.totalorder %s20, 0
    %p292 = por %p290, %p291
    %p293 = scmp.ne.s32.totalorder %s285, %s287
    %p294 = scmp.eq.s32.totalorder %s25, 1
    %p295 = por %p293, %p294
    %p296 = scmp.ne.s32.totalorder %s287, %s288
    %p297 = scmp.eq.s32.totalorder %s25, 0
    %p298 = por %p296, %p297
    %p299 = scmp.ne.s32.totalorder %s287, %s288
    %p300 = scmp.eq.s32.totalorder %s26, 1
    %p301 = por %p299, %p300
    %p303 = scmp.ne.s32.totalorder %s288, %s302
    %p304 = scmp.eq.s32.totalorder %s26, 0
    %p305 = por %p303, %p304
    %s307 = sadd.s32 %s306, 1
    %p310 = scmp.eq.s32.totalorder %s20, 1
    %p311 = scmp.ne.s32.totalorder %s306, %s308
    %p312 = scmp.eq.s32.totalorder %s20, 0
    %p313 = por %p311, %p312
    %p314 = scmp.ne.s32.totalorder %s306, %s308
    %p315 = scmp.eq.s32.totalorder %s25, 1
    %p316 = por %p314, %p315
    %p317 = scmp.ne.s32.totalorder %s308, %s309
    %p318 = scmp.eq.s32.totalorder %s25, 0
    %p319 = por %p317, %p318
    %p320 = scmp.ne.s32.totalorder %s308, %s309
    %p321 = scmp.eq.s32.totalorder %s26, 1
    %p322 = por %p320, %p321
    %p324 = scmp.ne.s32.totalorder %s309, %s323
    %p325 = scmp.eq.s32.totalorder %s26, 0
    %p326 = por %p324, %p325
    %s327 = ssub.s32 %s20, %s27
    %p328 = scmp.eq.s32.totalorder %s327, 0
    %s330 = sadd.s32 %s329, 1
    %s331 = scalar_select %p328, %s329, %s330
    %p334 = pneg %p328
    %p335 = scmp.eq.s32.totalorder %s20, 1
    %p336 = por %p334, %p335
    %p337 = scmp.ne.s32.totalorder %s329, %s332
    %p338 = scmp.eq.s32.totalorder %s20, 0
    %p339 = por %p337, %p338
    %p340 = scmp.ne.s32.totalorder %s329, %s332
    %p341 = scmp.eq.s32.totalorder %s25, 1
    %p342 = por %p340, %p341
    %p343 = scmp.ne.s32.totalorder %s332, %s333
    %p344 = scmp.eq.s32.totalorder %s25, 0
    %p345 = por %p343, %p344
    %p346 = scmp.ne.s32.totalorder %s332, %s333
    %p347 = scmp.eq.s32.totalorder %s26, 1
    %p348 = por %p346, %p347
    %p350 = scmp.ne.s32.totalorder %s333, %s349
    %p351 = scmp.eq.s32.totalorder %s26, 0
    %p352 = por %p350, %p351
    %p353 = scmp.le.s32.totalorder 1, %s20
    %p354 = scmp.lt.s32.totalorder %s20, 3
    %p355 = pnand %p353, %p354
    %p356 = pneg %p355
    // Predicated region
    $region9: #{xanet_pallas.1} parent=5 // pred_check
      _
    $region10: #{xanet_pallas.1} parent=5 // pred_check_branch
      %358 = sbr.rel (%p355) target = $region12
    $region11: #{xanet_pallas.1} parent=5 // pred_region
      %s359 = ssub.s32 %s20, 1
      // Predicated region
      $region13: #{xanet_pallas.1} parent=11 // pred_check
        %p360 = pneg %p67
      $region14: #{xanet_pallas.1} parent=11 // pred_check_branch
        %362 = sbr.rel (%p360) target = $region16
      $region15: #{xanet_pallas.1} parent=11 // pred_region
        _
      $region16: #{xanet_pallas.1} parent=11 // pred_fallthru
        _
      // Predicated region
      $region17: #{xanet_pallas.1} parent=11 // pred_check
        %p363 = pneg %p88
      $region18: #{xanet_pallas.1} parent=11 // pred_check_branch
        %365 = sbr.rel (%p363) target = $region20
      $region19: #{xanet_pallas.1} parent=11 // pred_region
        _
      $region20: #{xanet_pallas.1} parent=11 // pred_fallthru
        _
      // Predicated region
      $region21: #{xanet_pallas.1} parent=11 // pred_check
        %p366 = pneg %p109
      $region22: #{xanet_pallas.1} parent=11 // pred_check_branch
        %368 = sbr.rel (%p366) target = $region24
      $region23: #{xanet_pallas.1} parent=11 // pred_region
        _
      $region24: #{xanet_pallas.1} parent=11 // pred_fallthru
        _
      // Predicated region
      $region25: #{xanet_pallas.1} parent=11 // pred_check
        %p369 = pneg %p130
      $region26: #{xanet_pallas.1} parent=11 // pred_check_branch
        %371 = sbr.rel (%p369) target = $region28
      $region27: #{xanet_pallas.1} parent=11 // pred_region
        _
      $region28: #{xanet_pallas.1} parent=11 // pred_fallthru
        _
      // Predicated region
      $region29: #{xanet_pallas.1} parent=11 // pred_check
        %p372 = pneg %p151
      $region30: #{xanet_pallas.1} parent=11 // pred_check_branch
        %374 = sbr.rel (%p372) target = $region32
      $region31: #{xanet_pallas.1} parent=11 // pred_region
        _
      $region32: #{xanet_pallas.1} parent=11 // pred_fallthru
        _
      // Predicated region
      $region33: #{xanet_pallas.1} parent=11 // pred_check
        %p375 = pneg %p172
      $region34: #{xanet_pallas.1} parent=11 // pred_check_branch
        %377 = sbr.rel (%p375) target = $region36
      $region35: #{xanet_pallas.1} parent=11 // pred_region
        _
      $region36: #{xanet_pallas.1} parent=11 // pred_fallthru
        _
      // Predicated region
      $region37: #{xanet_pallas.1} parent=11 // pred_check
        %p378 = pneg %p193
      $region38: #{xanet_pallas.1} parent=11 // pred_check_branch
        %380 = sbr.rel (%p378) target = $region40
      $region39: #{xanet_pallas.1} parent=11 // pred_region
        _
      $region40: #{xanet_pallas.1} parent=11 // pred_fallthru
        _
      // Predicated region
      $region41: #{xanet_pallas.1} parent=11 // pred_check
        %p381 = pneg %p214
      $region42: #{xanet_pallas.1} parent=11 // pred_check_branch
        %383 = sbr.rel (%p381) target = $region44
      $region43: #{xanet_pallas.1} parent=11 // pred_region
        _
      $region44: #{xanet_pallas.1} parent=11 // pred_fallthru
        _
      // Predicated region
      $region45: #{xanet_pallas.1} parent=11 // pred_check
        %p384 = pneg %p235
      $region46: #{xanet_pallas.1} parent=11 // pred_check_branch
        %386 = sbr.rel (%p384) target = $region48
      $region47: #{xanet_pallas.1} parent=11 // pred_region
        _
      $region48: #{xanet_pallas.1} parent=11 // pred_fallthru
        _
      // Predicated region
      $region49: #{xanet_pallas.1} parent=11 // pred_check
        %p387 = pneg %p256
      $region50: #{xanet_pallas.1} parent=11 // pred_check_branch
        %389 = sbr.rel (%p387) target = $region52
      $region51: #{xanet_pallas.1} parent=11 // pred_region
        _
      $region52: #{xanet_pallas.1} parent=11 // pred_fallthru
        _
      // Predicated region
      $region53: #{xanet_pallas.1} parent=11 // pred_check
        %p390 = pneg %p277
      $region54: #{xanet_pallas.1} parent=11 // pred_check_branch
        %392 = sbr.rel (%p390) target = $region56
      $region55: #{xanet_pallas.1} parent=11 // pred_region
        _
      $region56: #{xanet_pallas.1} parent=11 // pred_fallthru
        _
      // Predicated region
      $region57: #{xanet_pallas.1} parent=11 // pred_check
        %p393 = pneg %p298
      $region58: #{xanet_pallas.1} parent=11 // pred_check_branch
        %395 = sbr.rel (%p393) target = $region60
      $region59: #{xanet_pallas.1} parent=11 // pred_region
        _
      $region60: #{xanet_pallas.1} parent=11 // pred_fallthru
        _
      // Predicated region
      $region61: #{xanet_pallas.1} parent=11 // pred_check
        %p396 = pneg %p319
      $region62: #{xanet_pallas.1} parent=11 // pred_check_branch
        %398 = sbr.rel (%p396) target = $region64
      $region63: #{xanet_pallas.1} parent=11 // pred_region
        _
      $region64: #{xanet_pallas.1} parent=11 // pred_fallthru
        _
    $region12: #{xanet_pallas.1} parent=5 // pred_fallthru
      _
    %p399 = scmp.lt.s32.totalorder %s20, 2
    // Predicated region
    $region65: #{xanet_pallas.1} parent=5 // pred_check
      %p400 = pneg %p399
    $region66: #{xanet_pallas.1} parent=5 // pred_check_branch
      %402 = sbr.rel (%p400) target = $region68
    $region67: #{xanet_pallas.1} parent=5 // pred_region
      // Predicated region
      $region69: #{xanet_pallas.1} parent=67 // pred_check
        %p403 = pneg %p40
      $region70: #{xanet_pallas.1} parent=67 // pred_check_branch
        %405 = sbr.rel (%p403) target = $region72
      $region71: #{xanet_pallas.1} parent=67 // pred_region
        %s406 = smul.u32 16, %s20
        %p407 = scmp.lt.s32.totalorder %s406, 31
        %s408 = scalar_select %p407, %s406, 31
        %s409 = smul.addr %s408, 8
        %s410 = scalar_lea.vmem %s0, %s409
        %s411 = smul.u32 16, %s20
      $region72: #{xanet_pallas.1} parent=67 // pred_fallthru
        _
    $region68: #{xanet_pallas.1} parent=5 // pred_fallthru
      _
    %p412 = scmp.le.s32.totalorder 1, %s20
    %p413 = scmp.lt.s32.totalorder %s20, 3
    %p414 = pnand %p412, %p413
    %p415 = pneg %p414
    // Predicated region
    $region73: #{xanet_pallas.1} parent=5 // pred_check
      _
    $region74: #{xanet_pallas.1} parent=5 // pred_check_branch
      %417 = sbr.rel (%p414) target = $region76
    $region75: #{xanet_pallas.1} parent=5 // pred_region
      %s418 = ssub.s32 %s20, 1
      %s419 = smul.u32 16, %s25
      %p420 = scmp.lt.s32.totalorder %s419, 31
      %s421 = scalar_select %p420, %s419, 31
      %s422 = smul.addr %s421, 8
      %s423 = scalar_lea.vmem %s0, %s422
      %p424 = pneg %p46
      %p425 = pneg %p43
      %p426 = pneg %p67
      %p427 = pneg %p64
      %p428 = pneg %p88
      %p429 = pneg %p85
      %p430 = pneg %p109
      %p431 = pneg %p106
      %p432 = pneg %p130
      %p433 = pneg %p127
      %p434 = pneg %p151
      %p435 = pneg %p148
      %p436 = pneg %p172
      %p437 = pneg %p169
      %p438 = pneg %p193
      %p439 = pneg %p190
      %p440 = pneg %p214
      %p441 = pneg %p211
      %p442 = pneg %p235
      %p443 = pneg %p232
      %p444 = pneg %p256
      %p445 = pneg %p253
      %p446 = pneg %p277
      %p447 = pneg %p274
      %p448 = pneg %p298
      %p449 = pneg %p295
      %p450 = pneg %p319
      %p451 = pneg %p316
      %p452 = pneg %p345
      %p453 = pneg %p342
      %p454 = scmp.lt.s32.totalorder %s25, 1
      %s455 = scalar_select %p454, %s25, 1
      %s456 = smul.addr %s455, 8
      %s457 = scalar_lea.vmem %s14, %s456
      %s458 = smul.u32 16, %s25
      %p459 = scmp.lt.s32.totalorder %s458, 31
      %s460 = scalar_select %p459, %s458, 31
      %s461 = smul.addr %s460, 8
      %s462 = scalar_lea.vmem %s0, %s461
      %s463 = smul.u32 16, %s25
      %p464 = scmp.lt.s32.totalorder %s25, 1
      %s465 = scalar_select %p464, %s25, 1
      %s466 = smul.addr %s465, 8
      %s467 = scalar_lea.vmem %s14, %s466
      %v468 = vld [vmem:[%s462] sm:$0xff]
      %v469 = vld [vmem:[%s462 + $0x8] sm:$0xff]
      %v470 = vld [vmem:[%s462 + $0x10] sm:$0xff]
      %v471 = vld [vmem:[%s462 + $0x18] sm:$0xff]
      %v472 = vld [vmem:[%s462 + $0x20] sm:$0xff]
      %v473 = vld [vmem:[%s462 + $0x28] sm:$0xff]
      %v474 = vld [vmem:[%s462 + $0x30] sm:$0xff]
      %v475 = vld [vmem:[%s462 + $0x38] sm:$0xff]
      %v476 = vld [vmem:[%s462 + $0x40] sm:$0xff]
      %v477 = vld [vmem:[%s462 + $0x48] sm:$0xff]
      %v478 = vld [vmem:[%s462 + $0x50] sm:$0xff]
      %v479 = vld [vmem:[%s462 + $0x58] sm:$0xff]
      %v480 = vld [vmem:[%s462 + $0x60] sm:$0xff]
      %v481 = vld [vmem:[%s462 + $0x68] sm:$0xff]
      %v482 = vld [vmem:[%s462 + $0x70] sm:$0xff]
      %v483 = vld [vmem:[%s462 + $0x78] sm:$0xff]
      %v484 = vld [vmem:[%s2] sm:$0xff]
      %v485 = vld [vmem:[%s2 + $0x8] sm:$0xff]
      %v486 = vld [vmem:[%s2 + $0x10] sm:$0xff]
      %v487 = vld [vmem:[%s2 + $0x18] sm:$0xff]
      %v488 = vld [vmem:[%s2 + $0x20] sm:$0xff]
      %v489 = vld [vmem:[%s2 + $0x28] sm:$0xff]
      %v490 = vld [vmem:[%s2 + $0x30] sm:$0xff]
      %v491 = vld [vmem:[%s2 + $0x38] sm:$0xff]
      %v492 = vld [vmem:[%s2 + $0x40] sm:$0xff]
      %v493 = vld [vmem:[%s2 + $0x48] sm:$0xff]
      %v494 = vld [vmem:[%s2 + $0x50] sm:$0xff]
      %v495 = vld [vmem:[%s2 + $0x58] sm:$0xff]
      %v496 = vld [vmem:[%s2 + $0x60] sm:$0xff]
      %v497 = vld [vmem:[%s2 + $0x68] sm:$0xff]
      %v498 = vld [vmem:[%s2 + $0x70] sm:$0xff]
      %v499 = vld [vmem:[%s2 + $0x78] sm:$0xff]
      %v500 = vrot.slane %v468, 7
      %v501 = vrot.slane %v469, 7
      %v502 = vrot.slane %v470, 7
      %v503 = vrot.slane %v471, 7
      %v504 = vrot.slane %v472, 7
      %v505 = vrot.slane %v473, 7
      %v506 = vrot.slane %v474, 7
      %v507 = vrot.slane %v475, 7
      %v508 = vrot.slane %v476, 7
      %v509 = vrot.slane %v477, 7
      %v510 = vrot.slane %v478, 7
      %v511 = vrot.slane %v479, 7
      %v512 = vrot.slane %v480, 7
      %v513 = vrot.slane %v481, 7
      %v514 = vrot.slane %v482, 7
      %v515 = vrot.slane %v483, 7
      %v516 = vlaneseq
      %v517 = vshrl.u32 %v516, 7
      %vm518 = vcmp.lt.s32.totalorder %v517, 1
      %v519 = vsel %vm518, %v514, %v515
      %v520 = vsel %vm518, %v513, %v514
      %v521 = vsel %vm518, %v512, %v513
      %v522 = vsel %vm518, %v511, %v512
      %v523 = vsel %vm518, %v510, %v511
      %v524 = vsel %vm518, %v509, %v510
      %v525 = vsel %vm518, %v508, %v509
      %v526 = vsel %vm518, %v507, %v508
      %v527 = vsel %vm518, %v506, %v507
      %v528 = vsel %vm518, %v505, %v506
      %v529 = vsel %vm518, %v504, %v505
      %v530 = vsel %vm518, %v503, %v504
      %v531 = vsel %vm518, %v502, %v503
      %v532 = vsel %vm518, %v501, %v502
      %v533 = vsel %vm518, %v500, %v501
      %v534 = vsel %vm518, %v515, %v500
      %535 = vrot.lane.b32.xlu0 %v534, 1
      %v536 = vpop.permute.xlu0 %535
      %537 = vrot.lane.b32.xlu0 %v533, 1
      %v538 = vpop.permute.xlu0 %537
      %539 = vrot.lane.b32.xlu0 %v532, 1
      %v540 = vpop.permute.xlu0 %539
      %541 = vrot.lane.b32.xlu0 %v531, 1
      %v542 = vpop.permute.xlu0 %541
      %543 = vrot.lane.b32.xlu0 %v530, 1
      %v544 = vpop.permute.xlu0 %543
      %545 = vrot.lane.b32.xlu0 %v529, 1
      %v546 = vpop.permute.xlu0 %545
      %547 = vrot.lane.b32.xlu0 %v528, 1
      %v548 = vpop.permute.xlu0 %547
      %549 = vrot.lane.b32.xlu0 %v527, 1
      %v550 = vpop.permute.xlu0 %549
      %551 = vrot.lane.b32.xlu0 %v526, 1
      %v552 = vpop.permute.xlu0 %551
      %553 = vrot.lane.b32.xlu0 %v525, 1
      %v554 = vpop.permute.xlu0 %553
      %555 = vrot.lane.b32.xlu0 %v524, 1
      %v556 = vpop.permute.xlu0 %555
      %557 = vrot.lane.b32.xlu0 %v523, 1
      %v558 = vpop.permute.xlu0 %557
      %559 = vrot.lane.b32.xlu0 %v522, 1
      %v560 = vpop.permute.xlu0 %559
      %561 = vrot.lane.b32.xlu0 %v521, 1
      %v562 = vpop.permute.xlu0 %561
      %563 = vrot.lane.b32.xlu0 %v520, 1
      %v564 = vpop.permute.xlu0 %563
      %565 = vrot.lane.b32.xlu0 %v519, 1
      %v566 = vpop.permute.xlu0 %565
      %v567 = vld [vmem:[%s1] sm:$0xff]
      %v568 = vld [vmem:[%s1 + $0x8] sm:$0xff]
      %v569 = vld [vmem:[%s1 + $0x10] sm:$0xff]
      %v570 = vld [vmem:[%s1 + $0x18] sm:$0xff]
      %v571 = vld [vmem:[%s1 + $0x20] sm:$0xff]
      %v572 = vld [vmem:[%s1 + $0x28] sm:$0xff]
      %v573 = vld [vmem:[%s1 + $0x30] sm:$0xff]
      %v574 = vld [vmem:[%s1 + $0x38] sm:$0xff]
      %v575 = vld [vmem:[%s1 + $0x40] sm:$0xff]
      %v576 = vld [vmem:[%s1 + $0x48] sm:$0xff]
      %v577 = vld [vmem:[%s1 + $0x50] sm:$0xff]
      %v578 = vld [vmem:[%s1 + $0x58] sm:$0xff]
      %v579 = vld [vmem:[%s1 + $0x60] sm:$0xff]
      %v580 = vld [vmem:[%s1 + $0x68] sm:$0xff]
      %v581 = vld [vmem:[%s1 + $0x70] sm:$0xff]
      %v582 = vld [vmem:[%s1 + $0x78] sm:$0xff]
      %v583 = vmul.f32 %v567, %v536
      %v584 = vmul.f32 %v568, %v538
      %v585 = vmul.f32 %v569, %v540
      %v586 = vmul.f32 %v570, %v542
      %v587 = vmul.f32 %v571, %v544
      %v588 = vmul.f32 %v572, %v546
      %v589 = vmul.f32 %v573, %v548
      %v590 = vmul.f32 %v574, %v550
      %v591 = vmul.f32 %v575, %v552
      %v592 = vmul.f32 %v576, %v554
      %v593 = vmul.f32 %v577, %v556
      %v594 = vmul.f32 %v578, %v558
      %v595 = vmul.f32 %v579, %v560
      %v596 = vmul.f32 %v580, %v562
      %v597 = vmul.f32 %v581, %v564
      %v598 = vmul.f32 %v582, %v566
      %v599 = vadd.f32 %v484, %v583
      %v600 = vadd.f32 %v485, %v584
      %v601 = vadd.f32 %v486, %v585
      %v602 = vadd.f32 %v487, %v586
      %v603 = vadd.f32 %v488, %v587
      %v604 = vadd.f32 %v489, %v588
      %v605 = vadd.f32 %v490, %v589
      %v606 = vadd.f32 %v491, %v590
      %v607 = vadd.f32 %v492, %v591
      %v608 = vadd.f32 %v493, %v592
      %v609 = vadd.f32 %v494, %v593
      %v610 = vadd.f32 %v495, %v594
      %v611 = vadd.f32 %v496, %v595
      %v612 = vadd.f32 %v497, %v596
      %v613 = vadd.f32 %v498, %v597
      %v614 = vadd.f32 %v499, %v598
      %s615 = scalar_lea.vmem %s1, 128
      %v616 = vld [vmem:[%s615] sm:$0xff]
      %v617 = vld [vmem:[%s615 + $0x8] sm:$0xff]
      %v618 = vld [vmem:[%s615 + $0x10] sm:$0xff]
      %v619 = vld [vmem:[%s615 + $0x18] sm:$0xff]
      %v620 = vld [vmem:[%s615 + $0x20] sm:$0xff]
      %v621 = vld [vmem:[%s615 + $0x28] sm:$0xff]
      %v622 = vld [vmem:[%s615 + $0x30] sm:$0xff]
      %v623 = vld [vmem:[%s615 + $0x38] sm:$0xff]
      %v624 = vld [vmem:[%s615 + $0x40] sm:$0xff]
      %v625 = vld [vmem:[%s615 + $0x48] sm:$0xff]
      %v626 = vld [vmem:[%s615 + $0x50] sm:$0xff]
      %v627 = vld [vmem:[%s615 + $0x58] sm:$0xff]
      %v628 = vld [vmem:[%s615 + $0x60] sm:$0xff]
      %v629 = vld [vmem:[%s615 + $0x68] sm:$0xff]
      %v630 = vld [vmem:[%s615 + $0x70] sm:$0xff]
      %v631 = vld [vmem:[%s615 + $0x78] sm:$0xff]
      %v632 = vmul.f32 %v616, %v534
      %v633 = vmul.f32 %v617, %v533
      %v634 = vmul.f32 %v618, %v532
      %v635 = vmul.f32 %v619, %v531
      %v636 = vmul.f32 %v620, %v530
      %v637 = vmul.f32 %v621, %v529
      %v638 = vmul.f32 %v622, %v528
      %v639 = vmul.f32 %v623, %v527
      %v640 = vmul.f32 %v624, %v526
      %v641 = vmul.f32 %v625, %v525
      %v642 = vmul.f32 %v626, %v524
      %v643 = vmul.f32 %v627, %v523
      %v644 = vmul.f32 %v628, %v522
      %v645 = vmul.f32 %v629, %v521
      %v646 = vmul.f32 %v630, %v520
      %v647 = vmul.f32 %v631, %v519
      %v648 = vadd.f32 %v599, %v632
      %v649 = vadd.f32 %v600, %v633
      %v650 = vadd.f32 %v601, %v634
      %v651 = vadd.f32 %v602, %v635
      %v652 = vadd.f32 %v603, %v636
      %v653 = vadd.f32 %v604, %v637
      %v654 = vadd.f32 %v605, %v638
      %v655 = vadd.f32 %v606, %v639
      %v656 = vadd.f32 %v607, %v640
      %v657 = vadd.f32 %v608, %v641
      %v658 = vadd.f32 %v609, %v642
      %v659 = vadd.f32 %v610, %v643
      %v660 = vadd.f32 %v611, %v644
      %v661 = vadd.f32 %v612, %v645
      %v662 = vadd.f32 %v613, %v646
      %v663 = vadd.f32 %v614, %v647
      %664 = vrot.lane.b32.xlu0 %v534, 127
      %v665 = vpop.permute.xlu0 %664
      %666 = vrot.lane.b32.xlu0 %v533, 127
      %v667 = vpop.permute.xlu0 %666
      %668 = vrot.lane.b32.xlu0 %v532, 127
      %v669 = vpop.permute.xlu0 %668
      %670 = vrot.lane.b32.xlu0 %v531, 127
      %v671 = vpop.permute.xlu0 %670
      %672 = vrot.lane.b32.xlu0 %v530, 127
      %v673 = vpop.permute.xlu0 %672
      %674 = vrot.lane.b32.xlu0 %v529, 127
      %v675 = vpop.permute.xlu0 %674
      %676 = vrot.lane.b32.xlu0 %v528, 127
      %v677 = vpop.permute.xlu0 %676
      %678 = vrot.lane.b32.xlu0 %v527, 127
      %v679 = vpop.permute.xlu0 %678
      %680 = vrot.lane.b32.xlu0 %v526, 127
      %v681 = vpop.permute.xlu0 %680
      %682 = vrot.lane.b32.xlu0 %v525, 127
      %v683 = vpop.permute.xlu0 %682
      %684 = vrot.lane.b32.xlu0 %v524, 127
      %v685 = vpop.permute.xlu0 %684
      %686 = vrot.lane.b32.xlu0 %v523, 127
      %v687 = vpop.permute.xlu0 %686
      %688 = vrot.lane.b32.xlu0 %v522, 127
      %v689 = vpop.permute.xlu0 %688
      %690 = vrot.lane.b32.xlu0 %v521, 127
      %v691 = vpop.permute.xlu0 %690
      %692 = vrot.lane.b32.xlu0 %v520, 127
      %v693 = vpop.permute.xlu0 %692
      %694 = vrot.lane.b32.xlu0 %v519, 127
      %v695 = vpop.permute.xlu0 %694
      %s696 = scalar_lea.vmem %s1, 256
      %v697 = vld [vmem:[%s696] sm:$0xff]
      %v698 = vld [vmem:[%s696 + $0x8] sm:$0xff]
      %v699 = vld [vmem:[%s696 + $0x10] sm:$0xff]
      %v700 = vld [vmem:[%s696 + $0x18] sm:$0xff]
      %v701 = vld [vmem:[%s696 + $0x20] sm:$0xff]
      %v702 = vld [vmem:[%s696 + $0x28] sm:$0xff]
      %v703 = vld [vmem:[%s696 + $0x30] sm:$0xff]
      %v704 = vld [vmem:[%s696 + $0x38] sm:$0xff]
      %v705 = vld [vmem:[%s696 + $0x40] sm:$0xff]
      %v706 = vld [vmem:[%s696 + $0x48] sm:$0xff]
      %v707 = vld [vmem:[%s696 + $0x50] sm:$0xff]
      %v708 = vld [vmem:[%s696 + $0x58] sm:$0xff]
      %v709 = vld [vmem:[%s696 + $0x60] sm:$0xff]
      %v710 = vld [vmem:[%s696 + $0x68] sm:$0xff]
      %v711 = vld [vmem:[%s696 + $0x70] sm:$0xff]
      %v712 = vld [vmem:[%s696 + $0x78] sm:$0xff]
      %v713 = vmul.f32 %v697, %v665
      %v714 = vmul.f32 %v698, %v667
      %v715 = vmul.f32 %v699, %v669
      %v716 = vmul.f32 %v700, %v671
      %v717 = vmul.f32 %v701, %v673
      %v718 = vmul.f32 %v702, %v675
      %v719 = vmul.f32 %v703, %v677
      %v720 = vmul.f32 %v704, %v679
      %v721 = vmul.f32 %v705, %v681
      %v722 = vmul.f32 %v706, %v683
      %v723 = vmul.f32 %v707, %v685
      %v724 = vmul.f32 %v708, %v687
      %v725 = vmul.f32 %v709, %v689
      %v726 = vmul.f32 %v710, %v691
      %v727 = vmul.f32 %v711, %v693
      %v728 = vmul.f32 %v712, %v695
      %v729 = vadd.f32 %v648, %v713
      %v730 = vadd.f32 %v649, %v714
      %v731 = vadd.f32 %v650, %v715
      %v732 = vadd.f32 %v651, %v716
      %v733 = vadd.f32 %v652, %v717
      %v734 = vadd.f32 %v653, %v718
      %v735 = vadd.f32 %v654, %v719
      %v736 = vadd.f32 %v655, %v720
      %v737 = vadd.f32 %v656, %v721
      %v738 = vadd.f32 %v657, %v722
      %v739 = vadd.f32 %v658, %v723
      %v740 = vadd.f32 %v659, %v724
      %v741 = vadd.f32 %v660, %v725
      %v742 = vadd.f32 %v661, %v726
      %v743 = vadd.f32 %v662, %v727
      %v744 = vadd.f32 %v663, %v728
      %745 = vrot.lane.b32.xlu0 %v468, 1
      %v746 = vpop.permute.xlu0 %745
      %747 = vrot.lane.b32.xlu0 %v469, 1
      %v748 = vpop.permute.xlu0 %747
      %749 = vrot.lane.b32.xlu0 %v470, 1
      %v750 = vpop.permute.xlu0 %749
      %751 = vrot.lane.b32.xlu0 %v471, 1
      %v752 = vpop.permute.xlu0 %751
      %753 = vrot.lane.b32.xlu0 %v472, 1
      %v754 = vpop.permute.xlu0 %753
      %755 = vrot.lane.b32.xlu0 %v473, 1
      %v756 = vpop.permute.xlu0 %755
      %757 = vrot.lane.b32.xlu0 %v474, 1
      %v758 = vpop.permute.xlu0 %757
      %759 = vrot.lane.b32.xlu0 %v475, 1
      %v760 = vpop.permute.xlu0 %759
      %761 = vrot.lane.b32.xlu0 %v476, 1
      %v762 = vpop.permute.xlu0 %761
      %763 = vrot.lane.b32.xlu0 %v477, 1
      %v764 = vpop.permute.xlu0 %763
      %765 = vrot.lane.b32.xlu0 %v478, 1
      %v766 = vpop.permute.xlu0 %765
      %767 = vrot.lane.b32.xlu0 %v479, 1
      %v768 = vpop.permute.xlu0 %767
      %769 = vrot.lane.b32.xlu0 %v480, 1
      %v770 = vpop.permute.xlu0 %769
      %771 = vrot.lane.b32.xlu0 %v481, 1
      %v772 = vpop.permute.xlu0 %771
      %773 = vrot.lane.b32.xlu0 %v482, 1
      %v774 = vpop.permute.xlu0 %773
      %775 = vrot.lane.b32.xlu0 %v483, 1
      %v776 = vpop.permute.xlu0 %775
      %s777 = scalar_lea.vmem %s1, 384
      %v778 = vld [vmem:[%s777] sm:$0xff]
      %v779 = vld [vmem:[%s777 + $0x8] sm:$0xff]
      %v780 = vld [vmem:[%s777 + $0x10] sm:$0xff]
      %v781 = vld [vmem:[%s777 + $0x18] sm:$0xff]
      %v782 = vld [vmem:[%s777 + $0x20] sm:$0xff]
      %v783 = vld [vmem:[%s777 + $0x28] sm:$0xff]
      %v784 = vld [vmem:[%s777 + $0x30] sm:$0xff]
      %v785 = vld [vmem:[%s777 + $0x38] sm:$0xff]
      %v786 = vld [vmem:[%s777 + $0x40] sm:$0xff]
      %v787 = vld [vmem:[%s777 + $0x48] sm:$0xff]
      %v788 = vld [vmem:[%s777 + $0x50] sm:$0xff]
      %v789 = vld [vmem:[%s777 + $0x58] sm:$0xff]
      %v790 = vld [vmem:[%s777 + $0x60] sm:$0xff]
      %v791 = vld [vmem:[%s777 + $0x68] sm:$0xff]
      %v792 = vld [vmem:[%s777 + $0x70] sm:$0xff]
      %v793 = vld [vmem:[%s777 + $0x78] sm:$0xff]
      %v794 = vmul.f32 %v778, %v746
      %v795 = vmul.f32 %v779, %v748
      %v796 = vmul.f32 %v780, %v750
      %v797 = vmul.f32 %v781, %v752
      %v798 = vmul.f32 %v782, %v754
      %v799 = vmul.f32 %v783, %v756
      %v800 = vmul.f32 %v784, %v758
      %v801 = vmul.f32 %v785, %v760
      %v802 = vmul.f32 %v786, %v762
      %v803 = vmul.f32 %v787, %v764
      %v804 = vmul.f32 %v788, %v766
      %v805 = vmul.f32 %v789, %v768
      %v806 = vmul.f32 %v790, %v770
      %v807 = vmul.f32 %v791, %v772
      %v808 = vmul.f32 %v792, %v774
      %v809 = vmul.f32 %v793, %v776
      %v810 = vadd.f32 %v729, %v794
      %v811 = vadd.f32 %v730, %v795
      %v812 = vadd.f32 %v731, %v796
      %v813 = vadd.f32 %v732, %v797
      %v814 = vadd.f32 %v733, %v798
      %v815 = vadd.f32 %v734, %v799
      %v816 = vadd.f32 %v735, %v800
      %v817 = vadd.f32 %v736, %v801
      %v818 = vadd.f32 %v737, %v802
      %v819 = vadd.f32 %v738, %v803
      %v820 = vadd.f32 %v739, %v804
      %v821 = vadd.f32 %v740, %v805
      %v822 = vadd.f32 %v741, %v806
      %v823 = vadd.f32 %v742, %v807
      %v824 = vadd.f32 %v743, %v808
      %v825 = vadd.f32 %v744, %v809
      %s826 = scalar_lea.vmem %s1, 512
      %v827 = vld [vmem:[%s826] sm:$0xff]
      %v828 = vld [vmem:[%s826 + $0x8] sm:$0xff]
      %v829 = vld [vmem:[%s826 + $0x10] sm:$0xff]
      %v830 = vld [vmem:[%s826 + $0x18] sm:$0xff]
      %v831 = vld [vmem:[%s826 + $0x20] sm:$0xff]
      %v832 = vld [vmem:[%s826 + $0x28] sm:$0xff]
      %v833 = vld [vmem:[%s826 + $0x30] sm:$0xff]
      %v834 = vld [vmem:[%s826 + $0x38] sm:$0xff]
      %v835 = vld [vmem:[%s826 + $0x40] sm:$0xff]
      %v836 = vld [vmem:[%s826 + $0x48] sm:$0xff]
      %v837 = vld [vmem:[%s826 + $0x50] sm:$0xff]
      %v838 = vld [vmem:[%s826 + $0x58] sm:$0xff]
      %v839 = vld [vmem:[%s826 + $0x60] sm:$0xff]
      %v840 = vld [vmem:[%s826 + $0x68] sm:$0xff]
      %v841 = vld [vmem:[%s826 + $0x70] sm:$0xff]
      %v842 = vld [vmem:[%s826 + $0x78] sm:$0xff]
      %v843 = vmul.f32 %v827, %v468
      %v844 = vmul.f32 %v828, %v469
      %v845 = vmul.f32 %v829, %v470
      %v846 = vmul.f32 %v830, %v471
      %v847 = vmul.f32 %v831, %v472
      %v848 = vmul.f32 %v832, %v473
      %v849 = vmul.f32 %v833, %v474
      %v850 = vmul.f32 %v834, %v475
      %v851 = vmul.f32 %v835, %v476
      %v852 = vmul.f32 %v836, %v477
      %v853 = vmul.f32 %v837, %v478
      %v854 = vmul.f32 %v838, %v479
      %v855 = vmul.f32 %v839, %v480
      %v856 = vmul.f32 %v840, %v481
      %v857 = vmul.f32 %v841, %v482
      %v858 = vmul.f32 %v842, %v483
      %v859 = vadd.f32 %v810, %v843
      %v860 = vadd.f32 %v811, %v844
      %v861 = vadd.f32 %v812, %v845
      %v862 = vadd.f32 %v813, %v846
      %v863 = vadd.f32 %v814, %v847
      %v864 = vadd.f32 %v815, %v848
      %v865 = vadd.f32 %v816, %v849
      %v866 = vadd.f32 %v817, %v850
      %v867 = vadd.f32 %v818, %v851
      %v868 = vadd.f32 %v819, %v852
      %v869 = vadd.f32 %v820, %v853
      %v870 = vadd.f32 %v821, %v854
      %v871 = vadd.f32 %v822, %v855
      %v872 = vadd.f32 %v823, %v856
      %v873 = vadd.f32 %v824, %v857
      %v874 = vadd.f32 %v825, %v858
      %875 = vrot.lane.b32.xlu0 %v468, 127
      %v876 = vpop.permute.xlu0 %875
      %877 = vrot.lane.b32.xlu0 %v469, 127
      %v878 = vpop.permute.xlu0 %877
      %879 = vrot.lane.b32.xlu0 %v470, 127
      %v880 = vpop.permute.xlu0 %879
      %881 = vrot.lane.b32.xlu0 %v471, 127
      %v882 = vpop.permute.xlu0 %881
      %883 = vrot.lane.b32.xlu0 %v472, 127
      %v884 = vpop.permute.xlu0 %883
      %885 = vrot.lane.b32.xlu0 %v473, 127
      %v886 = vpop.permute.xlu0 %885
      %887 = vrot.lane.b32.xlu0 %v474, 127
      %v888 = vpop.permute.xlu0 %887
      %889 = vrot.lane.b32.xlu0 %v475, 127
      %v890 = vpop.permute.xlu0 %889
      %891 = vrot.lane.b32.xlu0 %v476, 127
      %v892 = vpop.permute.xlu0 %891
      %893 = vrot.lane.b32.xlu0 %v477, 127
      %v894 = vpop.permute.xlu0 %893
      %895 = vrot.lane.b32.xlu0 %v478, 127
      %v896 = vpop.permute.xlu0 %895
      %897 = vrot.lane.b32.xlu0 %v479, 127
      %v898 = vpop.permute.xlu0 %897
      %899 = vrot.lane.b32.xlu0 %v480, 127
      %v900 = vpop.permute.xlu0 %899
      %901 = vrot.lane.b32.xlu0 %v481, 127
      %v902 = vpop.permute.xlu0 %901
      %903 = vrot.lane.b32.xlu0 %v482, 127
      %v904 = vpop.permute.xlu0 %903
      %905 = vrot.lane.b32.xlu0 %v483, 127
      %v906 = vpop.permute.xlu0 %905
      %s907 = scalar_lea.vmem %s1, 640
      %v908 = vld [vmem:[%s907] sm:$0xff]
      %v909 = vld [vmem:[%s907 + $0x8] sm:$0xff]
      %v910 = vld [vmem:[%s907 + $0x10] sm:$0xff]
      %v911 = vld [vmem:[%s907 + $0x18] sm:$0xff]
      %v912 = vld [vmem:[%s907 + $0x20] sm:$0xff]
      %v913 = vld [vmem:[%s907 + $0x28] sm:$0xff]
      %v914 = vld [vmem:[%s907 + $0x30] sm:$0xff]
      %v915 = vld [vmem:[%s907 + $0x38] sm:$0xff]
      %v916 = vld [vmem:[%s907 + $0x40] sm:$0xff]
      %v917 = vld [vmem:[%s907 + $0x48] sm:$0xff]
      %v918 = vld [vmem:[%s907 + $0x50] sm:$0xff]
      %v919 = vld [vmem:[%s907 + $0x58] sm:$0xff]
      %v920 = vld [vmem:[%s907 + $0x60] sm:$0xff]
      %v921 = vld [vmem:[%s907 + $0x68] sm:$0xff]
      %v922 = vld [vmem:[%s907 + $0x70] sm:$0xff]
      %v923 = vld [vmem:[%s907 + $0x78] sm:$0xff]
      %v924 = vmul.f32 %v908, %v876
      %v925 = vmul.f32 %v909, %v878
      %v926 = vmul.f32 %v910, %v880
      %v927 = vmul.f32 %v911, %v882
      %v928 = vmul.f32 %v912, %v884
      %v929 = vmul.f32 %v913, %v886
      %v930 = vmul.f32 %v914, %v888
      %v931 = vmul.f32 %v915, %v890
      %v932 = vmul.f32 %v916, %v892
      %v933 = vmul.f32 %v917, %v894
      %v934 = vmul.f32 %v918, %v896
      %v935 = vmul.f32 %v919, %v898
      %v936 = vmul.f32 %v920, %v900
      %v937 = vmul.f32 %v921, %v902
      %v938 = vmul.f32 %v922, %v904
      %v939 = vmul.f32 %v923, %v906
      %v940 = vadd.f32 %v859, %v924
      %v941 = vadd.f32 %v860, %v925
      %v942 = vadd.f32 %v861, %v926
      %v943 = vadd.f32 %v862, %v927
      %v944 = vadd.f32 %v863, %v928
      %v945 = vadd.f32 %v864, %v929
      %v946 = vadd.f32 %v865, %v930
      %v947 = vadd.f32 %v866, %v931
      %v948 = vadd.f32 %v867, %v932
      %v949 = vadd.f32 %v868, %v933
      %v950 = vadd.f32 %v869, %v934
      %v951 = vadd.f32 %v870, %v935
      %v952 = vadd.f32 %v871, %v936
      %v953 = vadd.f32 %v872, %v937
      %v954 = vadd.f32 %v873, %v938
      %v955 = vadd.f32 %v874, %v939
      %v956 = vrot.slane %v468, 1
      %v957 = vrot.slane %v469, 1
      %v958 = vrot.slane %v470, 1
      %v959 = vrot.slane %v471, 1
      %v960 = vrot.slane %v472, 1
      %v961 = vrot.slane %v473, 1
      %v962 = vrot.slane %v474, 1
      %v963 = vrot.slane %v475, 1
      %v964 = vrot.slane %v476, 1
      %v965 = vrot.slane %v477, 1
      %v966 = vrot.slane %v478, 1
      %v967 = vrot.slane %v479, 1
      %v968 = vrot.slane %v480, 1
      %v969 = vrot.slane %v481, 1
      %v970 = vrot.slane %v482, 1
      %v971 = vrot.slane %v483, 1
      %vm972 = vcmp.lt.s32.totalorder %v517, 7
      %v973 = vsel %vm972, %v970, %v971
      %v974 = vsel %vm972, %v969, %v970
      %v975 = vsel %vm972, %v968, %v969
      %v976 = vsel %vm972, %v967, %v968
      %v977 = vsel %vm972, %v966, %v967
      %v978 = vsel %vm972, %v965, %v966
      %v979 = vsel %vm972, %v964, %v965
      %v980 = vsel %vm972, %v963, %v964
      %v981 = vsel %vm972, %v962, %v963
      %v982 = vsel %vm972, %v961, %v962
      %v983 = vsel %vm972, %v960, %v961
      %v984 = vsel %vm972, %v959, %v960
      %v985 = vsel %vm972, %v958, %v959
      %v986 = vsel %vm972, %v957, %v958
      %v987 = vsel %vm972, %v956, %v957
      %v988 = vsel %vm972, %v971, %v956
      %989 = vrot.lane.b32.xlu0 %v987, 1
      %v990 = vpop.permute.xlu0 %989
      %991 = vrot.lane.b32.xlu0 %v986, 1
      %v992 = vpop.permute.xlu0 %991
      %993 = vrot.lane.b32.xlu0 %v985, 1
      %v994 = vpop.permute.xlu0 %993
      %995 = vrot.lane.b32.xlu0 %v984, 1
      %v996 = vpop.permute.xlu0 %995
      %997 = vrot.lane.b32.xlu0 %v983, 1
      %v998 = vpop.permute.xlu0 %997
      %999 = vrot.lane.b32.xlu0 %v982, 1
      %v1000 = vpop.permute.xlu0 %999
      %1001 = vrot.lane.b32.xlu0 %v981, 1
      %v1002 = vpop.permute.xlu0 %1001
      %1003 = vrot.lane.b32.xlu0 %v980, 1
      %v1004 = vpop.permute.xlu0 %1003
      %1005 = vrot.lane.b32.xlu0 %v979, 1
      %v1006 = vpop.permute.xlu0 %1005
      %1007 = vrot.lane.b32.xlu0 %v978, 1
      %v1008 = vpop.permute.xlu0 %1007
      %1009 = vrot.lane.b32.xlu0 %v977, 1
      %v1010 = vpop.permute.xlu0 %1009
      %1011 = vrot.lane.b32.xlu0 %v976, 1
      %v1012 = vpop.permute.xlu0 %1011
      %1013 = vrot.lane.b32.xlu0 %v975, 1
      %v1014 = vpop.permute.xlu0 %1013
      %1015 = vrot.lane.b32.xlu0 %v974, 1
      %v1016 = vpop.permute.xlu0 %1015
      %1017 = vrot.lane.b32.xlu0 %v973, 1
      %v1018 = vpop.permute.xlu0 %1017
      %1019 = vrot.lane.b32.xlu0 %v988, 1
      %v1020 = vpop.permute.xlu0 %1019
      %s1021 = scalar_lea.vmem %s1, 768
      %v1022 = vld [vmem:[%s1021] sm:$0xff]
      %v1023 = vld [vmem:[%s1021 + $0x8] sm:$0xff]
      %v1024 = vld [vmem:[%s1021 + $0x10] sm:$0xff]
      %v1025 = vld [vmem:[%s1021 + $0x18] sm:$0xff]
      %v1026 = vld [vmem:[%s1021 + $0x20] sm:$0xff]
      %v1027 = vld [vmem:[%s1021 + $0x28] sm:$0xff]
      %v1028 = vld [vmem:[%s1021 + $0x30] sm:$0xff]
      %v1029 = vld [vmem:[%s1021 + $0x38] sm:$0xff]
      %v1030 = vld [vmem:[%s1021 + $0x40] sm:$0xff]
      %v1031 = vld [vmem:[%s1021 + $0x48] sm:$0xff]
      %v1032 = vld [vmem:[%s1021 + $0x50] sm:$0xff]
      %v1033 = vld [vmem:[%s1021 + $0x58] sm:$0xff]
      %v1034 = vld [vmem:[%s1021 + $0x60] sm:$0xff]
      %v1035 = vld [vmem:[%s1021 + $0x68] sm:$0xff]
      %v1036 = vld [vmem:[%s1021 + $0x70] sm:$0xff]
      %v1037 = vld [vmem:[%s1021 + $0x78] sm:$0xff]
      %v1038 = vmul.f32 %v1022, %v990
      %v1039 = vmul.f32 %v1023, %v992
      %v1040 = vmul.f32 %v1024, %v994
      %v1041 = vmul.f32 %v1025, %v996
      %v1042 = vmul.f32 %v1026, %v998
      %v1043 = vmul.f32 %v1027, %v1000
      %v1044 = vmul.f32 %v1028, %v1002
      %v1045 = vmul.f32 %v1029, %v1004
      %v1046 = vmul.f32 %v1030, %v1006
      %v1047 = vmul.f32 %v1031, %v1008
      %v1048 = vmul.f32 %v1032, %v1010
      %v1049 = vmul.f32 %v1033, %v1012
      %v1050 = vmul.f32 %v1034, %v1014
      %v1051 = vmul.f32 %v1035, %v1016
      %v1052 = vmul.f32 %v1036, %v1018
      %v1053 = vmul.f32 %v1037, %v1020
      %v1054 = vadd.f32 %v940, %v1038
      %v1055 = vadd.f32 %v941, %v1039
      %v1056 = vadd.f32 %v942, %v1040
      %v1057 = vadd.f32 %v943, %v1041
      %v1058 = vadd.f32 %v944, %v1042
      %v1059 = vadd.f32 %v945, %v1043
      %v1060 = vadd.f32 %v946, %v1044
      %v1061 = vadd.f32 %v947, %v1045
      %v1062 = vadd.f32 %v948, %v1046
      %v1063 = vadd.f32 %v949, %v1047
      %v1064 = vadd.f32 %v950, %v1048
      %v1065 = vadd.f32 %v951, %v1049
      %v1066 = vadd.f32 %v952, %v1050
      %v1067 = vadd.f32 %v953, %v1051
      %v1068 = vadd.f32 %v954, %v1052
      %v1069 = vadd.f32 %v955, %v1053
      %s1070 = scalar_lea.vmem %s1, 896
      %v1071 = vld [vmem:[%s1070] sm:$0xff]
      %v1072 = vld [vmem:[%s1070 + $0x8] sm:$0xff]
      %v1073 = vld [vmem:[%s1070 + $0x10] sm:$0xff]
      %v1074 = vld [vmem:[%s1070 + $0x18] sm:$0xff]
      %v1075 = vld [vmem:[%s1070 + $0x20] sm:$0xff]
      %v1076 = vld [vmem:[%s1070 + $0x28] sm:$0xff]
      %v1077 = vld [vmem:[%s1070 + $0x30] sm:$0xff]
      %v1078 = vld [vmem:[%s1070 + $0x38] sm:$0xff]
      %v1079 = vld [vmem:[%s1070 + $0x40] sm:$0xff]
      %v1080 = vld [vmem:[%s1070 + $0x48] sm:$0xff]
      %v1081 = vld [vmem:[%s1070 + $0x50] sm:$0xff]
      %v1082 = vld [vmem:[%s1070 + $0x58] sm:$0xff]
      %v1083 = vld [vmem:[%s1070 + $0x60] sm:$0xff]
      %v1084 = vld [vmem:[%s1070 + $0x68] sm:$0xff]
      %v1085 = vld [vmem:[%s1070 + $0x70] sm:$0xff]
      %v1086 = vld [vmem:[%s1070 + $0x78] sm:$0xff]
      %v1087 = vmul.f32 %v1071, %v987
      %v1088 = vmul.f32 %v1072, %v986
      %v1089 = vmul.f32 %v1073, %v985
      %v1090 = vmul.f32 %v1074, %v984
      %v1091 = vmul.f32 %v1075, %v983
      %v1092 = vmul.f32 %v1076, %v982
      %v1093 = vmul.f32 %v1077, %v981
      %v1094 = vmul.f32 %v1078, %v980
      %v1095 = vmul.f32 %v1079, %v979
      %v1096 = vmul.f32 %v1080, %v978
      %v1097 = vmul.f32 %v1081, %v977
      %v1098 = vmul.f32 %v1082, %v976
      %v1099 = vmul.f32 %v1083, %v975
      %v1100 = vmul.f32 %v1084, %v974
      %v1101 = vmul.f32 %v1085, %v973
      %v1102 = vmul.f32 %v1086, %v988
      %v1103 = vadd.f32 %v1054, %v1087
      %v1104 = vadd.f32 %v1055, %v1088
      %v1105 = vadd.f32 %v1056, %v1089
      %v1106 = vadd.f32 %v1057, %v1090
      %v1107 = vadd.f32 %v1058, %v1091
      %v1108 = vadd.f32 %v1059, %v1092
      %v1109 = vadd.f32 %v1060, %v1093
      %v1110 = vadd.f32 %v1061, %v1094
      %v1111 = vadd.f32 %v1062, %v1095
      %v1112 = vadd.f32 %v1063, %v1096
      %v1113 = vadd.f32 %v1064, %v1097
      %v1114 = vadd.f32 %v1065, %v1098
      %v1115 = vadd.f32 %v1066, %v1099
      %v1116 = vadd.f32 %v1067, %v1100
      %v1117 = vadd.f32 %v1068, %v1101
      %v1118 = vadd.f32 %v1069, %v1102
      %1119 = vrot.lane.b32.xlu0 %v987, 127
      %v1120 = vpop.permute.xlu0 %1119
      %1121 = vrot.lane.b32.xlu0 %v986, 127
      %v1122 = vpop.permute.xlu0 %1121
      %1123 = vrot.lane.b32.xlu0 %v985, 127
      %v1124 = vpop.permute.xlu0 %1123
      %1125 = vrot.lane.b32.xlu0 %v984, 127
      %v1126 = vpop.permute.xlu0 %1125
      %1127 = vrot.lane.b32.xlu0 %v983, 127
      %v1128 = vpop.permute.xlu0 %1127
      %1129 = vrot.lane.b32.xlu0 %v982, 127
      %v1130 = vpop.permute.xlu0 %1129
      %1131 = vrot.lane.b32.xlu0 %v981, 127
      %v1132 = vpop.permute.xlu0 %1131
      %1133 = vrot.lane.b32.xlu0 %v980, 127
      %v1134 = vpop.permute.xlu0 %1133
      %1135 = vrot.lane.b32.xlu0 %v979, 127
      %v1136 = vpop.permute.xlu0 %1135
      %1137 = vrot.lane.b32.xlu0 %v978, 127
      %v1138 = vpop.permute.xlu0 %1137
      %1139 = vrot.lane.b32.xlu0 %v977, 127
      %v1140 = vpop.permute.xlu0 %1139
      %1141 = vrot.lane.b32.xlu0 %v976, 127
      %v1142 = vpop.permute.xlu0 %1141
      %1143 = vrot.lane.b32.xlu0 %v975, 127
      %v1144 = vpop.permute.xlu0 %1143
      %1145 = vrot.lane.b32.xlu0 %v974, 127
      %v1146 = vpop.permute.xlu0 %1145
      %1147 = vrot.lane.b32.xlu0 %v973, 127
      %v1148 = vpop.permute.xlu0 %1147
      %1149 = vrot.lane.b32.xlu0 %v988, 127
      %v1150 = vpop.permute.xlu0 %1149
      %s1151 = scalar_lea.vmem %s1, 1024
      %v1152 = vld [vmem:[%s1151] sm:$0xff]
      %v1153 = vld [vmem:[%s1151 + $0x8] sm:$0xff]
      %v1154 = vld [vmem:[%s1151 + $0x10] sm:$0xff]
      %v1155 = vld [vmem:[%s1151 + $0x18] sm:$0xff]
      %v1156 = vld [vmem:[%s1151 + $0x20] sm:$0xff]
      %v1157 = vld [vmem:[%s1151 + $0x28] sm:$0xff]
      %v1158 = vld [vmem:[%s1151 + $0x30] sm:$0xff]
      %v1159 = vld [vmem:[%s1151 + $0x38] sm:$0xff]
      %v1160 = vld [vmem:[%s1151 + $0x40] sm:$0xff]
      %v1161 = vld [vmem:[%s1151 + $0x48] sm:$0xff]
      %v1162 = vld [vmem:[%s1151 + $0x50] sm:$0xff]
      %v1163 = vld [vmem:[%s1151 + $0x58] sm:$0xff]
      %v1164 = vld [vmem:[%s1151 + $0x60] sm:$0xff]
      %v1165 = vld [vmem:[%s1151 + $0x68] sm:$0xff]
      %v1166 = vld [vmem:[%s1151 + $0x70] sm:$0xff]
      %v1167 = vld [vmem:[%s1151 + $0x78] sm:$0xff]
      %v1168 = vmul.f32 %v1152, %v1120
      %v1169 = vmul.f32 %v1153, %v1122
      %v1170 = vmul.f32 %v1154, %v1124
      %v1171 = vmul.f32 %v1155, %v1126
      %v1172 = vmul.f32 %v1156, %v1128
      %v1173 = vmul.f32 %v1157, %v1130
      %v1174 = vmul.f32 %v1158, %v1132
      %v1175 = vmul.f32 %v1159, %v1134
      %v1176 = vmul.f32 %v1160, %v1136
      %v1177 = vmul.f32 %v1161, %v1138
      %v1178 = vmul.f32 %v1162, %v1140
      %v1179 = vmul.f32 %v1163, %v1142
      %v1180 = vmul.f32 %v1164, %v1144
      %v1181 = vmul.f32 %v1165, %v1146
      %v1182 = vmul.f32 %v1166, %v1148
      %v1183 = vmul.f32 %v1167, %v1150
      %v1184 = vadd.f32 %v1103, %v1168
      %v1185 = vadd.f32 %v1104, %v1169
      %v1186 = vadd.f32 %v1105, %v1170
      %v1187 = vadd.f32 %v1106, %v1171
      %v1188 = vadd.f32 %v1107, %v1172
      %v1189 = vadd.f32 %v1108, %v1173
      %v1190 = vadd.f32 %v1109, %v1174
      %v1191 = vadd.f32 %v1110, %v1175
      %v1192 = vadd.f32 %v1111, %v1176
      %v1193 = vadd.f32 %v1112, %v1177
      %v1194 = vadd.f32 %v1113, %v1178
      %v1195 = vadd.f32 %v1114, %v1179
      %v1196 = vadd.f32 %v1115, %v1180
      %v1197 = vadd.f32 %v1116, %v1181
      %v1198 = vadd.f32 %v1117, %v1182
      %v1199 = vadd.f32 %v1118, %v1183
      %v1200 = vmax.f32 %v1184, 0.0
      %v1201 = vmax.f32 %v1185, 0.0
      %v1202 = vmax.f32 %v1186, 0.0
      %v1203 = vmax.f32 %v1187, 0.0
      %v1204 = vmax.f32 %v1188, 0.0
      %v1205 = vmax.f32 %v1189, 0.0
      %v1206 = vmax.f32 %v1190, 0.0
      %v1207 = vmax.f32 %v1191, 0.0
      %v1208 = vmax.f32 %v1192, 0.0
      %v1209 = vmax.f32 %v1193, 0.0
      %v1210 = vmax.f32 %v1194, 0.0
      %v1211 = vmax.f32 %v1195, 0.0
      %v1212 = vmax.f32 %v1196, 0.0
      %v1213 = vmax.f32 %v1197, 0.0
      %v1214 = vmax.f32 %v1198, 0.0
      %v1215 = vmax.f32 %v1199, 0.0
      %v1216 = vadd.s32 %v517, 8
      %v1217 = vadd.s32 %v517, 16
      %v1218 = vadd.s32 %v517, 24
      %v1219 = vadd.s32 %v517, 32
      %v1220 = vadd.s32 %v517, 40
      %v1221 = vadd.s32 %v517, 48
      %v1222 = vadd.s32 %v517, 56
      %v1223 = vadd.s32 %v517, 64
      %v1224 = vadd.s32 %v517, 72
      %v1225 = vadd.s32 %v517, 80
      %v1226 = vadd.s32 %v517, 88
      %v1227 = vadd.s32 %v517, 96
      %v1228 = vadd.s32 %v517, 104
      %v1229 = vadd.s32 %v517, 112
      %v1230 = vadd.s32 %v517, 120
      %vm1231 = vcmp.lt.s32.totalorder %v517, 0
      %v1232 = vsub.s32 0, %v517
      %v1233 = vsel %vm1231, %v1232, %v517
      %v1234 = vshrl.u32 %v1233, 4
      %v1235 = vand.u32 %v1233, 15
      %v1236 = vsub.s32 0, %v1235
      %v1237 = vsel %vm1231, %v1236, %v1235
      %vm1238 = vcmp.lt.s32.totalorder %v1216, 0
      %v1239 = vsub.s32 0, %v1216
      %v1240 = vsel %vm1238, %v1239, %v1216
      %v1241 = vshrl.u32 %v1240, 4
      %v1242 = vand.u32 %v1240, 15
      %v1243 = vsub.s32 0, %v1242
      %v1244 = vsel %vm1238, %v1243, %v1242
      %vm1245 = vcmp.lt.s32.totalorder %v1217, 0
      %v1246 = vsub.s32 0, %v1217
      %v1247 = vsel %vm1245, %v1246, %v1217
      %v1248 = vshrl.u32 %v1247, 4
      %v1249 = vand.u32 %v1247, 15
      %v1250 = vsub.s32 0, %v1249
      %v1251 = vsel %vm1245, %v1250, %v1249
      %vm1252 = vcmp.lt.s32.totalorder %v1218, 0
      %v1253 = vsub.s32 0, %v1218
      %v1254 = vsel %vm1252, %v1253, %v1218
      %v1255 = vshrl.u32 %v1254, 4
      %v1256 = vand.u32 %v1254, 15
      %v1257 = vsub.s32 0, %v1256
      %v1258 = vsel %vm1252, %v1257, %v1256
      %vm1259 = vcmp.lt.s32.totalorder %v1219, 0
      %v1260 = vsub.s32 0, %v1219
      %v1261 = vsel %vm1259, %v1260, %v1219
      %v1262 = vshrl.u32 %v1261, 4
      %v1263 = vand.u32 %v1261, 15
      %v1264 = vsub.s32 0, %v1263
      %v1265 = vsel %vm1259, %v1264, %v1263
      %vm1266 = vcmp.lt.s32.totalorder %v1220, 0
      %v1267 = vsub.s32 0, %v1220
      %v1268 = vsel %vm1266, %v1267, %v1220
      %v1269 = vshrl.u32 %v1268, 4
      %v1270 = vand.u32 %v1268, 15
      %v1271 = vsub.s32 0, %v1270
      %v1272 = vsel %vm1266, %v1271, %v1270
      %vm1273 = vcmp.lt.s32.totalorder %v1221, 0
      %v1274 = vsub.s32 0, %v1221
      %v1275 = vsel %vm1273, %v1274, %v1221
      %v1276 = vshrl.u32 %v1275, 4
      %v1277 = vand.u32 %v1275, 15
      %v1278 = vsub.s32 0, %v1277
      %v1279 = vsel %vm1273, %v1278, %v1277
      %vm1280 = vcmp.lt.s32.totalorder %v1222, 0
      %v1281 = vsub.s32 0, %v1222
      %v1282 = vsel %vm1280, %v1281, %v1222
      %v1283 = vshrl.u32 %v1282, 4
      %v1284 = vand.u32 %v1282, 15
      %v1285 = vsub.s32 0, %v1284
      %v1286 = vsel %vm1280, %v1285, %v1284
      %vm1287 = vcmp.lt.s32.totalorder %v1223, 0
      %v1288 = vsub.s32 0, %v1223
      %v1289 = vsel %vm1287, %v1288, %v1223
      %v1290 = vshrl.u32 %v1289, 4
      %v1291 = vand.u32 %v1289, 15
      %v1292 = vsub.s32 0, %v1291
      %v1293 = vsel %vm1287, %v1292, %v1291
      %vm1294 = vcmp.lt.s32.totalorder %v1224, 0
      %v1295 = vsub.s32 0, %v1224
      %v1296 = vsel %vm1294, %v1295, %v1224
      %v1297 = vshrl.u32 %v1296, 4
      %v1298 = vand.u32 %v1296, 15
      %v1299 = vsub.s32 0, %v1298
      %v1300 = vsel %vm1294, %v1299, %v1298
      %vm1301 = vcmp.lt.s32.totalorder %v1225, 0
      %v1302 = vsub.s32 0, %v1225
      %v1303 = vsel %vm1301, %v1302, %v1225
      %v1304 = vshrl.u32 %v1303, 4
      %v1305 = vand.u32 %v1303, 15
      %v1306 = vsub.s32 0, %v1305
      %v1307 = vsel %vm1301, %v1306, %v1305
      %vm1308 = vcmp.lt.s32.totalorder %v1226, 0
      %v1309 = vsub.s32 0, %v1226
      %v1310 = vsel %vm1308, %v1309, %v1226
      %v1311 = vshrl.u32 %v1310, 4
      %v1312 = vand.u32 %v1310, 15
      %v1313 = vsub.s32 0, %v1312
      %v1314 = vsel %vm1308, %v1313, %v1312
      %vm1315 = vcmp.lt.s32.totalorder %v1227, 0
      %v1316 = vsub.s32 0, %v1227
      %v1317 = vsel %vm1315, %v1316, %v1227
      %v1318 = vshrl.u32 %v1317, 4
      %v1319 = vand.u32 %v1317, 15
      %v1320 = vsub.s32 0, %v1319
      %v1321 = vsel %vm1315, %v1320, %v1319
      %vm1322 = vcmp.lt.s32.totalorder %v1228, 0
      %v1323 = vsub.s32 0, %v1228
      %v1324 = vsel %vm1322, %v1323, %v1228
      %v1325 = vshrl.u32 %v1324, 4
      %v1326 = vand.u32 %v1324, 15
      %v1327 = vsub.s32 0, %v1326
      %v1328 = vsel %vm1322, %v1327, %v1326
      %vm1329 = vcmp.lt.s32.totalorder %v1229, 0
      %v1330 = vsub.s32 0, %v1229
      %v1331 = vsel %vm1329, %v1330, %v1229
      %v1332 = vshrl.u32 %v1331, 4
      %v1333 = vand.u32 %v1331, 15
      %v1334 = vsub.s32 0, %v1333
      %v1335 = vsel %vm1329, %v1334, %v1333
      %vm1336 = vcmp.lt.s32.totalorder %v1230, 0
      %v1337 = vsub.s32 0, %v1230
      %v1338 = vsel %vm1336, %v1337, %v1230
      %v1339 = vshrl.u32 %v1338, 4
      %v1340 = vand.u32 %v1338, 15
      %v1341 = vsub.s32 0, %v1340
      %v1342 = vsel %vm1336, %v1341, %v1340
      %vm1343 = vcmp.ne.s32.totalorder %v1237, 0
      %vm1344 = vcmp.ne.s32.totalorder %v1244, 0
      %vm1345 = vcmp.ne.s32.totalorder %v1251, 0
      %vm1346 = vcmp.ne.s32.totalorder %v1258, 0
      %vm1347 = vcmp.ne.s32.totalorder %v1265, 0
      %vm1348 = vcmp.ne.s32.totalorder %v1272, 0
      %vm1349 = vcmp.ne.s32.totalorder %v1279, 0
      %vm1350 = vcmp.ne.s32.totalorder %v1286, 0
      %vm1351 = vcmp.ne.s32.totalorder %v1293, 0
      %vm1352 = vcmp.ne.s32.totalorder %v1300, 0
      %vm1353 = vcmp.ne.s32.totalorder %v1307, 0
      %vm1354 = vcmp.ne.s32.totalorder %v1314, 0
      %vm1355 = vcmp.ne.s32.totalorder %v1321, 0
      %vm1356 = vcmp.ne.s32.totalorder %v1328, 0
      %vm1357 = vcmp.ne.s32.totalorder %v1335, 0
      %vm1358 = vcmp.ne.s32.totalorder %v1342, 0
      %vm1359 = vcmp.lt.s32.totalorder %v1237, 0
      %vm1360 = vcmp.lt.s32.totalorder %v1244, 0
      %vm1361 = vcmp.lt.s32.totalorder %v1251, 0
      %vm1362 = vcmp.lt.s32.totalorder %v1258, 0
      %vm1363 = vcmp.lt.s32.totalorder %v1265, 0
      %vm1364 = vcmp.lt.s32.totalorder %v1272, 0
      %vm1365 = vcmp.lt.s32.totalorder %v1279, 0
      %vm1366 = vcmp.lt.s32.totalorder %v1286, 0
      %vm1367 = vcmp.lt.s32.totalorder %v1293, 0
      %vm1368 = vcmp.lt.s32.totalorder %v1300, 0
      %vm1369 = vcmp.lt.s32.totalorder %v1307, 0
      %vm1370 = vcmp.lt.s32.totalorder %v1314, 0
      %vm1371 = vcmp.lt.s32.totalorder %v1321, 0
      %vm1372 = vcmp.lt.s32.totalorder %v1328, 0
      %vm1373 = vcmp.lt.s32.totalorder %v1335, 0
      %vm1374 = vcmp.lt.s32.totalorder %v1342, 0
      %vm1375 = vmand %vm1359, %vm1343
      %vm1376 = vmand %vm1360, %vm1344
      %vm1377 = vmand %vm1361, %vm1345
      %vm1378 = vmand %vm1362, %vm1346
      %vm1379 = vmand %vm1363, %vm1347
      %vm1380 = vmand %vm1364, %vm1348
      %vm1381 = vmand %vm1365, %vm1349
      %vm1382 = vmand %vm1366, %vm1350
      %vm1383 = vmand %vm1367, %vm1351
      %vm1384 = vmand %vm1368, %vm1352
      %vm1385 = vmand %vm1369, %vm1353
      %vm1386 = vmand %vm1370, %vm1354
      %vm1387 = vmand %vm1371, %vm1355
      %vm1388 = vmand %vm1372, %vm1356
      %vm1389 = vmand %vm1373, %vm1357
      %vm1390 = vmand %vm1374, %vm1358
      %v1391 = vadd.s32 %v1237, 16
      %v1392 = vadd.s32 %v1244, 16
      %v1393 = vadd.s32 %v1251, 16
      %v1394 = vadd.s32 %v1258, 16
      %v1395 = vadd.s32 %v1265, 16
      %v1396 = vadd.s32 %v1272, 16
      %v1397 = vadd.s32 %v1279, 16
      %v1398 = vadd.s32 %v1286, 16
      %v1399 = vadd.s32 %v1293, 16
      %v1400 = vadd.s32 %v1300, 16
      %v1401 = vadd.s32 %v1307, 16
      %v1402 = vadd.s32 %v1314, 16
      %v1403 = vadd.s32 %v1321, 16
      %v1404 = vadd.s32 %v1328, 16
      %v1405 = vadd.s32 %v1335, 16
      %v1406 = vadd.s32 %v1342, 16
      %v1407 = vsel %vm1375, %v1391, %v1237
      %v1408 = vsel %vm1376, %v1392, %v1244
      %v1409 = vsel %vm1377, %v1393, %v1251
      %v1410 = vsel %vm1378, %v1394, %v1258
      %v1411 = vsel %vm1379, %v1395, %v1265
      %v1412 = vsel %vm1380, %v1396, %v1272
      %v1413 = vsel %vm1381, %v1397, %v1279
      %v1414 = vsel %vm1382, %v1398, %v1286
      %v1415 = vsel %vm1383, %v1399, %v1293
      %v1416 = vsel %vm1384, %v1400, %v1300
      %v1417 = vsel %vm1385, %v1401, %v1307
      %v1418 = vsel %vm1386, %v1402, %v1314
      %v1419 = vsel %vm1387, %v1403, %v1321
      %v1420 = vsel %vm1388, %v1404, %v1328
      %v1421 = vsel %vm1389, %v1405, %v1335
      %v1422 = vsel %vm1390, %v1406, %v1342
      %vm1423 = vcmp.eq.s32.totalorder %v1407, 0
      %vm1424 = vcmp.eq.s32.totalorder %v1408, 0
      %vm1425 = vcmp.eq.s32.totalorder %v1409, 0
      %vm1426 = vcmp.eq.s32.totalorder %v1410, 0
      %vm1427 = vcmp.eq.s32.totalorder %v1411, 0
      %vm1428 = vcmp.eq.s32.totalorder %v1412, 0
      %vm1429 = vcmp.eq.s32.totalorder %v1413, 0
      %vm1430 = vcmp.eq.s32.totalorder %v1414, 0
      %vm1431 = vcmp.eq.s32.totalorder %v1415, 0
      %vm1432 = vcmp.eq.s32.totalorder %v1416, 0
      %vm1433 = vcmp.eq.s32.totalorder %v1417, 0
      %vm1434 = vcmp.eq.s32.totalorder %v1418, 0
      %vm1435 = vcmp.eq.s32.totalorder %v1419, 0
      %vm1436 = vcmp.eq.s32.totalorder %v1420, 0
      %vm1437 = vcmp.eq.s32.totalorder %v1421, 0
      %vm1438 = vcmp.eq.s32.totalorder %v1422, 0
      %v1439 = vrot.slane %v1200, 7
      %v1440 = vrot.slane %v1201, 7
      %v1441 = vrot.slane %v1202, 7
      %v1442 = vrot.slane %v1203, 7
      %v1443 = vrot.slane %v1204, 7
      %v1444 = vrot.slane %v1205, 7
      %v1445 = vrot.slane %v1206, 7
      %v1446 = vrot.slane %v1207, 7
      %v1447 = vrot.slane %v1208, 7
      %v1448 = vrot.slane %v1209, 7
      %v1449 = vrot.slane %v1210, 7
      %v1450 = vrot.slane %v1211, 7
      %v1451 = vrot.slane %v1212, 7
      %v1452 = vrot.slane %v1213, 7
      %v1453 = vrot.slane %v1214, 7
      %v1454 = vrot.slane %v1215, 7
      %v1455 = vsel %vm518, %v1453, %v1454
      %v1456 = vsel %vm518, %v1452, %v1453
      %v1457 = vsel %vm518, %v1451, %v1452
      %v1458 = vsel %vm518, %v1450, %v1451
      %v1459 = vsel %vm518, %v1449, %v1450
      %v1460 = vsel %vm518, %v1448, %v1449
      %v1461 = vsel %vm518, %v1447, %v1448
      %v1462 = vsel %vm518, %v1446, %v1447
      %v1463 = vsel %vm518, %v1445, %v1446
      %v1464 = vsel %vm518, %v1444, %v1445
      %v1465 = vsel %vm518, %v1443, %v1444
      %v1466 = vsel %vm518, %v1442, %v1443
      %v1467 = vsel %vm518, %v1441, %v1442
      %v1468 = vsel %vm518, %v1440, %v1441
      %v1469 = vsel %vm518, %v1439, %v1440
      %v1470 = vsel %vm518, %v1454, %v1439
      %v1471 = vsel %vm1423, -inf, %v1470
      %v1472 = vsel %vm1424, -inf, %v1469
      %v1473 = vsel %vm1425, -inf, %v1468
      %v1474 = vsel %vm1426, -inf, %v1467
      %v1475 = vsel %vm1427, -inf, %v1466
      %v1476 = vsel %vm1428, -inf, %v1465
      %v1477 = vsel %vm1429, -inf, %v1464
      %v1478 = vsel %vm1430, -inf, %v1463
      %v1479 = vsel %vm1431, -inf, %v1462
      %v1480 = vsel %vm1432, -inf, %v1461
      %v1481 = vsel %vm1433, -inf, %v1460
      %v1482 = vsel %vm1434, -inf, %v1459
      %v1483 = vsel %vm1435, -inf, %v1458
      %v1484 = vsel %vm1436, -inf, %v1457
      %v1485 = vsel %vm1437, -inf, %v1456
      %v1486 = vsel %vm1438, -inf, %v1455
      %vm1487 = vcmp.eq.s32.totalorder %v1407, 15
      %vm1488 = vcmp.eq.s32.totalorder %v1408, 15
      %vm1489 = vcmp.eq.s32.totalorder %v1409, 15
      %vm1490 = vcmp.eq.s32.totalorder %v1410, 15
      %vm1491 = vcmp.eq.s32.totalorder %v1411, 15
      %vm1492 = vcmp.eq.s32.totalorder %v1412, 15
      %vm1493 = vcmp.eq.s32.totalorder %v1413, 15
      %vm1494 = vcmp.eq.s32.totalorder %v1414, 15
      %vm1495 = vcmp.eq.s32.totalorder %v1415, 15
      %vm1496 = vcmp.eq.s32.totalorder %v1416, 15
      %vm1497 = vcmp.eq.s32.totalorder %v1417, 15
      %vm1498 = vcmp.eq.s32.totalorder %v1418, 15
      %vm1499 = vcmp.eq.s32.totalorder %v1419, 15
      %vm1500 = vcmp.eq.s32.totalorder %v1420, 15
      %vm1501 = vcmp.eq.s32.totalorder %v1421, 15
      %vm1502 = vcmp.eq.s32.totalorder %v1422, 15
      %v1503 = vrot.slane %v1200, 1
      %v1504 = vrot.slane %v1201, 1
      %v1505 = vrot.slane %v1202, 1
      %v1506 = vrot.slane %v1203, 1
      %v1507 = vrot.slane %v1204, 1
      %v1508 = vrot.slane %v1205, 1
      %v1509 = vrot.slane %v1206, 1
      %v1510 = vrot.slane %v1207, 1
      %v1511 = vrot.slane %v1208, 1
      %v1512 = vrot.slane %v1209, 1
      %v1513 = vrot.slane %v1210, 1
      %v1514 = vrot.slane %v1211, 1
      %v1515 = vrot.slane %v1212, 1
      %v1516 = vrot.slane %v1213, 1
      %v1517 = vrot.slane %v1214, 1
      %v1518 = vrot.slane %v1215, 1
      %v1519 = vsel %vm972, %v1517, %v1518
      %v1520 = vsel %vm972, %v1516, %v1517
      %v1521 = vsel %vm972, %v1515, %v1516
      %v1522 = vsel %vm972, %v1514, %v1515
      %v1523 = vsel %vm972, %v1513, %v1514
      %v1524 = vsel %vm972, %v1512, %v1513
      %v1525 = vsel %vm972, %v1511, %v1512
      %v1526 = vsel %vm972, %v1510, %v1511
      %v1527 = vsel %vm972, %v1509, %v1510
      %v1528 = vsel %vm972, %v1508, %v1509
      %v1529 = vsel %vm972, %v1507, %v1508
      %v1530 = vsel %vm972, %v1506, %v1507
      %v1531 = vsel %vm972, %v1505, %v1506
      %v1532 = vsel %vm972, %v1504, %v1505
      %v1533 = vsel %vm972, %v1503, %v1504
      %v1534 = vsel %vm972, %v1518, %v1503
      %v1535 = vsel %vm1487, -inf, %v1533
      %v1536 = vsel %vm1488, -inf, %v1532
      %v1537 = vsel %vm1489, -inf, %v1531
      %v1538 = vsel %vm1490, -inf, %v1530
      %v1539 = vsel %vm1491, -inf, %v1529
      %v1540 = vsel %vm1492, -inf, %v1528
      %v1541 = vsel %vm1493, -inf, %v1527
      %v1542 = vsel %vm1494, -inf, %v1526
      %v1543 = vsel %vm1495, -inf, %v1525
      %v1544 = vsel %vm1496, -inf, %v1524
      %v1545 = vsel %vm1497, -inf, %v1523
      %v1546 = vsel %vm1498, -inf, %v1522
      %v1547 = vsel %vm1499, -inf, %v1521
      %v1548 = vsel %vm1500, -inf, %v1520
      %v1549 = vsel %vm1501, -inf, %v1519
      %v1550 = vsel %vm1502, -inf, %v1534
      %v1551 = vmax.f32 %v1200, %v1471
      %v1552 = vmax.f32 %v1201, %v1472
      %v1553 = vmax.f32 %v1202, %v1473
      %v1554 = vmax.f32 %v1203, %v1474
      %v1555 = vmax.f32 %v1204, %v1475
      %v1556 = vmax.f32 %v1205, %v1476
      %v1557 = vmax.f32 %v1206, %v1477
      %v1558 = vmax.f32 %v1207, %v1478
      %v1559 = vmax.f32 %v1208, %v1479
      %v1560 = vmax.f32 %v1209, %v1480
      %v1561 = vmax.f32 %v1210, %v1481
      %v1562 = vmax.f32 %v1211, %v1482
      %v1563 = vmax.f32 %v1212, %v1483
      %v1564 = vmax.f32 %v1213, %v1484
      %v1565 = vmax.f32 %v1214, %v1485
      %v1566 = vmax.f32 %v1215, %v1486
      %v1567 = vmax.f32 %v1551, %v1535
      %v1568 = vmax.f32 %v1552, %v1536
      %v1569 = vmax.f32 %v1553, %v1537
      %v1570 = vmax.f32 %v1554, %v1538
      %v1571 = vmax.f32 %v1555, %v1539
      %v1572 = vmax.f32 %v1556, %v1540
      %v1573 = vmax.f32 %v1557, %v1541
      %v1574 = vmax.f32 %v1558, %v1542
      %v1575 = vmax.f32 %v1559, %v1543
      %v1576 = vmax.f32 %v1560, %v1544
      %v1577 = vmax.f32 %v1561, %v1545
      %v1578 = vmax.f32 %v1562, %v1546
      %v1579 = vmax.f32 %v1563, %v1547
      %v1580 = vmax.f32 %v1564, %v1548
      %v1581 = vmax.f32 %v1565, %v1549
      %v1582 = vmax.f32 %v1566, %v1550
      %v1583 = vld [vmem:[%s5] sm:$0xff]
      %v1584 = vld [vmem:[%s5 + $0x8] sm:$0xff]
      %v1585 = vld [vmem:[%s5 + $0x10] sm:$0xff]
      %v1586 = vld [vmem:[%s5 + $0x18] sm:$0xff]
      %v1587 = vld [vmem:[%s5 + $0x20] sm:$0xff]
      %v1588 = vld [vmem:[%s5 + $0x28] sm:$0xff]
      %v1589 = vld [vmem:[%s5 + $0x30] sm:$0xff]
      %v1590 = vld [vmem:[%s5 + $0x38] sm:$0xff]
      %1591 = vmatprep.subr.mxu0 0.0
      %1592 = vmatpush1.msra.mxu0 %v1567
      %1593 = vmatprep.subr.mxu0 0.0
      %1594 = vmatpush1.msra.mxu0 %v1568
      %1595 = vmatprep.subr.mxu0 0.0
      %1596 = vmatpush1.msra.mxu0 %v1569
      %1597 = vmatprep.subr.mxu0 0.0
      %1598 = vmatpush1.msra.mxu0 %v1570
      %1599 = vmatprep.subr.mxu0 0.0
      %1600 = vmatpush1.msra.mxu0 %v1571
      %1601 = vmatprep.subr.mxu0 0.0
      %1602 = vmatpush1.msra.mxu0 %v1572
      %1603 = vmatprep.subr.mxu0 0.0
      %1604 = vmatpush1.msra.mxu0 %v1573
      %1605 = vmatprep.subr.mxu0 0.0
      %1606 = vmatpush1.msra.mxu0 %v1574
      %1607 = vmatprep.subr.mxu0 0.0
      %1608 = vmatpush1.msra.mxu0 %v1575
      %1609 = vmatprep.subr.mxu0 0.0
      %1610 = vmatpush1.msra.mxu0 %v1576
      %1611 = vmatprep.subr.mxu0 0.0
      %1612 = vmatpush1.msra.mxu0 %v1577
      %1613 = vmatprep.subr.mxu0 0.0
      %1614 = vmatpush1.msra.mxu0 %v1578
      %1615 = vmatprep.subr.mxu0 0.0
      %1616 = vmatpush1.msra.mxu0 %v1579
      %1617 = vmatprep.subr.mxu0 0.0
      %1618 = vmatpush1.msra.mxu0 %v1580
      %1619 = vmatprep.subr.mxu0 0.0
      %1620 = vmatpush1.msra.mxu0 %v1581
      %1621 = vmatprep.subr.mxu0 0.0
      %1622 = vmatpush1.msra.mxu0 %v1582
      %1623 = vmatprep.subr.mxu0 0.0
      %1624 = vmatpush1.msra.mxu0 0.0
      %1625 = vmatprep.subr.mxu0 0.0
      %1626 = vmatpush1.msra.mxu0 0.0
      %1627 = vmatprep.subr.mxu0 0.0
      %1628 = vmatpush1.msra.mxu0 0.0
      %1629 = vmatprep.subr.mxu0 0.0
      %1630 = vmatpush1.msra.mxu0 0.0
      %1631 = vmatprep.subr.mxu0 0.0
      %1632 = vmatpush1.msra.mxu0 0.0
      %1633 = vmatprep.subr.mxu0 0.0
      %1634 = vmatpush1.msra.mxu0 0.0
      %1635 = vmatprep.subr.mxu0 0.0
      %1636 = vmatpush1.msra.mxu0 0.0
      %1637 = vmatprep.subr.mxu0 0.0
      %1638 = vmatpush1.msra.mxu0 0.0
      %1639 = vmatprep.subr.mxu0 0.0
      %1640 = vmatpush1.msra.mxu0 0.0
      %1641 = vmatprep.subr.mxu0 0.0
      %1642 = vmatpush1.msra.mxu0 0.0
      %1643 = vmatprep.subr.mxu0 0.0
      %1644 = vmatpush1.msra.mxu0 0.0
      %1645 = vmatprep.subr.mxu0 0.0
      %1646 = vmatpush1.msra.mxu0 0.0
      %1647 = vmatprep.subr.mxu0 0.0
      %1648 = vmatpush1.msra.mxu0 0.0
      %1649 = vmatprep.subr.mxu0 0.0
      %1650 = vmatpush1.msra.mxu0 0.0
      %1651 = vmatprep.subr.mxu0 0.0
      %1652 = vmatpush1.msra.mxu0 0.0
      %1653 = vmatprep.subr.mxu0 0.0
      %1654 = vmatpush1.msra.mxu0 0.0
      %1655 = vmatprep.mubr.f32.mxu0 0.0
      %1656 = vmatmul.mubr.f32.gmra.mrb[0].mxu0 %v1583
      %v1657 = vpop.f32.mrb[0].mxu0
      %v1658 = vadd.f32 0.0, %v1657
      %v1659 = vpop.f32.mrb[0].mxu0
      %1660 = vmatprep.mubr.f32.mxu0 0.0
      %1661 = vmatmul.mubr.f32.gmra.mrb[0].mxu0 %v1584
      %v1662 = vpop.f32.mrb[0].mxu0
      %v1663 = vadd.f32 0.0, %v1662
      %v1664 = vpop.f32.mrb[0].mxu0
      %1665 = vmatprep.mubr.f32.mxu0 0.0
      %1666 = vmatmul.mubr.f32.gmra.mrb[0].mxu0 %v1585
      %v1667 = vpop.f32.mrb[0].mxu0
      %v1668 = vadd.f32 0.0, %v1667
      %v1669 = vpop.f32.mrb[0].mxu0
      %1670 = vmatprep.mubr.f32.mxu0 0.0
      %1671 = vmatmul.mubr.f32.gmra.mrb[0].mxu0 %v1586
      %v1672 = vpop.f32.mrb[0].mxu0
      %v1673 = vadd.f32 0.0, %v1672
      %v1674 = vpop.f32.mrb[0].mxu0
      %1675 = vmatprep.mubr.f32.mxu0 0.0
      %1676 = vmatmul.mubr.f32.gmra.mrb[0].mxu0 %v1587
      %v1677 = vpop.f32.mrb[0].mxu0
      %v1678 = vadd.f32 0.0, %v1677
      %v1679 = vpop.f32.mrb[0].mxu0
      %1680 = vmatprep.mubr.f32.mxu0 0.0
      %1681 = vmatmul.mubr.f32.gmra.mrb[0].mxu0 %v1588
      %v1682 = vpop.f32.mrb[0].mxu0
      %v1683 = vadd.f32 0.0, %v1682
      %v1684 = vpop.f32.mrb[0].mxu0
      %1685 = vmatprep.mubr.f32.mxu0 0.0
      %1686 = vmatmul.mubr.f32.gmra.mrb[0].mxu0 %v1589
      %v1687 = vpop.f32.mrb[0].mxu0
      %v1688 = vadd.f32 0.0, %v1687
      %v1689 = vpop.f32.mrb[0].mxu0
      %1690 = vmatprep.mubr.f32.mxu0 0.0
      %1691 = vmatmul.mubr.f32.gmra.mrb[0].mxu0 %v1590
      %v1692 = vpop.f32.mrb[0].mxu0
      %v1693 = vadd.f32 0.0, %v1692
      %v1694 = vpop.f32.mrb[0].mxu0
      %1695 = vdwg.mxu0
      %vm1696 = vcmp.lt.s32.totalorder %v517, 0
      %v1697 = vsub.s32 0, %v517
      %v1698 = vsel %vm1696, %v1697, %v517
      %v1699 = vshrl.u32 %v1698, 3
      %v1700 = vand.u32 %v1698, 7
      %v1701 = vsub.s32 0, %v1700
      %v1702 = vsel %vm1696, %v1701, %v1700
      %vm1703 = vcmp.lt.s32.totalorder %v1216, 0
      %v1704 = vsub.s32 0, %v1216
      %v1705 = vsel %vm1703, %v1704, %v1216
      %v1706 = vshrl.u32 %v1705, 3
      %v1707 = vand.u32 %v1705, 7
      %v1708 = vsub.s32 0, %v1707
      %v1709 = vsel %vm1703, %v1708, %v1707
      %vm1710 = vcmp.lt.s32.totalorder %v1217, 0
      %v1711 = vsub.s32 0, %v1217
      %v1712 = vsel %vm1710, %v1711, %v1217
      %v1713 = vshrl.u32 %v1712, 3
      %v1714 = vand.u32 %v1712, 7
      %v1715 = vsub.s32 0, %v1714
      %v1716 = vsel %vm1710, %v1715, %v1714
      %vm1717 = vcmp.lt.s32.totalorder %v1218, 0
      %v1718 = vsub.s32 0, %v1218
      %v1719 = vsel %vm1717, %v1718, %v1218
      %v1720 = vshrl.u32 %v1719, 3
      %v1721 = vand.u32 %v1719, 7
      %v1722 = vsub.s32 0, %v1721
      %v1723 = vsel %vm1717, %v1722, %v1721
      %vm1724 = vcmp.lt.s32.totalorder %v1219, 0
      %v1725 = vsub.s32 0, %v1219
      %v1726 = vsel %vm1724, %v1725, %v1219
      %v1727 = vshrl.u32 %v1726, 3
      %v1728 = vand.u32 %v1726, 7
      %v1729 = vsub.s32 0, %v1728
      %v1730 = vsel %vm1724, %v1729, %v1728
      %vm1731 = vcmp.lt.s32.totalorder %v1220, 0
      %v1732 = vsub.s32 0, %v1220
      %v1733 = vsel %vm1731, %v1732, %v1220
      %v1734 = vshrl.u32 %v1733, 3
      %v1735 = vand.u32 %v1733, 7
      %v1736 = vsub.s32 0, %v1735
      %v1737 = vsel %vm1731, %v1736, %v1735
      %vm1738 = vcmp.lt.s32.totalorder %v1221, 0
      %v1739 = vsub.s32 0, %v1221
      %v1740 = vsel %vm1738, %v1739, %v1221
      %v1741 = vshrl.u32 %v1740, 3
      %v1742 = vand.u32 %v1740, 7
      %v1743 = vsub.s32 0, %v1742
      %v1744 = vsel %vm1738, %v1743, %v1742
      %vm1745 = vcmp.lt.s32.totalorder %v1222, 0
      %v1746 = vsub.s32 0, %v1222
      %v1747 = vsel %vm1745, %v1746, %v1222
      %v1748 = vshrl.u32 %v1747, 3
      %v1749 = vand.u32 %v1747, 7
      %v1750 = vsub.s32 0, %v1749
      %v1751 = vsel %vm1745, %v1750, %v1749
      %vm1752 = vcmp.ne.s32.totalorder %v1702, 0
      %vm1753 = vcmp.ne.s32.totalorder %v1709, 0
      %vm1754 = vcmp.ne.s32.totalorder %v1716, 0
      %vm1755 = vcmp.ne.s32.totalorder %v1723, 0
      %vm1756 = vcmp.ne.s32.totalorder %v1730, 0
      %vm1757 = vcmp.ne.s32.totalorder %v1737, 0
      %vm1758 = vcmp.ne.s32.totalorder %v1744, 0
      %vm1759 = vcmp.ne.s32.totalorder %v1751, 0
      %vm1760 = vcmp.lt.s32.totalorder %v1702, 0
      %vm1761 = vcmp.lt.s32.totalorder %v1709, 0
      %vm1762 = vcmp.lt.s32.totalorder %v1716, 0
      %vm1763 = vcmp.lt.s32.totalorder %v1723, 0
      %vm1764 = vcmp.lt.s32.totalorder %v1730, 0
      %vm1765 = vcmp.lt.s32.totalorder %v1737, 0
      %vm1766 = vcmp.lt.s32.totalorder %v1744, 0
      %vm1767 = vcmp.lt.s32.totalorder %v1751, 0
      %vm1768 = vmand %vm1760, %vm1752
      %vm1769 = vmand %vm1761, %vm1753
      %vm1770 = vmand %vm1762, %vm1754
      %vm1771 = vmand %vm1763, %vm1755
      %vm1772 = vmand %vm1764, %vm1756
      %vm1773 = vmand %vm1765, %vm1757
      %vm1774 = vmand %vm1766, %vm1758
      %vm1775 = vmand %vm1767, %vm1759
      %v1776 = vadd.s32 %v1702, 8
      %v1777 = vadd.s32 %v1709, 8
      %v1778 = vadd.s32 %v1716, 8
      %v1779 = vadd.s32 %v1723, 8
      %v1780 = vadd.s32 %v1730, 8
      %v1781 = vadd.s32 %v1737, 8
      %v1782 = vadd.s32 %v1744, 8
      %v1783 = vadd.s32 %v1751, 8
      %v1784 = vsel %vm1768, %v1776, %v1702
      %v1785 = vsel %vm1769, %v1777, %v1709
      %v1786 = vsel %vm1770, %v1778, %v1716
      %v1787 = vsel %vm1771, %v1779, %v1723
      %v1788 = vsel %vm1772, %v1780, %v1730
      %v1789 = vsel %vm1773, %v1781, %v1737
      %v1790 = vsel %vm1774, %v1782, %v1744
      %v1791 = vsel %vm1775, %v1783, %v1751
      %v1792 = vld [vmem:[%s4] sm:$0x1]
      %v1794 = vlaneseq
      %v1795 = vshrl.u32 %v1794, 7
      %v1796 = vsub.s32 0, %v1795
      %v1797 = vrot.slane %v1792, %v1796
      %v1799 = vadd.f32 %v1797, 0.0
      %v1800 = vrot.slane %v1658, 7
      %v1801 = vrot.slane %v1663, 7
      %v1802 = vrot.slane %v1668, 7
      %v1803 = vrot.slane %v1673, 7
      %v1804 = vrot.slane %v1678, 7
      %v1805 = vrot.slane %v1683, 7
      %v1806 = vrot.slane %v1688, 7
      %v1807 = vrot.slane %v1693, 7
      %v1808 = vsel %vm518, %v1806, %v1807
      %v1809 = vsel %vm518, %v1805, %v1806
      %v1810 = vsel %vm518, %v1804, %v1805
      %v1811 = vsel %vm518, %v1803, %v1804
      %v1812 = vsel %vm518, %v1802, %v1803
      %v1813 = vsel %vm518, %v1801, %v1802
      %v1814 = vsel %vm518, %v1800, %v1801
      %v1815 = vsel %vm518, %v1807, %v1800
      %vm1816 = vcmp.eq.s32.totalorder %v1784, 0
      %vm1817 = vcmp.eq.s32.totalorder %v1785, 0
      %vm1818 = vcmp.eq.s32.totalorder %v1786, 0
      %vm1819 = vcmp.eq.s32.totalorder %v1787, 0
      %vm1820 = vcmp.eq.s32.totalorder %v1788, 0
      %vm1821 = vcmp.eq.s32.totalorder %v1789, 0
      %vm1822 = vcmp.eq.s32.totalorder %v1790, 0
      %vm1823 = vcmp.eq.s32.totalorder %v1791, 0
      %v1824 = vsel %vm1816, 0.0, %v1815
      %v1825 = vsel %vm1817, 0.0, %v1814
      %v1826 = vsel %vm1818, 0.0, %v1813
      %v1827 = vsel %vm1819, 0.0, %v1812
      %v1828 = vsel %vm1820, 0.0, %v1811
      %v1829 = vsel %vm1821, 0.0, %v1810
      %v1830 = vsel %vm1822, 0.0, %v1809
      %v1831 = vsel %vm1823, 0.0, %v1808
      %v1832 = vld [vmem:[%s3] sm:$0xff]
      %v1833 = vld [vmem:[%s3 + $0x8] sm:$0xff]
      %v1834 = vld [vmem:[%s3 + $0x10] sm:$0xff]
      %v1835 = vld [vmem:[%s3 + $0x18] sm:$0xff]
      %v1836 = vld [vmem:[%s3 + $0x20] sm:$0xff]
      %v1837 = vld [vmem:[%s3 + $0x28] sm:$0xff]
      %v1838 = vld [vmem:[%s3 + $0x30] sm:$0xff]
      %v1839 = vld [vmem:[%s3 + $0x38] sm:$0xff]
      %v1840 = vld [vmem:[%s3 + $0x40] sm:$0xff]
      %v1841 = vld [vmem:[%s3 + $0x48] sm:$0xff]
      %v1842 = vld [vmem:[%s3 + $0x50] sm:$0xff]
      %v1843 = vld [vmem:[%s3 + $0x58] sm:$0xff]
      %v1844 = vld [vmem:[%s3 + $0x60] sm:$0xff]
      %v1845 = vld [vmem:[%s3 + $0x68] sm:$0xff]
      %v1846 = vld [vmem:[%s3 + $0x70] sm:$0xff]
      %v1847 = vld [vmem:[%s3 + $0x78] sm:$0xff]
      %1848 = vmatprep.subr.mxu0 0.0
      %1849 = vmatpush1.msra.mxu0 %v1832
      %1850 = vmatprep.subr.mxu0 0.0
      %1851 = vmatpush1.msra.mxu0 %v1833
      %1852 = vmatprep.subr.mxu0 0.0
      %1853 = vmatpush1.msra.mxu0 %v1834
      %1854 = vmatprep.subr.mxu0 0.0
      %1855 = vmatpush1.msra.mxu0 %v1835
      %1856 = vmatprep.subr.mxu0 0.0
      %1857 = vmatpush1.msra.mxu0 %v1836
      %1858 = vmatprep.subr.mxu0 0.0
      %1859 = vmatpush1.msra.mxu0 %v1837
      %1860 = vmatprep.subr.mxu0 0.0
      %1861 = vmatpush1.msra.mxu0 %v1838
      %1862 = vmatprep.subr.mxu0 0.0
      %1863 = vmatpush1.msra.mxu0 %v1839
      %1864 = vmatprep.subr.mxu0 0.0
      %1865 = vmatpush1.msra.mxu0 %v1840
      %1866 = vmatprep.subr.mxu0 0.0
      %1867 = vmatpush1.msra.mxu0 %v1841
      %1868 = vmatprep.subr.mxu0 0.0
      %1869 = vmatpush1.msra.mxu0 %v1842
      %1870 = vmatprep.subr.mxu0 0.0
      %1871 = vmatpush1.msra.mxu0 %v1843
      %1872 = vmatprep.subr.mxu0 0.0
      %1873 = vmatpush1.msra.mxu0 %v1844
      %1874 = vmatprep.subr.mxu0 0.0
      %1875 = vmatpush1.msra.mxu0 %v1845
      %1876 = vmatprep.subr.mxu0 0.0
      %1877 = vmatpush1.msra.mxu0 %v1846
      %1878 = vmatprep.subr.mxu0 0.0
      %1879 = vmatpush1.msra.mxu0 %v1847
      %1880 = vmatprep.subr.mxu0 0.0
      %1881 = vmatpush1.msra.mxu0 0.0
      %1882 = vmatprep.subr.mxu0 0.0
      %1883 = vmatpush1.msra.mxu0 0.0
      %1884 = vmatprep.subr.mxu0 0.0
      %1885 = vmatpush1.msra.mxu0 0.0
      %1886 = vmatprep.subr.mxu0 0.0
      %1887 = vmatpush1.msra.mxu0 0.0
      %1888 = vmatprep.subr.mxu0 0.0
      %1889 = vmatpush1.msra.mxu0 0.0
      %1890 = vmatprep.subr.mxu0 0.0
      %1891 = vmatpush1.msra.mxu0 0.0
      %1892 = vmatprep.subr.mxu0 0.0
      %1893 = vmatpush1.msra.mxu0 0.0
      %1894 = vmatprep.subr.mxu0 0.0
      %1895 = vmatpush1.msra.mxu0 0.0
      %1896 = vmatprep.subr.mxu0 0.0
      %1897 = vmatpush1.msra.mxu0 0.0
      %1898 = vmatprep.subr.mxu0 0.0
      %1899 = vmatpush1.msra.mxu0 0.0
      %1900 = vmatprep.subr.mxu0 0.0
      %1901 = vmatpush1.msra.mxu0 0.0
      %1902 = vmatprep.subr.mxu0 0.0
      %1903 = vmatpush1.msra.mxu0 0.0
      %1904 = vmatprep.subr.mxu0 0.0
      %1905 = vmatpush1.msra.mxu0 0.0
      %1906 = vmatprep.subr.mxu0 0.0
      %1907 = vmatpush1.msra.mxu0 0.0
      %1908 = vmatprep.subr.mxu0 0.0
      %1909 = vmatpush1.msra.mxu0 0.0
      %1910 = vmatprep.subr.mxu0 0.0
      %1911 = vmatpush1.msra.mxu0 0.0
      %1912 = vmatprep.mubr.f32.mxu0 0.0
      %1913 = vmatmul.mubr.f32.gmra.mrb[0].mxu0 %v1824
      %v1914 = vpop.f32.mrb[0].mxu0
      %v1915 = vadd.f32 0.0, %v1914
      %v1916 = vpop.f32.mrb[0].mxu0
      %1917 = vmatprep.mubr.f32.mxu0 0.0
      %1918 = vmatmul.mubr.f32.gmra.mrb[0].mxu0 %v1825
      %v1919 = vpop.f32.mrb[0].mxu0
      %v1920 = vadd.f32 0.0, %v1919
      %v1921 = vpop.f32.mrb[0].mxu0
      %1922 = vmatprep.mubr.f32.mxu0 0.0
      %1923 = vmatmul.mubr.f32.gmra.mrb[0].mxu0 %v1826
      %v1924 = vpop.f32.mrb[0].mxu0
      %v1925 = vadd.f32 0.0, %v1924
      %v1926 = vpop.f32.mrb[0].mxu0
      %1927 = vmatprep.mubr.f32.mxu0 0.0
      %1928 = vmatmul.mubr.f32.gmra.mrb[0].mxu0 %v1827
      %v1929 = vpop.f32.mrb[0].mxu0
      %v1930 = vadd.f32 0.0, %v1929
      %v1931 = vpop.f32.mrb[0].mxu0
      %1932 = vmatprep.mubr.f32.mxu0 0.0
      %1933 = vmatmul.mubr.f32.gmra.mrb[0].mxu0 %v1828
      %v1934 = vpop.f32.mrb[0].mxu0
      %v1935 = vadd.f32 0.0, %v1934
      %v1936 = vpop.f32.mrb[0].mxu0
      %1937 = vmatprep.mubr.f32.mxu0 0.0
      %1938 = vmatmul.mubr.f32.gmra.mrb[0].mxu0 %v1829
      %v1939 = vpop.f32.mrb[0].mxu0
      %v1940 = vadd.f32 0.0, %v1939
      %v1941 = vpop.f32.mrb[0].mxu0
      %1942 = vmatprep.mubr.f32.mxu0 0.0
      %1943 = vmatmul.mubr.f32.gmra.mrb[0].mxu0 %v1830
      %v1944 = vpop.f32.mrb[0].mxu0
      %v1945 = vadd.f32 0.0, %v1944
      %v1946 = vpop.f32.mrb[0].mxu0
      %1947 = vmatprep.mubr.f32.mxu0 0.0
      %1948 = vmatmul.mubr.f32.gmra.mrb[0].mxu0 %v1831
      %v1949 = vpop.f32.mrb[0].mxu0
      %v1950 = vadd.f32 0.0, %v1949
      %v1951 = vpop.f32.mrb[0].mxu0
      %1952 = vdwg.mxu0
      %v1953 = vadd.f32 %v1799, %v1915
      %v1954 = vadd.f32 %v1799, %v1920
      %v1955 = vadd.f32 %v1799, %v1925
      %v1956 = vadd.f32 %v1799, %v1930
      %v1957 = vadd.f32 %v1799, %v1935
      %v1958 = vadd.f32 %v1799, %v1940
      %v1959 = vadd.f32 %v1799, %v1945
      %v1960 = vadd.f32 %v1799, %v1950
      %s1961 = scalar_lea.vmem %s3, 128
      %v1962 = vld [vmem:[%s1961] sm:$0xff]
      %v1963 = vld [vmem:[%s1961 + $0x8] sm:$0xff]
      %v1964 = vld [vmem:[%s1961 + $0x10] sm:$0xff]
      %v1965 = vld [vmem:[%s1961 + $0x18] sm:$0xff]
      %v1966 = vld [vmem:[%s1961 + $0x20] sm:$0xff]
      %v1967 = vld [vmem:[%s1961 + $0x28] sm:$0xff]
      %v1968 = vld [vmem:[%s1961 + $0x30] sm:$0xff]
      %v1969 = vld [vmem:[%s1961 + $0x38] sm:$0xff]
      %v1970 = vld [vmem:[%s1961 + $0x40] sm:$0xff]
      %v1971 = vld [vmem:[%s1961 + $0x48] sm:$0xff]
      %v1972 = vld [vmem:[%s1961 + $0x50] sm:$0xff]
      %v1973 = vld [vmem:[%s1961 + $0x58] sm:$0xff]
      %v1974 = vld [vmem:[%s1961 + $0x60] sm:$0xff]
      %v1975 = vld [vmem:[%s1961 + $0x68] sm:$0xff]
      %v1976 = vld [vmem:[%s1961 + $0x70] sm:$0xff]
      %v1977 = vld [vmem:[%s1961 + $0x78] sm:$0xff]
      %1978 = vmatprep.subr.mxu0 0.0
      %1979 = vmatpush1.msra.mxu0 %v1962
      %1980 = vmatprep.subr.mxu0 0.0
      %1981 = vmatpush1.msra.mxu0 %v1963
      %1982 = vmatprep.subr.mxu0 0.0
      %1983 = vmatpush1.msra.mxu0 %v1964
      %1984 = vmatprep.subr.mxu0 0.0
      %1985 = vmatpush1.msra.mxu0 %v1965
      %1986 = vmatprep.subr.mxu0 0.0
      %1987 = vmatpush1.msra.mxu0 %v1966
      %1988 = vmatprep.subr.mxu0 0.0
      %1989 = vmatpush1.msra.mxu0 %v1967
      %1990 = vmatprep.subr.mxu0 0.0
      %1991 = vmatpush1.msra.mxu0 %v1968
      %1992 = vmatprep.subr.mxu0 0.0
      %1993 = vmatpush1.msra.mxu0 %v1969
      %1994 = vmatprep.subr.mxu0 0.0
      %1995 = vmatpush1.msra.mxu0 %v1970
      %1996 = vmatprep.subr.mxu0 0.0
      %1997 = vmatpush1.msra.mxu0 %v1971
      %1998 = vmatprep.subr.mxu0 0.0
      %1999 = vmatpush1.msra.mxu0 %v1972
      %2000 = vmatprep.subr.mxu0 0.0
      %2001 = vmatpush1.msra.mxu0 %v1973
      %2002 = vmatprep.subr.mxu0 0.0
      %2003 = vmatpush1.msra.mxu0 %v1974
      %2004 = vmatprep.subr.mxu0 0.0
      %2005 = vmatpush1.msra.mxu0 %v1975
      %2006 = vmatprep.subr.mxu0 0.0
      %2007 = vmatpush1.msra.mxu0 %v1976
      %2008 = vmatprep.subr.mxu0 0.0
      %2009 = vmatpush1.msra.mxu0 %v1977
      %2010 = vmatprep.subr.mxu0 0.0
      %2011 = vmatpush1.msra.mxu0 0.0
      %2012 = vmatprep.subr.mxu0 0.0
      %2013 = vmatpush1.msra.mxu0 0.0
      %2014 = vmatprep.subr.mxu0 0.0
      %2015 = vmatpush1.msra.mxu0 0.0
      %2016 = vmatprep.subr.mxu0 0.0
      %2017 = vmatpush1.msra.mxu0 0.0
      %2018 = vmatprep.subr.mxu0 0.0
      %2019 = vmatpush1.msra.mxu0 0.0
      %2020 = vmatprep.subr.mxu0 0.0
      %2021 = vmatpush1.msra.mxu0 0.0
      %2022 = vmatprep.subr.mxu0 0.0
      %2023 = vmatpush1.msra.mxu0 0.0
      %2024 = vmatprep.subr.mxu0 0.0
      %2025 = vmatpush1.msra.mxu0 0.0
      %2026 = vmatprep.subr.mxu0 0.0
      %2027 = vmatpush1.msra.mxu0 0.0
      %2028 = vmatprep.subr.mxu0 0.0
      %2029 = vmatpush1.msra.mxu0 0.0
      %2030 = vmatprep.subr.mxu0 0.0
      %2031 = vmatpush1.msra.mxu0 0.0
      %2032 = vmatprep.subr.mxu0 0.0
      %2033 = vmatpush1.msra.mxu0 0.0
      %2034 = vmatprep.subr.mxu0 0.0
      %2035 = vmatpush1.msra.mxu0 0.0
      %2036 = vmatprep.subr.mxu0 0.0
      %2037 = vmatpush1.msra.mxu0 0.0
      %2038 = vmatprep.subr.mxu0 0.0
      %2039 = vmatpush1.msra.mxu0 0.0
      %2040 = vmatprep.subr.mxu0 0.0
      %2041 = vmatpush1.msra.mxu0 0.0
      %2042 = vmatprep.mubr.f32.mxu0 0.0
      %2043 = vmatmul.mubr.f32.gmra.mrb[0].mxu0 %v1658
      %v2044 = vpop.f32.mrb[0].mxu0
      %v2045 = vadd.f32 0.0, %v2044
      %v2046 = vpop.f32.mrb[0].mxu0
      %2047 = vmatprep.mubr.f32.mxu0 0.0
      %2048 = vmatmul.mubr.f32.gmra.mrb[0].mxu0 %v1663
      %v2049 = vpop.f32.mrb[0].mxu0
      %v2050 = vadd.f32 0.0, %v2049
      %v2051 = vpop.f32.mrb[0].mxu0
      %2052 = vmatprep.mubr.f32.mxu0 0.0
      %2053 = vmatmul.mubr.f32.gmra.mrb[0].mxu0 %v1668
      %v2054 = vpop.f32.mrb[0].mxu0
      %v2055 = vadd.f32 0.0, %v2054
      %v2056 = vpop.f32.mrb[0].mxu0
      %2057 = vmatprep.mubr.f32.mxu0 0.0
      %2058 = vmatmul.mubr.f32.gmra.mrb[0].mxu0 %v1673
      %v2059 = vpop.f32.mrb[0].mxu0
      %v2060 = vadd.f32 0.0, %v2059
      %v2061 = vpop.f32.mrb[0].mxu0
      %2062 = vmatprep.mubr.f32.mxu0 0.0
      %2063 = vmatmul.mubr.f32.gmra.mrb[0].mxu0 %v1678
      %v2064 = vpop.f32.mrb[0].mxu0
      %v2065 = vadd.f32 0.0, %v2064
      %v2066 = vpop.f32.mrb[0].mxu0
      %2067 = vmatprep.mubr.f32.mxu0 0.0
      %2068 = vmatmul.mubr.f32.gmra.mrb[0].mxu0 %v1683
      %v2069 = vpop.f32.mrb[0].mxu0
      %v2070 = vadd.f32 0.0, %v2069
      %v2071 = vpop.f32.mrb[0].mxu0
      %2072 = vmatprep.mubr.f32.mxu0 0.0
      %2073 = vmatmul.mubr.f32.gmra.mrb[0].mxu0 %v1688
      %v2074 = vpop.f32.mrb[0].mxu0
      %v2075 = vadd.f32 0.0, %v2074
      %v2076 = vpop.f32.mrb[0].mxu0
      %2077 = vmatprep.mubr.f32.mxu0 0.0
      %2078 = vmatmul.mubr.f32.gmra.mrb[0].mxu0 %v1693
      %v2079 = vpop.f32.mrb[0].mxu0
      %v2080 = vadd.f32 0.0, %v2079
      %v2081 = vpop.f32.mrb[0].mxu0
      %2082 = vdwg.mxu0
      %v2083 = vadd.f32 %v1953, %v2045
      %v2084 = vadd.f32 %v1954, %v2050
      %v2085 = vadd.f32 %v1955, %v2055
      %v2086 = vadd.f32 %v1956, %v2060
      %v2087 = vadd.f32 %v1957, %v2065
      %v2088 = vadd.f32 %v1958, %v2070
      %v2089 = vadd.f32 %v1959, %v2075
      %v2090 = vadd.f32 %v1960, %v2080
      %v2091 = vrot.slane %v1658, 1
      %v2092 = vrot.slane %v1663, 1
      %v2093 = vrot.slane %v1668, 1
      %v2094 = vrot.slane %v1673, 1
      %v2095 = vrot.slane %v1678, 1
      %v2096 = vrot.slane %v1683, 1
      %v2097 = vrot.slane %v1688, 1
      %v2098 = vrot.slane %v1693, 1
      %v2099 = vsel %vm972, %v2097, %v2098
      %v2100 = vsel %vm972, %v2096, %v2097
      %v2101 = vsel %vm972, %v2095, %v2096
      %v2102 = vsel %vm972, %v2094, %v2095
      %v2103 = vsel %vm972, %v2093, %v2094
      %v2104 = vsel %vm972, %v2092, %v2093
      %v2105 = vsel %vm972, %v2091, %v2092
      %v2106 = vsel %vm972, %v2098, %v2091
      %vm2107 = vcmp.eq.s32.totalorder %v1784, 7
      %vm2108 = vcmp.eq.s32.totalorder %v1785, 7
      %vm2109 = vcmp.eq.s32.totalorder %v1786, 7
      %vm2110 = vcmp.eq.s32.totalorder %v1787, 7
      %vm2111 = vcmp.eq.s32.totalorder %v1788, 7
      %vm2112 = vcmp.eq.s32.totalorder %v1789, 7
      %vm2113 = vcmp.eq.s32.totalorder %v1790, 7
      %vm2114 = vcmp.eq.s32.totalorder %v1791, 7
      %v2115 = vsel %vm2107, 0.0, %v2105
      %v2116 = vsel %vm2108, 0.0, %v2104
      %v2117 = vsel %vm2109, 0.0, %v2103
      %v2118 = vsel %vm2110, 0.0, %v2102
      %v2119 = vsel %vm2111, 0.0, %v2101
      %v2120 = vsel %vm2112, 0.0, %v2100
      %v2121 = vsel %vm2113, 0.0, %v2099
      %v2122 = vsel %vm2114, 0.0, %v2106
      %s2123 = scalar_lea.vmem %s3, 256
      %v2124 = vld [vmem:[%s2123] sm:$0xff]
      %v2125 = vld [vmem:[%s2123 + $0x8] sm:$0xff]
      %v2126 = vld [vmem:[%s2123 + $0x10] sm:$0xff]
      %v2127 = vld [vmem:[%s2123 + $0x18] sm:$0xff]
      %v2128 = vld [vmem:[%s2123 + $0x20] sm:$0xff]
      %v2129 = vld [vmem:[%s2123 + $0x28] sm:$0xff]
      %v2130 = vld [vmem:[%s2123 + $0x30] sm:$0xff]
      %v2131 = vld [vmem:[%s2123 + $0x38] sm:$0xff]
      %v2132 = vld [vmem:[%s2123 + $0x40] sm:$0xff]
      %v2133 = vld [vmem:[%s2123 + $0x48] sm:$0xff]
      %v2134 = vld [vmem:[%s2123 + $0x50] sm:$0xff]
      %v2135 = vld [vmem:[%s2123 + $0x58] sm:$0xff]
      %v2136 = vld [vmem:[%s2123 + $0x60] sm:$0xff]
      %v2137 = vld [vmem:[%s2123 + $0x68] sm:$0xff]
      %v2138 = vld [vmem:[%s2123 + $0x70] sm:$0xff]
      %v2139 = vld [vmem:[%s2123 + $0x78] sm:$0xff]
      %2140 = vmatprep.subr.mxu0 0.0
      %2141 = vmatpush1.msra.mxu0 %v2124
      %2142 = vmatprep.subr.mxu0 0.0
      %2143 = vmatpush1.msra.mxu0 %v2125
      %2144 = vmatprep.subr.mxu0 0.0
      %2145 = vmatpush1.msra.mxu0 %v2126
      %2146 = vmatprep.subr.mxu0 0.0
      %2147 = vmatpush1.msra.mxu0 %v2127
      %2148 = vmatprep.subr.mxu0 0.0
      %2149 = vmatpush1.msra.mxu0 %v2128
      %2150 = vmatprep.subr.mxu0 0.0
      %2151 = vmatpush1.msra.mxu0 %v2129
      %2152 = vmatprep.subr.mxu0 0.0
      %2153 = vmatpush1.msra.mxu0 %v2130
      %2154 = vmatprep.subr.mxu0 0.0
      %2155 = vmatpush1.msra.mxu0 %v2131
      %2156 = vmatprep.subr.mxu0 0.0
      %2157 = vmatpush1.msra.mxu0 %v2132
      %2158 = vmatprep.subr.mxu0 0.0
      %2159 = vmatpush1.msra.mxu0 %v2133
      %2160 = vmatprep.subr.mxu0 0.0
      %2161 = vmatpush1.msra.mxu0 %v2134
      %2162 = vmatprep.subr.mxu0 0.0
      %2163 = vmatpush1.msra.mxu0 %v2135
      %2164 = vmatprep.subr.mxu0 0.0
      %2165 = vmatpush1.msra.mxu0 %v2136
      %2166 = vmatprep.subr.mxu0 0.0
      %2167 = vmatpush1.msra.mxu0 %v2137
      %2168 = vmatprep.subr.mxu0 0.0
      %2169 = vmatpush1.msra.mxu0 %v2138
      %2170 = vmatprep.subr.mxu0 0.0
      %2171 = vmatpush1.msra.mxu0 %v2139
      %2172 = vmatprep.subr.mxu0 0.0
      %2173 = vmatpush1.msra.mxu0 0.0
      %2174 = vmatprep.subr.mxu0 0.0
      %2175 = vmatpush1.msra.mxu0 0.0
      %2176 = vmatprep.subr.mxu0 0.0
      %2177 = vmatpush1.msra.mxu0 0.0
      %2178 = vmatprep.subr.mxu0 0.0
      %2179 = vmatpush1.msra.mxu0 0.0
      %2180 = vmatprep.subr.mxu0 0.0
      %2181 = vmatpush1.msra.mxu0 0.0
      %2182 = vmatprep.subr.mxu0 0.0
      %2183 = vmatpush1.msra.mxu0 0.0
      %2184 = vmatprep.subr.mxu0 0.0
      %2185 = vmatpush1.msra.mxu0 0.0
      %2186 = vmatprep.subr.mxu0 0.0
      %2187 = vmatpush1.msra.mxu0 0.0
      %2188 = vmatprep.subr.mxu0 0.0
      %2189 = vmatpush1.msra.mxu0 0.0
      %2190 = vmatprep.subr.mxu0 0.0
      %2191 = vmatpush1.msra.mxu0 0.0
      %2192 = vmatprep.subr.mxu0 0.0
      %2193 = vmatpush1.msra.mxu0 0.0
      %2194 = vmatprep.subr.mxu0 0.0
      %2195 = vmatpush1.msra.mxu0 0.0
      %2196 = vmatprep.subr.mxu0 0.0
      %2197 = vmatpush1.msra.mxu0 0.0
      %2198 = vmatprep.subr.mxu0 0.0
      %2199 = vmatpush1.msra.mxu0 0.0
      %2200 = vmatprep.subr.mxu0 0.0
      %2201 = vmatpush1.msra.mxu0 0.0
      %2202 = vmatprep.subr.mxu0 0.0
      %2203 = vmatpush1.msra.mxu0 0.0
      %2204 = vmatprep.mubr.f32.mxu0 0.0
      %2205 = vmatmul.mubr.f32.gmra.mrb[0].mxu0 %v2115
      %v2206 = vpop.f32.mrb[0].mxu0
      %v2207 = vadd.f32 0.0, %v2206
      %v2208 = vpop.f32.mrb[0].mxu0
      %2209 = vmatprep.mubr.f32.mxu0 0.0
      %2210 = vmatmul.mubr.f32.gmra.mrb[0].mxu0 %v2116
      %v2211 = vpop.f32.mrb[0].mxu0
      %v2212 = vadd.f32 0.0, %v2211
      %v2213 = vpop.f32.mrb[0].mxu0
      %2214 = vmatprep.mubr.f32.mxu0 0.0
      %2215 = vmatmul.mubr.f32.gmra.mrb[0].mxu0 %v2117
      %v2216 = vpop.f32.mrb[0].mxu0
      %v2217 = vadd.f32 0.0, %v2216
      %v2218 = vpop.f32.mrb[0].mxu0
      %2219 = vmatprep.mubr.f32.mxu0 0.0
      %2220 = vmatmul.mubr.f32.gmra.mrb[0].mxu0 %v2118
      %v2221 = vpop.f32.mrb[0].mxu0
      %v2222 = vadd.f32 0.0, %v2221
      %v2223 = vpop.f32.mrb[0].mxu0
      %2224 = vmatprep.mubr.f32.mxu0 0.0
      %2225 = vmatmul.mubr.f32.gmra.mrb[0].mxu0 %v2119
      %v2226 = vpop.f32.mrb[0].mxu0
      %v2227 = vadd.f32 0.0, %v2226
      %v2228 = vpop.f32.mrb[0].mxu0
      %2229 = vmatprep.mubr.f32.mxu0 0.0
      %2230 = vmatmul.mubr.f32.gmra.mrb[0].mxu0 %v2120
      %v2231 = vpop.f32.mrb[0].mxu0
      %v2232 = vadd.f32 0.0, %v2231
      %v2233 = vpop.f32.mrb[0].mxu0
      %2234 = vmatprep.mubr.f32.mxu0 0.0
      %2235 = vmatmul.mubr.f32.gmra.mrb[0].mxu0 %v2121
      %v2236 = vpop.f32.mrb[0].mxu0
      %v2237 = vadd.f32 0.0, %v2236
      %v2238 = vpop.f32.mrb[0].mxu0
      %2239 = vmatprep.mubr.f32.mxu0 0.0
      %2240 = vmatmul.mubr.f32.gmra.mrb[0].mxu0 %v2122
      %v2241 = vpop.f32.mrb[0].mxu0
      %v2242 = vadd.f32 0.0, %v2241
      %v2243 = vpop.f32.mrb[0].mxu0
      %2244 = vdwg.mxu0
      %v2245 = vadd.f32 %v2083, %v2207
      %v2246 = vadd.f32 %v2084, %v2212
      %v2247 = vadd.f32 %v2085, %v2217
      %v2248 = vadd.f32 %v2086, %v2222
      %v2249 = vadd.f32 %v2087, %v2227
      %v2250 = vadd.f32 %v2088, %v2232
      %v2251 = vadd.f32 %v2089, %v2237
      %v2252 = vadd.f32 %v2090, %v2242
      %v2253 = vrot.slane %v2245, 7
      %v2254 = vrot.slane %v2246, 7
      %v2255 = vrot.slane %v2247, 7
      %v2256 = vrot.slane %v2248, 7
      %v2257 = vrot.slane %v2249, 7
      %v2258 = vrot.slane %v2250, 7
      %v2259 = vrot.slane %v2251, 7
      %v2260 = vrot.slane %v2252, 7
      %v2261 = vsel %vm518, %v2259, %v2260
      %v2262 = vsel %vm518, %v2258, %v2259
      %v2263 = vsel %vm518, %v2257, %v2258
      %v2264 = vsel %vm518, %v2256, %v2257
      %v2265 = vsel %vm518, %v2255, %v2256
      %v2266 = vsel %vm518, %v2254, %v2255
      %v2267 = vsel %vm518, %v2253, %v2254
      %v2268 = vsel %vm518, %v2260, %v2253
      %v2269 = vsel %vm1816, -inf, %v2268
      %v2270 = vsel %vm1817, -inf, %v2267
      %v2271 = vsel %vm1818, -inf, %v2266
      %v2272 = vsel %vm1819, -inf, %v2265
      %v2273 = vsel %vm1820, -inf, %v2264
      %v2274 = vsel %vm1821, -inf, %v2263
      %v2275 = vsel %vm1822, -inf, %v2262
      %v2276 = vsel %vm1823, -inf, %v2261
      %v2277 = vrot.slane %v2245, 1
      %v2278 = vrot.slane %v2246, 1
      %v2279 = vrot.slane %v2247, 1
      %v2280 = vrot.slane %v2248, 1
      %v2281 = vrot.slane %v2249, 1
      %v2282 = vrot.slane %v2250, 1
      %v2283 = vrot.slane %v2251, 1
      %v2284 = vrot.slane %v2252, 1
      %v2285 = vsel %vm972, %v2283, %v2284
      %v2286 = vsel %vm972, %v2282, %v2283
      %v2287 = vsel %vm972, %v2281, %v2282
      %v2288 = vsel %vm972, %v2280, %v2281
      %v2289 = vsel %vm972, %v2279, %v2280
      %v2290 = vsel %vm972, %v2278, %v2279
      %v2291 = vsel %vm972, %v2277, %v2278
      %v2292 = vsel %vm972, %v2284, %v2277
      %v2293 = vsel %vm2107, -inf, %v2291
      %v2294 = vsel %vm2108, -inf, %v2290
      %v2295 = vsel %vm2109, -inf, %v2289
      %v2296 = vsel %vm2110, -inf, %v2288
      %v2297 = vsel %vm2111, -inf, %v2287
      %v2298 = vsel %vm2112, -inf, %v2286
      %v2299 = vsel %vm2113, -inf, %v2285
      %v2300 = vsel %vm2114, -inf, %v2292
      %v2301 = vmax.f32 %v2245, %v2269
      %v2302 = vmax.f32 %v2246, %v2270
      %v2303 = vmax.f32 %v2247, %v2271
      %v2304 = vmax.f32 %v2248, %v2272
      %v2305 = vmax.f32 %v2249, %v2273
      %v2306 = vmax.f32 %v2250, %v2274
      %v2307 = vmax.f32 %v2251, %v2275
      %v2308 = vmax.f32 %v2252, %v2276
      %v2309 = vmax.f32 %v2301, %v2293
      %v2310 = vmax.f32 %v2302, %v2294
      %v2311 = vmax.f32 %v2303, %v2295
      %v2312 = vmax.f32 %v2304, %v2296
      %v2313 = vmax.f32 %v2305, %v2297
      %v2314 = vmax.f32 %v2306, %v2298
      %v2315 = vmax.f32 %v2307, %v2299
      %v2316 = vmax.f32 %v2308, %v2300
      %v2317 = vld [vmem:[%s6] sm:$0xff]
      %v2318 = vld [vmem:[%s6 + $0x8] sm:$0xff]
      %v2319 = vld [vmem:[%s6 + $0x10] sm:$0xff]
      %v2320 = vld [vmem:[%s6 + $0x18] sm:$0xff]
      %vm2321 = vcmask 523264
      %v2323 = vsel %vm2321, %v2317, 0
      %v2326 = vsel %vm2321, %v2318, 0
      %v2329 = vsel %vm2321, %v2319, 0
      %v2332 = vsel %vm2321, %v2320, 0
      %2334 = vmatprep.subr.mxu0 0.0
      %2335 = vmatpush1.msra.mxu0 %v2309
      %2336 = vmatprep.subr.mxu0 0.0
      %2337 = vmatpush1.msra.mxu0 %v2310
      %2338 = vmatprep.subr.mxu0 0.0
      %2339 = vmatpush1.msra.mxu0 %v2311
      %2340 = vmatprep.subr.mxu0 0.0
      %2341 = vmatpush1.msra.mxu0 %v2312
      %2342 = vmatprep.subr.mxu0 0.0
      %2343 = vmatpush1.msra.mxu0 %v2313
      %2344 = vmatprep.subr.mxu0 0.0
      %2345 = vmatpush1.msra.mxu0 %v2314
      %2346 = vmatprep.subr.mxu0 0.0
      %2347 = vmatpush1.msra.mxu0 %v2315
      %2348 = vmatprep.subr.mxu0 0.0
      %2349 = vmatpush1.msra.mxu0 %v2316
      %2350 = vmatprep.subr.mxu0 0.0
      %2351 = vmatpush1.msra.mxu0 0.0
      %2352 = vmatprep.subr.mxu0 0.0
      %2353 = vmatpush1.msra.mxu0 0.0
      %2354 = vmatprep.subr.mxu0 0.0
      %2355 = vmatpush1.msra.mxu0 0.0
      %2356 = vmatprep.subr.mxu0 0.0
      %2357 = vmatpush1.msra.mxu0 0.0
      %2358 = vmatprep.subr.mxu0 0.0
      %2359 = vmatpush1.msra.mxu0 0.0
      %2360 = vmatprep.subr.mxu0 0.0
      %2361 = vmatpush1.msra.mxu0 0.0
      %2362 = vmatprep.subr.mxu0 0.0
      %2363 = vmatpush1.msra.mxu0 0.0
      %2364 = vmatprep.subr.mxu0 0.0
      %2365 = vmatpush1.msra.mxu0 0.0
      %2366 = vmatprep.subr.mxu0 0.0
      %2367 = vmatpush1.msra.mxu0 0.0
      %2368 = vmatprep.subr.mxu0 0.0
      %2369 = vmatpush1.msra.mxu0 0.0
      %2370 = vmatprep.subr.mxu0 0.0
      %2371 = vmatpush1.msra.mxu0 0.0
      %2372 = vmatprep.subr.mxu0 0.0
      %2373 = vmatpush1.msra.mxu0 0.0
      %2374 = vmatprep.subr.mxu0 0.0
      %2375 = vmatpush1.msra.mxu0 0.0
      %2376 = vmatprep.subr.mxu0 0.0
      %2377 = vmatpush1.msra.mxu0 0.0
      %2378 = vmatprep.subr.mxu0 0.0
      %2379 = vmatpush1.msra.mxu0 0.0
      %2380 = vmatprep.subr.mxu0 0.0
      %2381 = vmatpush1.msra.mxu0 0.0
      %2382 = vmatprep.subr.mxu0 0.0
      %2383 = vmatpush1.msra.mxu0 0.0
      %2384 = vmatprep.subr.mxu0 0.0
      %2385 = vmatpush1.msra.mxu0 0.0
      %2386 = vmatprep.subr.mxu0 0.0
      %2387 = vmatpush1.msra.mxu0 0.0
      %2388 = vmatprep.subr.mxu0 0.0
      %2389 = vmatpush1.msra.mxu0 0.0
      %2390 = vmatprep.subr.mxu0 0.0
      %2391 = vmatpush1.msra.mxu0 0.0
      %2392 = vmatprep.subr.mxu0 0.0
      %2393 = vmatpush1.msra.mxu0 0.0
      %2394 = vmatprep.subr.mxu0 0.0
      %2395 = vmatpush1.msra.mxu0 0.0
      %2396 = vmatprep.subr.mxu0 0.0
      %2397 = vmatpush1.msra.mxu0 0.0
      %2398 = vmatprep.mubr.f32.mxu0 0.0
      %2399 = vmatmul.mubr.f32.gmra.mrb[0].mxu0 %v2323
      %v2400 = vpop.f32.mrb[0].mxu0
      %v2401 = vadd.f32 0.0, %v2400
      %v2402 = vpop.f32.mrb[0].mxu0
      %2403 = vmatprep.mubr.f32.mxu0 0.0
      %2404 = vmatmul.mubr.f32.gmra.mrb[0].mxu0 %v2326
      %v2405 = vpop.f32.mrb[0].mxu0
      %v2406 = vadd.f32 0.0, %v2405
      %v2407 = vpop.f32.mrb[0].mxu0
      %2408 = vmatprep.mubr.f32.mxu0 0.0
      %2409 = vmatmul.mubr.f32.gmra.mrb[0].mxu0 %v2329
      %v2410 = vpop.f32.mrb[0].mxu0
      %v2411 = vadd.f32 0.0, %v2410
      %v2412 = vpop.f32.mrb[0].mxu0
      %2413 = vmatprep.mubr.f32.mxu0 0.0
      %2414 = vmatmul.mubr.f32.gmra.mrb[0].mxu0 %v2332
      %v2415 = vpop.f32.mrb[0].mxu0
      %v2416 = vadd.f32 0.0, %v2415
      %v2417 = vpop.f32.mrb[0].mxu0
      %2418 = vdwg.mxu0
      %2423 = vrot.lane.b32.xlu0 %v2401, 123
      %v2424 = vpop.permute.xlu0 %2423
      %2425 = vrot.lane.b32.xlu0 %v2406, 123
      %v2426 = vpop.permute.xlu0 %2425
      %2427 = vrot.lane.b32.xlu0 %v2411, 123
      %v2428 = vpop.permute.xlu0 %2427
      %2429 = vrot.lane.b32.xlu0 %v2416, 123
      %v2430 = vpop.permute.xlu0 %2429
      %v2431 = vld [vmem:[%s7] sm:$0x1f]
      %vm2432 = vcmask 39936
      %v2433 = vsel %vm2432, %v2401, 0
      %v2435 = vsel %vm2432, %v2406, 0
      %v2437 = vsel %vm2432, %v2411, 0
      %v2439 = vsel %vm2432, %v2416, 0
      %v2441 = vsel %vm2432, %v2424, 0
      %v2443 = vsel %vm2432, %v2426, 0
      %v2445 = vsel %vm2432, %v2428, 0
      %v2447 = vsel %vm2432, %v2430, 0
      %vm2449 = vcmask 1044480
      %v2451 = vsel %vm2449, %v2431, 0
      %2453 = vmatprep.subr.mxu0 0.0
      %2454 = vmatpush1.msra.mxu0 %v2451
      %2455 = vmatprep.subr.mxu0 0.0
      %2456 = vmatpush1.msra.mxu0 0.0
      %2457 = vmatprep.subr.mxu0 0.0
      %2458 = vmatpush1.msra.mxu0 0.0
      %2459 = vmatprep.subr.mxu0 0.0
      %2460 = vmatpush1.msra.mxu0 0.0
      %2461 = vmatprep.subr.mxu0 0.0
      %2462 = vmatpush1.msra.mxu0 0.0
      %2463 = vmatprep.subr.mxu0 0.0
      %2464 = vmatpush1.msra.mxu0 0.0
      %2465 = vmatprep.subr.mxu0 0.0
      %2466 = vmatpush1.msra.mxu0 0.0
      %2467 = vmatprep.subr.mxu0 0.0
      %2468 = vmatpush1.msra.mxu0 0.0
      %2469 = vmatprep.subr.mxu0 0.0
      %2470 = vmatpush1.msra.mxu0 0.0
      %2471 = vmatprep.subr.mxu0 0.0
      %2472 = vmatpush1.msra.mxu0 0.0
      %2473 = vmatprep.subr.mxu0 0.0
      %2474 = vmatpush1.msra.mxu0 0.0
      %2475 = vmatprep.subr.mxu0 0.0
      %2476 = vmatpush1.msra.mxu0 0.0
      %2477 = vmatprep.subr.mxu0 0.0
      %2478 = vmatpush1.msra.mxu0 0.0
      %2479 = vmatprep.subr.mxu0 0.0
      %2480 = vmatpush1.msra.mxu0 0.0
      %2481 = vmatprep.subr.mxu0 0.0
      %2482 = vmatpush1.msra.mxu0 0.0
      %2483 = vmatprep.subr.mxu0 0.0
      %2484 = vmatpush1.msra.mxu0 0.0
      %2485 = vmatprep.subr.mxu0 0.0
      %2486 = vmatpush1.msra.mxu0 0.0
      %2487 = vmatprep.subr.mxu0 0.0
      %2488 = vmatpush1.msra.mxu0 0.0
      %2489 = vmatprep.subr.mxu0 0.0
      %2490 = vmatpush1.msra.mxu0 0.0
      %2491 = vmatprep.subr.mxu0 0.0
      %2492 = vmatpush1.msra.mxu0 0.0
      %2493 = vmatprep.subr.mxu0 0.0
      %2494 = vmatpush1.msra.mxu0 0.0
      %2495 = vmatprep.subr.mxu0 0.0
      %2496 = vmatpush1.msra.mxu0 0.0
      %2497 = vmatprep.subr.mxu0 0.0
      %2498 = vmatpush1.msra.mxu0 0.0
      %2499 = vmatprep.subr.mxu0 0.0
      %2500 = vmatpush1.msra.mxu0 0.0
      %2501 = vmatprep.subr.mxu0 0.0
      %2502 = vmatpush1.msra.mxu0 0.0
      %2503 = vmatprep.subr.mxu0 0.0
      %2504 = vmatpush1.msra.mxu0 0.0
      %2505 = vmatprep.subr.mxu0 0.0
      %2506 = vmatpush1.msra.mxu0 0.0
      %2507 = vmatprep.subr.mxu0 0.0
      %2508 = vmatpush1.msra.mxu0 0.0
      %2509 = vmatprep.subr.mxu0 0.0
      %2510 = vmatpush1.msra.mxu0 0.0
      %2511 = vmatprep.subr.mxu0 0.0
      %2512 = vmatpush1.msra.mxu0 0.0
      %2513 = vmatprep.subr.mxu0 0.0
      %2514 = vmatpush1.msra.mxu0 0.0
      %2515 = vmatprep.subr.mxu0 0.0
      %2516 = vmatpush1.msra.mxu0 0.0
      %2517 = vmatprep.mubr.f32.mxu0 0.0
      %2518 = vmatmul.mubr.f32.gmra.mrb[0].mxu0 %v2433
      %v2519 = vpop.f32.mrb[0].mxu0
      %v2520 = vadd.f32 0.0, %v2519
      %v2521 = vpop.f32.mrb[0].mxu0
      %2522 = vmatprep.mubr.f32.mxu0 0.0
      %2523 = vmatmul.mubr.f32.gmra.mrb[0].mxu0 %v2435
      %v2524 = vpop.f32.mrb[0].mxu0
      %v2525 = vadd.f32 0.0, %v2524
      %v2526 = vpop.f32.mrb[0].mxu0
      %2527 = vmatprep.mubr.f32.mxu0 0.0
      %2528 = vmatmul.mubr.f32.gmra.mrb[0].mxu0 %v2437
      %v2529 = vpop.f32.mrb[0].mxu0
      %v2530 = vadd.f32 0.0, %v2529
      %v2531 = vpop.f32.mrb[0].mxu0
      %2532 = vmatprep.mubr.f32.mxu0 0.0
      %2533 = vmatmul.mubr.f32.gmra.mrb[0].mxu0 %v2439
      %v2534 = vpop.f32.mrb[0].mxu0
      %v2535 = vadd.f32 0.0, %v2534
      %v2536 = vpop.f32.mrb[0].mxu0
      %2537 = vmatprep.mubr.f32.mxu0 0.0
      %2538 = vmatmul.mubr.f32.gmra.mrb[0].mxu0 %v2441
      %v2539 = vpop.f32.mrb[0].mxu0
      %v2540 = vadd.f32 0.0, %v2539
      %v2541 = vpop.f32.mrb[0].mxu0
      %2542 = vmatprep.mubr.f32.mxu0 0.0
      %2543 = vmatmul.mubr.f32.gmra.mrb[0].mxu0 %v2443
      %v2544 = vpop.f32.mrb[0].mxu0
      %v2545 = vadd.f32 0.0, %v2544
      %v2546 = vpop.f32.mrb[0].mxu0
      %2547 = vmatprep.mubr.f32.mxu0 0.0
      %2548 = vmatmul.mubr.f32.gmra.mrb[0].mxu0 %v2445
      %v2549 = vpop.f32.mrb[0].mxu0
      %v2550 = vadd.f32 0.0, %v2549
      %v2551 = vpop.f32.mrb[0].mxu0
      %2552 = vmatprep.mubr.f32.mxu0 0.0
      %2553 = vmatmul.mubr.f32.gmra.mrb[0].mxu0 %v2447
      %v2554 = vpop.f32.mrb[0].mxu0
      %v2555 = vadd.f32 0.0, %v2554
      %v2556 = vpop.f32.mrb[0].mxu0
      %2557 = vdwg.mxu0
      %v2558 = vld [vmem:[%s8] sm:$0x1f]
      %v2560 = vsel %vm2449, %v2558, 0
      %2562 = vmatprep.subr.mxu0 0.0
      %2563 = vmatpush1.msra.mxu0 %v2560
      %2564 = vmatprep.subr.mxu0 0.0
      %2565 = vmatpush1.msra.mxu0 0.0
      %2566 = vmatprep.subr.mxu0 0.0
      %2567 = vmatpush1.msra.mxu0 0.0
      %2568 = vmatprep.subr.mxu0 0.0
      %2569 = vmatpush1.msra.mxu0 0.0
      %2570 = vmatprep.subr.mxu0 0.0
      %2571 = vmatpush1.msra.mxu0 0.0
      %2572 = vmatprep.subr.mxu0 0.0
      %2573 = vmatpush1.msra.mxu0 0.0
      %2574 = vmatprep.subr.mxu0 0.0
      %2575 = vmatpush1.msra.mxu0 0.0
      %2576 = vmatprep.subr.mxu0 0.0
      %2577 = vmatpush1.msra.mxu0 0.0
      %2578 = vmatprep.subr.mxu0 0.0
      %2579 = vmatpush1.msra.mxu0 0.0
      %2580 = vmatprep.subr.mxu0 0.0
      %2581 = vmatpush1.msra.mxu0 0.0
      %2582 = vmatprep.subr.mxu0 0.0
      %2583 = vmatpush1.msra.mxu0 0.0
      %2584 = vmatprep.subr.mxu0 0.0
      %2585 = vmatpush1.msra.mxu0 0.0
      %2586 = vmatprep.subr.mxu0 0.0
      %2587 = vmatpush1.msra.mxu0 0.0
      %2588 = vmatprep.subr.mxu0 0.0
      %2589 = vmatpush1.msra.mxu0 0.0
      %2590 = vmatprep.subr.mxu0 0.0
      %2591 = vmatpush1.msra.mxu0 0.0
      %2592 = vmatprep.subr.mxu0 0.0
      %2593 = vmatpush1.msra.mxu0 0.0
      %2594 = vmatprep.subr.mxu0 0.0
      %2595 = vmatpush1.msra.mxu0 0.0
      %2596 = vmatprep.subr.mxu0 0.0
      %2597 = vmatpush1.msra.mxu0 0.0
      %2598 = vmatprep.subr.mxu0 0.0
      %2599 = vmatpush1.msra.mxu0 0.0
      %2600 = vmatprep.subr.mxu0 0.0
      %2601 = vmatpush1.msra.mxu0 0.0
      %2602 = vmatprep.subr.mxu0 0.0
      %2603 = vmatpush1.msra.mxu0 0.0
      %2604 = vmatprep.subr.mxu0 0.0
      %2605 = vmatpush1.msra.mxu0 0.0
      %2606 = vmatprep.subr.mxu0 0.0
      %2607 = vmatpush1.msra.mxu0 0.0
      %2608 = vmatprep.subr.mxu0 0.0
      %2609 = vmatpush1.msra.mxu0 0.0
      %2610 = vmatprep.subr.mxu0 0.0
      %2611 = vmatpush1.msra.mxu0 0.0
      %2612 = vmatprep.subr.mxu0 0.0
      %2613 = vmatpush1.msra.mxu0 0.0
      %2614 = vmatprep.subr.mxu0 0.0
      %2615 = vmatpush1.msra.mxu0 0.0
      %2616 = vmatprep.subr.mxu0 0.0
      %2617 = vmatpush1.msra.mxu0 0.0
      %2618 = vmatprep.subr.mxu0 0.0
      %2619 = vmatpush1.msra.mxu0 0.0
      %2620 = vmatprep.subr.mxu0 0.0
      %2621 = vmatpush1.msra.mxu0 0.0
      %2622 = vmatprep.subr.mxu0 0.0
      %2623 = vmatpush1.msra.mxu0 0.0
      %2624 = vmatprep.subr.mxu0 0.0
      %2625 = vmatpush1.msra.mxu0 0.0
      %2626 = vmatprep.mubr.f32.mxu0 0.0
      %2627 = vmatmul.mubr.f32.gmra.mrb[0].mxu0 %v2433
      %v2628 = vpop.f32.mrb[0].mxu0
      %v2629 = vadd.f32 0.0, %v2628
      %v2630 = vpop.f32.mrb[0].mxu0
      %2631 = vmatprep.mubr.f32.mxu0 0.0
      %2632 = vmatmul.mubr.f32.gmra.mrb[0].mxu0 %v2435
      %v2633 = vpop.f32.mrb[0].mxu0
      %v2634 = vadd.f32 0.0, %v2633
      %v2635 = vpop.f32.mrb[0].mxu0
      %2636 = vmatprep.mubr.f32.mxu0 0.0
      %2637 = vmatmul.mubr.f32.gmra.mrb[0].mxu0 %v2437
      %v2638 = vpop.f32.mrb[0].mxu0
      %v2639 = vadd.f32 0.0, %v2638
      %v2640 = vpop.f32.mrb[0].mxu0
      %2641 = vmatprep.mubr.f32.mxu0 0.0
      %2642 = vmatmul.mubr.f32.gmra.mrb[0].mxu0 %v2439
      %v2643 = vpop.f32.mrb[0].mxu0
      %v2644 = vadd.f32 0.0, %v2643
      %v2645 = vpop.f32.mrb[0].mxu0
      %2646 = vmatprep.mubr.f32.mxu0 0.0
      %2647 = vmatmul.mubr.f32.gmra.mrb[0].mxu0 %v2441
      %v2648 = vpop.f32.mrb[0].mxu0
      %v2649 = vadd.f32 0.0, %v2648
      %v2650 = vpop.f32.mrb[0].mxu0
      %2651 = vmatprep.mubr.f32.mxu0 0.0
      %2652 = vmatmul.mubr.f32.gmra.mrb[0].mxu0 %v2443
      %v2653 = vpop.f32.mrb[0].mxu0
      %v2654 = vadd.f32 0.0, %v2653
      %v2655 = vpop.f32.mrb[0].mxu0
      %2656 = vmatprep.mubr.f32.mxu0 0.0
      %2657 = vmatmul.mubr.f32.gmra.mrb[0].mxu0 %v2445
      %v2658 = vpop.f32.mrb[0].mxu0
      %v2659 = vadd.f32 0.0, %v2658
      %v2660 = vpop.f32.mrb[0].mxu0
      %2661 = vmatprep.mubr.f32.mxu0 0.0
      %2662 = vmatmul.mubr.f32.gmra.mrb[0].mxu0 %v2447
      %v2663 = vpop.f32.mrb[0].mxu0
      %v2664 = vadd.f32 0.0, %v2663
      %v2665 = vpop.f32.mrb[0].mxu0
      %2666 = vdwg.mxu0
      %v2667 = vld [vmem:[%s9] sm:$0x1f]
      %v2669 = vsel %vm2449, %v2667, 0
      %2671 = vmatprep.subr.mxu0 0.0
      %2672 = vmatpush1.msra.mxu0 %v2669
      %2673 = vmatprep.subr.mxu0 0.0
      %2674 = vmatpush1.msra.mxu0 0.0
      %2675 = vmatprep.subr.mxu0 0.0
      %2676 = vmatpush1.msra.mxu0 0.0
      %2677 = vmatprep.subr.mxu0 0.0
      %2678 = vmatpush1.msra.mxu0 0.0
      %2679 = vmatprep.subr.mxu0 0.0
      %2680 = vmatpush1.msra.mxu0 0.0
      %2681 = vmatprep.subr.mxu0 0.0
      %2682 = vmatpush1.msra.mxu0 0.0
      %2683 = vmatprep.subr.mxu0 0.0
      %2684 = vmatpush1.msra.mxu0 0.0
      %2685 = vmatprep.subr.mxu0 0.0
      %2686 = vmatpush1.msra.mxu0 0.0
      %2687 = vmatprep.subr.mxu0 0.0
      %2688 = vmatpush1.msra.mxu0 0.0
      %2689 = vmatprep.subr.mxu0 0.0
      %2690 = vmatpush1.msra.mxu0 0.0
      %2691 = vmatprep.subr.mxu0 0.0
      %2692 = vmatpush1.msra.mxu0 0.0
      %2693 = vmatprep.subr.mxu0 0.0
      %2694 = vmatpush1.msra.mxu0 0.0
      %2695 = vmatprep.subr.mxu0 0.0
      %2696 = vmatpush1.msra.mxu0 0.0
      %2697 = vmatprep.subr.mxu0 0.0
      %2698 = vmatpush1.msra.mxu0 0.0
      %2699 = vmatprep.subr.mxu0 0.0
      %2700 = vmatpush1.msra.mxu0 0.0
      %2701 = vmatprep.subr.mxu0 0.0
      %2702 = vmatpush1.msra.mxu0 0.0
      %2703 = vmatprep.subr.mxu0 0.0
      %2704 = vmatpush1.msra.mxu0 0.0
      %2705 = vmatprep.subr.mxu0 0.0
      %2706 = vmatpush1.msra.mxu0 0.0
      %2707 = vmatprep.subr.mxu0 0.0
      %2708 = vmatpush1.msra.mxu0 0.0
      %2709 = vmatprep.subr.mxu0 0.0
      %2710 = vmatpush1.msra.mxu0 0.0
      %2711 = vmatprep.subr.mxu0 0.0
      %2712 = vmatpush1.msra.mxu0 0.0
      %2713 = vmatprep.subr.mxu0 0.0
      %2714 = vmatpush1.msra.mxu0 0.0
      %2715 = vmatprep.subr.mxu0 0.0
      %2716 = vmatpush1.msra.mxu0 0.0
      %2717 = vmatprep.subr.mxu0 0.0
      %2718 = vmatpush1.msra.mxu0 0.0
      %2719 = vmatprep.subr.mxu0 0.0
      %2720 = vmatpush1.msra.mxu0 0.0
      %2721 = vmatprep.subr.mxu0 0.0
      %2722 = vmatpush1.msra.mxu0 0.0
      %2723 = vmatprep.subr.mxu0 0.0
      %2724 = vmatpush1.msra.mxu0 0.0
      %2725 = vmatprep.subr.mxu0 0.0
      %2726 = vmatpush1.msra.mxu0 0.0
      %2727 = vmatprep.subr.mxu0 0.0
      %2728 = vmatpush1.msra.mxu0 0.0
      %2729 = vmatprep.subr.mxu0 0.0
      %2730 = vmatpush1.msra.mxu0 0.0
      %2731 = vmatprep.subr.mxu0 0.0
      %2732 = vmatpush1.msra.mxu0 0.0
      %2733 = vmatprep.subr.mxu0 0.0
      %2734 = vmatpush1.msra.mxu0 0.0
      %2735 = vmatprep.mubr.f32.mxu0 0.0
      %2736 = vmatmul.mubr.f32.gmra.mrb[0].mxu0 %v2433
      %v2737 = vpop.f32.mrb[0].mxu0
      %v2738 = vadd.f32 0.0, %v2737
      %v2739 = vpop.f32.mrb[0].mxu0
      %2740 = vmatprep.mubr.f32.mxu0 0.0
      %2741 = vmatmul.mubr.f32.gmra.mrb[0].mxu0 %v2435
      %v2742 = vpop.f32.mrb[0].mxu0
      %v2743 = vadd.f32 0.0, %v2742
      %v2744 = vpop.f32.mrb[0].mxu0
      %2745 = vmatprep.mubr.f32.mxu0 0.0
      %2746 = vmatmul.mubr.f32.gmra.mrb[0].mxu0 %v2437
      %v2747 = vpop.f32.mrb[0].mxu0
      %v2748 = vadd.f32 0.0, %v2747
      %v2749 = vpop.f32.mrb[0].mxu0
      %2750 = vmatprep.mubr.f32.mxu0 0.0
      %2751 = vmatmul.mubr.f32.gmra.mrb[0].mxu0 %v2439
      %v2752 = vpop.f32.mrb[0].mxu0
      %v2753 = vadd.f32 0.0, %v2752
      %v2754 = vpop.f32.mrb[0].mxu0
      %2755 = vmatprep.mubr.f32.mxu0 0.0
      %2756 = vmatmul.mubr.f32.gmra.mrb[0].mxu0 %v2441
      %v2757 = vpop.f32.mrb[0].mxu0
      %v2758 = vadd.f32 0.0, %v2757
      %v2759 = vpop.f32.mrb[0].mxu0
      %2760 = vmatprep.mubr.f32.mxu0 0.0
      %2761 = vmatmul.mubr.f32.gmra.mrb[0].mxu0 %v2443
      %v2762 = vpop.f32.mrb[0].mxu0
      %v2763 = vadd.f32 0.0, %v2762
      %v2764 = vpop.f32.mrb[0].mxu0
      %2765 = vmatprep.mubr.f32.mxu0 0.0
      %2766 = vmatmul.mubr.f32.gmra.mrb[0].mxu0 %v2445
      %v2767 = vpop.f32.mrb[0].mxu0
      %v2768 = vadd.f32 0.0, %v2767
      %v2769 = vpop.f32.mrb[0].mxu0
      %2770 = vmatprep.mubr.f32.mxu0 0.0
      %2771 = vmatmul.mubr.f32.gmra.mrb[0].mxu0 %v2447
      %v2772 = vpop.f32.mrb[0].mxu0
      %v2773 = vadd.f32 0.0, %v2772
      %v2774 = vpop.f32.mrb[0].mxu0
      %2775 = vdwg.mxu0
      %vm2776 = vcmask 408576
      %v2778 = vsel %vm2776, %v2520, 0
      %v2781 = vsel %vm2776, %v2525, 0
      %v2784 = vsel %vm2776, %v2530, 0
      %v2787 = vsel %vm2776, %v2535, 0
      %v2790 = vsel %vm2776, %v2540, 0
      %v2793 = vsel %vm2776, %v2545, 0
      %v2796 = vsel %vm2776, %v2550, 0
      %v2799 = vsel %vm2776, %v2555, 0
      %v2802 = vsel %vm2776, %v2629, 0
      %v2805 = vsel %vm2776, %v2634, 0
      %v2808 = vsel %vm2776, %v2639, 0
      %v2811 = vsel %vm2776, %v2644, 0
      %v2814 = vsel %vm2776, %v2649, 0
      %v2817 = vsel %vm2776, %v2654, 0
      %v2820 = vsel %vm2776, %v2659, 0
      %v2823 = vsel %vm2776, %v2664, 0
      %2825 = vmatprep.subr.mxu0 0.0
      %2826 = vmatpush1.xpose.msra.mxu0 %v2802
      %2827 = vmatprep.subr.mxu0 0.0
      %2828 = vmatpush1.xpose.msra.mxu0 %v2805
      %2829 = vmatprep.subr.mxu0 0.0
      %2830 = vmatpush1.xpose.msra.mxu0 %v2808
      %2831 = vmatprep.subr.mxu0 0.0
      %2832 = vmatpush1.xpose.msra.mxu0 %v2811
      %2833 = vmatprep.subr.mxu0 0.0
      %2834 = vmatpush1.xpose.msra.mxu0 %v2814
      %2835 = vmatprep.subr.mxu0 0.0
      %2836 = vmatpush1.xpose.msra.mxu0 %v2817
      %2837 = vmatprep.subr.mxu0 0.0
      %2838 = vmatpush1.xpose.msra.mxu0 %v2820
      %2839 = vmatprep.subr.mxu0 0.0
      %2840 = vmatpush1.xpose.msra.mxu0 %v2823
      %2841 = vmatprep.subr.mxu0 0.0
      %2842 = vmatpush1.xpose.msra.mxu0 0.0
      %2843 = vmatprep.subr.mxu0 0.0
      %2844 = vmatpush1.xpose.msra.mxu0 0.0
      %2845 = vmatprep.subr.mxu0 0.0
      %2846 = vmatpush1.xpose.msra.mxu0 0.0
      %2847 = vmatprep.subr.mxu0 0.0
      %2848 = vmatpush1.xpose.msra.mxu0 0.0
      %2849 = vmatprep.subr.mxu0 0.0
      %2850 = vmatpush1.xpose.msra.mxu0 0.0
      %2851 = vmatprep.subr.mxu0 0.0
      %2852 = vmatpush1.xpose.msra.mxu0 0.0
      %2853 = vmatprep.subr.mxu0 0.0
      %2854 = vmatpush1.xpose.msra.mxu0 0.0
      %2855 = vmatprep.subr.mxu0 0.0
      %2856 = vmatpush1.xpose.msra.mxu0 0.0
      %2857 = vmatprep.subr.mxu0 0.0
      %2858 = vmatpush1.xpose.msra.mxu0 0.0
      %2859 = vmatprep.subr.mxu0 0.0
      %2860 = vmatpush1.xpose.msra.mxu0 0.0
      %2861 = vmatprep.subr.mxu0 0.0
      %2862 = vmatpush1.xpose.msra.mxu0 0.0
      %2863 = vmatprep.subr.mxu0 0.0
      %2864 = vmatpush1.xpose.msra.mxu0 0.0
      %2865 = vmatprep.subr.mxu0 0.0
      %2866 = vmatpush1.xpose.msra.mxu0 0.0
      %2867 = vmatprep.subr.mxu0 0.0
      %2868 = vmatpush1.xpose.msra.mxu0 0.0
      %2869 = vmatprep.subr.mxu0 0.0
      %2870 = vmatpush1.xpose.msra.mxu0 0.0
      %2871 = vmatprep.subr.mxu0 0.0
      %2872 = vmatpush1.xpose.msra.mxu0 0.0
      %2873 = vmatprep.subr.mxu0 0.0
      %2874 = vmatpush1.xpose.msra.mxu0 0.0
      %2875 = vmatprep.subr.mxu0 0.0
      %2876 = vmatpush1.xpose.msra.mxu0 0.0
      %2877 = vmatprep.subr.mxu0 0.0
      %2878 = vmatpush1.xpose.msra.mxu0 0.0
      %2879 = vmatprep.subr.mxu0 0.0
      %2880 = vmatpush1.xpose.msra.mxu0 0.0
      %2881 = vmatprep.subr.mxu0 0.0
      %2882 = vmatpush1.xpose.msra.mxu0 0.0
      %2883 = vmatprep.subr.mxu0 0.0
      %2884 = vmatpush1.xpose.msra.mxu0 0.0
      %2885 = vmatprep.subr.mxu0 0.0
      %2886 = vmatpush1.xpose.msra.mxu0 0.0
      %2887 = vmatprep.subr.mxu0 0.0
      %2888 = vmatpush1.xpose.msra.mxu0 0.0
      %2889 = vmatprep.mubr.f32.mxu0 0.0
      %2890 = vmatmul.mubr.f32.gmra.mrb[0].mxu0 %v2778
      %v2891 = vpop.f32.mrb[0].mxu0
      %v2892 = vadd.f32 0.0, %v2891
      %v2893 = vpop.f32.mrb[0].mxu0
      %2894 = vmatprep.mubr.f32.mxu0 0.0
      %2895 = vmatmul.mubr.f32.gmra.mrb[0].mxu0 %v2781
      %v2896 = vpop.f32.mrb[0].mxu0
      %v2897 = vadd.f32 0.0, %v2896
      %v2898 = vpop.f32.mrb[0].mxu0
      %2899 = vmatprep.mubr.f32.mxu0 0.0
      %2900 = vmatmul.mubr.f32.gmra.mrb[0].mxu0 %v2784
      %v2901 = vpop.f32.mrb[0].mxu0
      %v2902 = vadd.f32 0.0, %v2901
      %v2903 = vpop.f32.mrb[0].mxu0
      %2904 = vmatprep.mubr.f32.mxu0 0.0
      %2905 = vmatmul.mubr.f32.gmra.mrb[0].mxu0 %v2787
      %v2906 = vpop.f32.mrb[0].mxu0
      %v2907 = vadd.f32 0.0, %v2906
      %v2908 = vpop.f32.mrb[0].mxu0
      %2909 = vmatprep.mubr.f32.mxu0 0.0
      %2910 = vmatmul.mubr.f32.gmra.mrb[0].mxu0 %v2790
      %v2911 = vpop.f32.mrb[0].mxu0
      %v2912 = vadd.f32 0.0, %v2911
      %v2913 = vpop.f32.mrb[0].mxu0
      %2914 = vmatprep.mubr.f32.mxu0 0.0
      %2915 = vmatmul.mubr.f32.gmra.mrb[0].mxu0 %v2793
      %v2916 = vpop.f32.mrb[0].mxu0
      %v2917 = vadd.f32 0.0, %v2916
      %v2918 = vpop.f32.mrb[0].mxu0
      %2919 = vmatprep.mubr.f32.mxu0 0.0
      %2920 = vmatmul.mubr.f32.gmra.mrb[0].mxu0 %v2796
      %v2921 = vpop.f32.mrb[0].mxu0
      %v2922 = vadd.f32 0.0, %v2921
      %v2923 = vpop.f32.mrb[0].mxu0
      %2924 = vmatprep.mubr.f32.mxu0 0.0
      %2925 = vmatmul.mubr.f32.gmra.mrb[0].mxu0 %v2799
      %v2926 = vpop.f32.mrb[0].mxu0
      %v2927 = vadd.f32 0.0, %v2926
      %v2928 = vpop.f32.mrb[0].mxu0
      %2929 = vdwg.mxu0
      %v2930 = vmul.f32 %v2892, 0.14142136
      %v2931 = vmul.f32 %v2897, 0.14142136
      %v2932 = vmul.f32 %v2902, 0.14142136
      %v2933 = vmul.f32 %v2907, 0.14142136
      %v2934 = vmul.f32 %v2912, 0.14142136
      %v2935 = vmul.f32 %v2917, 0.14142136
      %v2936 = vmul.f32 %v2922, 0.14142136
      %v2937 = vmul.f32 %v2927, 0.14142136
      %v2938 = vld [vmem:[%s10] sm:$0xff]
      %v2939 = vld [vmem:[%s10 + $0x8] sm:$0xff]
      %v2940 = vld [vmem:[%s10 + $0x10] sm:$0xff]
      %v2941 = vld [vmem:[%s10 + $0x18] sm:$0xff]
      %v2942 = vld [vmem:[%s10 + $0x20] sm:$0xff]
      %v2943 = vld [vmem:[%s10 + $0x28] sm:$0xff]
      %v2944 = vld [vmem:[%s10 + $0x30] sm:$0xff]
      %v2945 = vld [vmem:[%s10 + $0x38] sm:$0xff]
      %v2946 = vadd.f32 %v2930, %v2938
      %v2947 = vadd.f32 %v2931, %v2939
      %v2948 = vadd.f32 %v2932, %v2940
      %v2949 = vadd.f32 %v2933, %v2941
      %v2950 = vadd.f32 %v2934, %v2942
      %v2951 = vadd.f32 %v2935, %v2943
      %v2952 = vadd.f32 %v2936, %v2944
      %v2953 = vadd.f32 %v2937, %v2945
      %v2954 = vsel %vm2321, %v2946, -inf
      %2955 = vmax.xlane.f32.xlu0 %v2954
      %v2956 = vpop.xlane.xlu0 %2955
      %v2957 = vsel %vm2321, %v2947, -inf
      %2958 = vmax.xlane.f32.xlu0 %v2957
      %v2959 = vpop.xlane.xlu0 %2958
      %v2960 = vsel %vm2321, %v2948, -inf
      %2961 = vmax.xlane.f32.xlu0 %v2960
      %v2962 = vpop.xlane.xlu0 %2961
      %v2963 = vsel %vm2321, %v2949, -inf
      %2964 = vmax.xlane.f32.xlu0 %v2963
      %v2965 = vpop.xlane.xlu0 %2964
      %v2966 = vsel %vm2321, %v2950, -inf
      %2967 = vmax.xlane.f32.xlu0 %v2966
      %v2968 = vpop.xlane.xlu0 %2967
      %v2969 = vsel %vm2321, %v2951, -inf
      %2970 = vmax.xlane.f32.xlu0 %v2969
      %v2971 = vpop.xlane.xlu0 %2970
      %v2972 = vsel %vm2321, %v2952, -inf
      %2973 = vmax.xlane.f32.xlu0 %v2972
      %v2974 = vpop.xlane.xlu0 %2973
      %v2975 = vsel %vm2321, %v2953, -inf
      %2976 = vmax.xlane.f32.xlu0 %v2975
      %v2977 = vpop.xlane.xlu0 %2976
      %v2978 = vsub.f32 %v2946, %v2956
      %v2979 = vsub.f32 %v2947, %v2959
      %v2980 = vsub.f32 %v2948, %v2962
      %v2981 = vsub.f32 %v2949, %v2965
      %v2982 = vsub.f32 %v2950, %v2968
      %v2983 = vsub.f32 %v2951, %v2971
      %v2984 = vsub.f32 %v2952, %v2974
      %v2985 = vsub.f32 %v2953, %v2977
      %v2986 = vmul.f32 %v2978, 1.442695
      %v2987 = vpow.pop %v2986
      %v2988 = vmul.f32 %v2979, 1.442695
      %v2989 = vpow.pop %v2988
      %v2990 = vmul.f32 %v2980, 1.442695
      %v2991 = vpow.pop %v2990
      %v2992 = vmul.f32 %v2981, 1.442695
      %v2993 = vpow.pop %v2992
      %v2994 = vmul.f32 %v2982, 1.442695
      %v2995 = vpow.pop %v2994
      %v2996 = vmul.f32 %v2983, 1.442695
      %v2997 = vpow.pop %v2996
      %v2998 = vmul.f32 %v2984, 1.442695
      %v2999 = vpow.pop %v2998
      %v3000 = vmul.f32 %v2985, 1.442695
      %v3001 = vpow.pop %v3000
      %v3002 = vsel %vm2321, %v2987, 0.0
      %3003 = vadd.xlane.f32.xlu0 %v3002
      %v3004 = vpop.xlane.xlu0 %3003
      %v3005 = vsel %vm2321, %v2989, 0.0
      %3006 = vadd.xlane.f32.xlu0 %v3005
      %v3007 = vpop.xlane.xlu0 %3006
      %v3008 = vsel %vm2321, %v2991, 0.0
      %3009 = vadd.xlane.f32.xlu0 %v3008
      %v3010 = vpop.xlane.xlu0 %3009
      %v3011 = vsel %vm2321, %v2993, 0.0
      %3012 = vadd.xlane.f32.xlu0 %v3011
      %v3013 = vpop.xlane.xlu0 %3012
      %v3014 = vsel %vm2321, %v2995, 0.0
      %3015 = vadd.xlane.f32.xlu0 %v3014
      %v3016 = vpop.xlane.xlu0 %3015
      %v3017 = vsel %vm2321, %v2997, 0.0
      %3018 = vadd.xlane.f32.xlu0 %v3017
      %v3019 = vpop.xlane.xlu0 %3018
      %v3020 = vsel %vm2321, %v2999, 0.0
      %3021 = vadd.xlane.f32.xlu0 %v3020
      %v3022 = vpop.xlane.xlu0 %3021
      %v3023 = vsel %vm2321, %v3001, 0.0
      %3024 = vadd.xlane.f32.xlu0 %v3023
      %v3025 = vpop.xlane.xlu0 %3024
      %v3026 = vrcp.pop %v3004
      %v3027 = vrcp.pop %v3007
      %v3028 = vrcp.pop %v3010
      %v3029 = vrcp.pop %v3013
      %v3030 = vrcp.pop %v3016
      %v3031 = vrcp.pop %v3019
      %v3032 = vrcp.pop %v3022
      %v3033 = vrcp.pop %v3025
      %v3034 = vmul.f32 %v2987, %v3026
      %v3035 = vmul.f32 %v2989, %v3027
      %v3036 = vmul.f32 %v2991, %v3028
      %v3037 = vmul.f32 %v2993, %v3029
      %v3038 = vmul.f32 %v2995, %v3030
      %v3039 = vmul.f32 %v2997, %v3031
      %v3040 = vmul.f32 %v2999, %v3032
      %v3041 = vmul.f32 %v3001, %v3033
      %v3043 = vsel %vm2321, %v3034, 0
      %v3046 = vsel %vm2321, %v3035, 0
      %v3049 = vsel %vm2321, %v3036, 0
      %v3052 = vsel %vm2321, %v3037, 0
      %v3055 = vsel %vm2321, %v3038, 0
      %v3058 = vsel %vm2321, %v3039, 0
      %v3061 = vsel %vm2321, %v3040, 0
      %v3064 = vsel %vm2321, %v3041, 0
      %3066 = vmatprep.subr.mxu0 0.0
      %3067 = vmatpush1.msra.mxu0 %v2738
      %3068 = vmatprep.subr.mxu0 0.0
      %3069 = vmatpush1.msra.mxu0 %v2743
      %3070 = vmatprep.subr.mxu0 0.0
      %3071 = vmatpush1.msra.mxu0 %v2748
      %3072 = vmatprep.subr.mxu0 0.0
      %3073 = vmatpush1.msra.mxu0 %v2753
      %3074 = vmatprep.subr.mxu0 0.0
      %3075 = vmatpush1.msra.mxu0 %v2758
      %3076 = vmatprep.subr.mxu0 0.0
      %3077 = vmatpush1.msra.mxu0 %v2763
      %3078 = vmatprep.subr.mxu0 0.0
      %3079 = vmatpush1.msra.mxu0 %v2768
      %3080 = vmatprep.subr.mxu0 0.0
      %3081 = vmatpush1.msra.mxu0 %v2773
      %3082 = vmatprep.subr.mxu0 0.0
      %3083 = vmatpush1.msra.mxu0 0.0
      %3084 = vmatprep.subr.mxu0 0.0
      %3085 = vmatpush1.msra.mxu0 0.0
      %3086 = vmatprep.subr.mxu0 0.0
      %3087 = vmatpush1.msra.mxu0 0.0
      %3088 = vmatprep.subr.mxu0 0.0
      %3089 = vmatpush1.msra.mxu0 0.0
      %3090 = vmatprep.subr.mxu0 0.0
      %3091 = vmatpush1.msra.mxu0 0.0
      %3092 = vmatprep.subr.mxu0 0.0
      %3093 = vmatpush1.msra.mxu0 0.0
      %3094 = vmatprep.subr.mxu0 0.0
      %3095 = vmatpush1.msra.mxu0 0.0
      %3096 = vmatprep.subr.mxu0 0.0
      %3097 = vmatpush1.msra.mxu0 0.0
      %3098 = vmatprep.subr.mxu0 0.0
      %3099 = vmatpush1.msra.mxu0 0.0
      %3100 = vmatprep.subr.mxu0 0.0
      %3101 = vmatpush1.msra.mxu0 0.0
      %3102 = vmatprep.subr.mxu0 0.0
      %3103 = vmatpush1.msra.mxu0 0.0
      %3104 = vmatprep.subr.mxu0 0.0
      %3105 = vmatpush1.msra.mxu0 0.0
      %3106 = vmatprep.subr.mxu0 0.0
      %3107 = vmatpush1.msra.mxu0 0.0
      %3108 = vmatprep.subr.mxu0 0.0
      %3109 = vmatpush1.msra.mxu0 0.0
      %3110 = vmatprep.subr.mxu0 0.0
      %3111 = vmatpush1.msra.mxu0 0.0
      %3112 = vmatprep.subr.mxu0 0.0
      %3113 = vmatpush1.msra.mxu0 0.0
      %3114 = vmatprep.subr.mxu0 0.0
      %3115 = vmatpush1.msra.mxu0 0.0
      %3116 = vmatprep.subr.mxu0 0.0
      %3117 = vmatpush1.msra.mxu0 0.0
      %3118 = vmatprep.subr.mxu0 0.0
      %3119 = vmatpush1.msra.mxu0 0.0
      %3120 = vmatprep.subr.mxu0 0.0
      %3121 = vmatpush1.msra.mxu0 0.0
      %3122 = vmatprep.subr.mxu0 0.0
      %3123 = vmatpush1.msra.mxu0 0.0
      %3124 = vmatprep.subr.mxu0 0.0
      %3125 = vmatpush1.msra.mxu0 0.0
      %3126 = vmatprep.subr.mxu0 0.0
      %3127 = vmatpush1.msra.mxu0 0.0
      %3128 = vmatprep.subr.mxu0 0.0
      %3129 = vmatpush1.msra.mxu0 0.0
      %3130 = vmatprep.mubr.f32.mxu0 0.0
      %3131 = vmatmul.mubr.f32.gmra.mrb[0].mxu0 %v3043
      %v3132 = vpop.f32.mrb[0].mxu0
      %v3133 = vadd.f32 0.0, %v3132
      %v3134 = vpop.f32.mrb[0].mxu0
      %3135 = vmatprep.mubr.f32.mxu0 0.0
      %3136 = vmatmul.mubr.f32.gmra.mrb[0].mxu0 %v3046
      %v3137 = vpop.f32.mrb[0].mxu0
      %v3138 = vadd.f32 0.0, %v3137
      %v3139 = vpop.f32.mrb[0].mxu0
      %3140 = vmatprep.mubr.f32.mxu0 0.0
      %3141 = vmatmul.mubr.f32.gmra.mrb[0].mxu0 %v3049
      %v3142 = vpop.f32.mrb[0].mxu0
      %v3143 = vadd.f32 0.0, %v3142
      %v3144 = vpop.f32.mrb[0].mxu0
      %3145 = vmatprep.mubr.f32.mxu0 0.0
      %3146 = vmatmul.mubr.f32.gmra.mrb[0].mxu0 %v3052
      %v3147 = vpop.f32.mrb[0].mxu0
      %v3148 = vadd.f32 0.0, %v3147
      %v3149 = vpop.f32.mrb[0].mxu0
      %3150 = vmatprep.mubr.f32.mxu0 0.0
      %3151 = vmatmul.mubr.f32.gmra.mrb[0].mxu0 %v3055
      %v3152 = vpop.f32.mrb[0].mxu0
      %v3153 = vadd.f32 0.0, %v3152
      %v3154 = vpop.f32.mrb[0].mxu0
      %3155 = vmatprep.mubr.f32.mxu0 0.0
      %3156 = vmatmul.mubr.f32.gmra.mrb[0].mxu0 %v3058
      %v3157 = vpop.f32.mrb[0].mxu0
      %v3158 = vadd.f32 0.0, %v3157
      %v3159 = vpop.f32.mrb[0].mxu0
      %3160 = vmatprep.mubr.f32.mxu0 0.0
      %3161 = vmatmul.mubr.f32.gmra.mrb[0].mxu0 %v3061
      %v3162 = vpop.f32.mrb[0].mxu0
      %v3163 = vadd.f32 0.0, %v3162
      %v3164 = vpop.f32.mrb[0].mxu0
      %3165 = vmatprep.mubr.f32.mxu0 0.0
      %3166 = vmatmul.mubr.f32.gmra.mrb[0].mxu0 %v3064
      %v3167 = vpop.f32.mrb[0].mxu0
      %v3168 = vadd.f32 0.0, %v3167
      %v3169 = vpop.f32.mrb[0].mxu0
      %3170 = vdwg.mxu0
      %v3171 = vld [vmem:[%s12] sm:$0xff]
      %v3172 = vld [vmem:[%s12 + $0x8] sm:$0xff]
      %v3173 = vld [vmem:[%s12 + $0x10] sm:$0xff]
      %v3174 = vld [vmem:[%s12 + $0x18] sm:$0xff]
      %v3175 = vld [vmem:[%s12 + $0x20] sm:$0xff]
      %v3176 = vld [vmem:[%s12 + $0x28] sm:$0xff]
      %v3177 = vld [vmem:[%s12 + $0x30] sm:$0xff]
      %v3178 = vld [vmem:[%s12 + $0x38] sm:$0xff]
      %v3179 = vmul.f32 %v3133, %v3171
      %v3180 = vmul.f32 %v3138, %v3172
      %v3181 = vmul.f32 %v3143, %v3173
      %v3182 = vmul.f32 %v3148, %v3174
      %v3183 = vmul.f32 %v3153, %v3175
      %v3184 = vmul.f32 %v3158, %v3176
      %v3185 = vmul.f32 %v3163, %v3177
      %v3186 = vmul.f32 %v3168, %v3178
      %v3187 = vsel %vm2432, %v3179, 0.0
      %3188 = vadd.xlane.f32.xlu0 %v3187
      %v3189 = vpop.xlane.xlu0 %3188
      %v3190 = vsel %vm2432, %v3180, 0.0
      %3191 = vadd.xlane.f32.xlu0 %v3190
      %v3192 = vpop.xlane.xlu0 %3191
      %v3193 = vsel %vm2432, %v3181, 0.0
      %3194 = vadd.xlane.f32.xlu0 %v3193
      %v3195 = vpop.xlane.xlu0 %3194
      %v3196 = vsel %vm2432, %v3182, 0.0
      %3197 = vadd.xlane.f32.xlu0 %v3196
      %v3198 = vpop.xlane.xlu0 %3197
      %v3199 = vsel %vm2432, %v3183, 0.0
      %3200 = vadd.xlane.f32.xlu0 %v3199
      %v3201 = vpop.xlane.xlu0 %3200
      %v3202 = vsel %vm2432, %v3184, 0.0
      %3203 = vadd.xlane.f32.xlu0 %v3202
      %v3204 = vpop.xlane.xlu0 %3203
      %v3205 = vsel %vm2432, %v3185, 0.0
      %3206 = vadd.xlane.f32.xlu0 %v3205
      %v3207 = vpop.xlane.xlu0 %3206
      %v3208 = vsel %vm2432, %v3186, 0.0
      %3209 = vadd.xlane.f32.xlu0 %v3208
      %v3210 = vpop.xlane.xlu0 %3209
      %s3211 = scalar_lea.vmem %s12, 64
      %v3212 = vld [vmem:[%s3211] sm:$0xff]
      %v3213 = vld [vmem:[%s3211 + $0x8] sm:$0xff]
      %v3214 = vld [vmem:[%s3211 + $0x10] sm:$0xff]
      %v3215 = vld [vmem:[%s3211 + $0x18] sm:$0xff]
      %v3216 = vld [vmem:[%s3211 + $0x20] sm:$0xff]
      %v3217 = vld [vmem:[%s3211 + $0x28] sm:$0xff]
      %v3218 = vld [vmem:[%s3211 + $0x30] sm:$0xff]
      %v3219 = vld [vmem:[%s3211 + $0x38] sm:$0xff]
      %v3220 = vmul.f32 %v3133, %v3212
      %v3221 = vmul.f32 %v3138, %v3213
      %v3222 = vmul.f32 %v3143, %v3214
      %v3223 = vmul.f32 %v3148, %v3215
      %v3224 = vmul.f32 %v3153, %v3216
      %v3225 = vmul.f32 %v3158, %v3217
      %v3226 = vmul.f32 %v3163, %v3218
      %v3227 = vmul.f32 %v3168, %v3219
      %v3228 = vsel %vm2432, %v3220, 0.0
      %3229 = vadd.xlane.f32.xlu0 %v3228
      %v3230 = vpop.xlane.xlu0 %3229
      %v3231 = vsel %vm2432, %v3221, 0.0
      %3232 = vadd.xlane.f32.xlu0 %v3231
      %v3233 = vpop.xlane.xlu0 %3232
      %v3234 = vsel %vm2432, %v3222, 0.0
      %3235 = vadd.xlane.f32.xlu0 %v3234
      %v3236 = vpop.xlane.xlu0 %3235
      %v3237 = vsel %vm2432, %v3223, 0.0
      %3238 = vadd.xlane.f32.xlu0 %v3237
      %v3239 = vpop.xlane.xlu0 %3238
      %v3240 = vsel %vm2432, %v3224, 0.0
      %3241 = vadd.xlane.f32.xlu0 %v3240
      %v3242 = vpop.xlane.xlu0 %3241
      %v3243 = vsel %vm2432, %v3225, 0.0
      %3244 = vadd.xlane.f32.xlu0 %v3243
      %v3245 = vpop.xlane.xlu0 %3244
      %v3246 = vsel %vm2432, %v3226, 0.0
      %3247 = vadd.xlane.f32.xlu0 %v3246
      %v3248 = vpop.xlane.xlu0 %3247
      %v3249 = vsel %vm2432, %v3227, 0.0
      %3250 = vadd.xlane.f32.xlu0 %v3249
      %v3251 = vpop.xlane.xlu0 %3250
      %v3252 = vlaneseq
      %v3253 = vand.u32 %v3252, 127
      %vm3254 = vcmp.eq.s32.totalorder %v3253, 0
      %v3255 = vsel %vm3254, %v3189, %v3230
      %v3256 = vsel %vm3254, %v3192, %v3233
      %v3257 = vsel %vm3254, %v3195, %v3236
      %v3258 = vsel %vm3254, %v3198, %v3239
      %v3259 = vsel %vm3254, %v3201, %v3242
      %v3260 = vsel %vm3254, %v3204, %v3245
      %v3261 = vsel %vm3254, %v3207, %v3248
      %v3262 = vsel %vm3254, %v3210, %v3251
      %v3263 = vld [vmem:[%s11] sm:$0xff]
      %v3264 = vld [vmem:[%s13] sm:$0x1]
      %v3266 = vlaneseq
      %v3267 = vshrl.u32 %v3266, 7
      %v3268 = vsub.s32 0, %v3267
      %v3269 = vrot.slane %v3264, %v3268
      %v3272 = vsel %vm2321, %v3263, 0
      %3274 = vmatprep.subr.mxu0 0.0
      %3275 = vmatpush1.msra.mxu0 %v3255
      %3276 = vmatprep.subr.mxu0 0.0
      %3277 = vmatpush1.msra.mxu0 %v3256
      %3278 = vmatprep.subr.mxu0 0.0
      %3279 = vmatpush1.msra.mxu0 %v3257
      %3280 = vmatprep.subr.mxu0 0.0
      %3281 = vmatpush1.msra.mxu0 %v3258
      %3282 = vmatprep.subr.mxu0 0.0
      %3283 = vmatpush1.msra.mxu0 %v3259
      %3284 = vmatprep.subr.mxu0 0.0
      %3285 = vmatpush1.msra.mxu0 %v3260
      %3286 = vmatprep.subr.mxu0 0.0
      %3287 = vmatpush1.msra.mxu0 %v3261
      %3288 = vmatprep.subr.mxu0 0.0
      %3289 = vmatpush1.msra.mxu0 %v3262
      %3290 = vmatprep.subr.mxu0 0.0
      %3291 = vmatpush1.msra.mxu0 0.0
      %3292 = vmatprep.subr.mxu0 0.0
      %3293 = vmatpush1.msra.mxu0 0.0
      %3294 = vmatprep.subr.mxu0 0.0
      %3295 = vmatpush1.msra.mxu0 0.0
      %3296 = vmatprep.subr.mxu0 0.0
      %3297 = vmatpush1.msra.mxu0 0.0
      %3298 = vmatprep.subr.mxu0 0.0
      %3299 = vmatpush1.msra.mxu0 0.0
      %3300 = vmatprep.subr.mxu0 0.0
      %3301 = vmatpush1.msra.mxu0 0.0
      %3302 = vmatprep.subr.mxu0 0.0
      %3303 = vmatpush1.msra.mxu0 0.0
      %3304 = vmatprep.subr.mxu0 0.0
      %3305 = vmatpush1.msra.mxu0 0.0
      %3306 = vmatprep.subr.mxu0 0.0
      %3307 = vmatpush1.msra.mxu0 0.0
      %3308 = vmatprep.subr.mxu0 0.0
      %3309 = vmatpush1.msra.mxu0 0.0
      %3310 = vmatprep.subr.mxu0 0.0
      %3311 = vmatpush1.msra.mxu0 0.0
      %3312 = vmatprep.subr.mxu0 0.0
      %3313 = vmatpush1.msra.mxu0 0.0
      %3314 = vmatprep.subr.mxu0 0.0
      %3315 = vmatpush1.msra.mxu0 0.0
      %3316 = vmatprep.subr.mxu0 0.0
      %3317 = vmatpush1.msra.mxu0 0.0
      %3318 = vmatprep.subr.mxu0 0.0
      %3319 = vmatpush1.msra.mxu0 0.0
      %3320 = vmatprep.subr.mxu0 0.0
      %3321 = vmatpush1.msra.mxu0 0.0
      %3322 = vmatprep.subr.mxu0 0.0
      %3323 = vmatpush1.msra.mxu0 0.0
      %3324 = vmatprep.subr.mxu0 0.0
      %3325 = vmatpush1.msra.mxu0 0.0
      %3326 = vmatprep.subr.mxu0 0.0
      %3327 = vmatpush1.msra.mxu0 0.0
      %3328 = vmatprep.subr.mxu0 0.0
      %3329 = vmatpush1.msra.mxu0 0.0
      %3330 = vmatprep.subr.mxu0 0.0
      %3331 = vmatpush1.msra.mxu0 0.0
      %3332 = vmatprep.subr.mxu0 0.0
      %3333 = vmatpush1.msra.mxu0 0.0
      %3334 = vmatprep.subr.mxu0 0.0
      %3335 = vmatpush1.msra.mxu0 0.0
      %3336 = vmatprep.subr.mxu0 0.0
      %3337 = vmatpush1.msra.mxu0 0.0
      %3338 = vmatprep.mubr.f32.mxu0 0.0
      %3339 = vmatmul.mubr.f32.gmra.mrb[0].mxu0 %v3272
      %v3340 = vpop.f32.mrb[0].mxu0
      %v3341 = vadd.f32 %v3269, %v3340
      %v3342 = vpop.f32.mrb[0].mxu0
      %3343 = vdwg.mxu0
      %vm3344 = vcmp.eq.s32.totalorder %v3253, 1
      %3346 = vset.pattern.permute.xlu0 1
      %3347 = vperm.xlu0 %3346, %v3341
      %v3348 = vpop.permute.xlu0 %3347
      %v3350 = vsel %vm3344, %v3348, 0.0
      %3351 = vset.pattern.permute.xlu0 0
      %3352 = vperm.xlu0 %3351, %v3341
      %v3353 = vpop.permute.xlu0 %3352
      %v3355 = vsel %vm3254, %v3353, %v3350
      %3356 = vst [vmem:[%s467] sm:$0xff] %v3355
      %p3357 = scmp.lt.s32.totalorder %s25, 1
      %s3358 = scalar_select %p3357, %s25, 1
      %s3359 = smul.addr %s3358, 8
      %s3360 = scalar_lea.vmem %s14, %s3359
      // Predicated region
      $region77: #{xanet_pallas.1} parent=75 // pred_check
        %p3361 = pneg %p342
      $region78: #{xanet_pallas.1} parent=75 // pred_check_branch
        %3363 = sbr.rel (%p3361) target = $region80
      $region79: #{xanet_pallas.1} parent=75 // pred_region
        _
      $region80: #{xanet_pallas.1} parent=75 // pred_fallthru
        _
    $region76: #{xanet_pallas.1} parent=5 // pred_fallthru
      _
    %p3364 = scmp.le.s32.totalorder 2, %s20
    // Predicated region
    $region81: #{xanet_pallas.1} parent=5 // pred_check
      %p3365 = pneg %p3364
    $region82: #{xanet_pallas.1} parent=5 // pred_check_branch
      %3367 = sbr.rel (%p3365) target = $region84
    $region83: #{xanet_pallas.1} parent=5 // pred_region
      %s3368 = ssub.s32 %s20, 2
      // Predicated region
      $region85: #{xanet_pallas.1} parent=83 // pred_check
        %p3369 = pneg %p348
      $region86: #{xanet_pallas.1} parent=83 // pred_check_branch
        %3371 = sbr.rel (%p3369) target = $region88
      $region87: #{xanet_pallas.1} parent=83 // pred_region
        %p3372 = scmp.lt.s32.totalorder %s26, 1
        %s3373 = scalar_select %p3372, %s26, 1
        %s3374 = smul.addr %s3373, 8
        %s3375 = scalar_lea.vmem %s14, %s3374
      $region88: #{xanet_pallas.1} parent=83 // pred_fallthru
        _
    $region84: #{xanet_pallas.1} parent=5 // pred_fallthru
      _
  $region6: #{xanet_pallas.1} parent=0 // loop_footer
    %s24 = sadd.s32 1, %s20
  $region7: #{xanet_pallas.1} parent=0 // loop_footer_branch
    %19 = sbr.rel target = $region3
  $region8: #{xanet_pallas.1} parent=0 // loop_exit
    _

</llo_original>
